<compile_context>
chip_gen: v7x
topology: tpu7x:2x2x1
jax: 0.10.0
libtpu: 0.0.40
codegen_flags: <defaults>
</compile_context>

<pallas_src>
import functools
import numpy as np
import jax
import jax.numpy as jnp
from jax import lax
from jax.experimental import pallas as pl
from jax.experimental.pallas import tpu as pltpu

# ---- small, deterministic config (scaled-down WaveNet_conv2d hyperparams) ----
B = 2                     # batch
IN_CH = 1                 # in_channels
N_FEATURE = 8             # n_feature
T = 128                   # sequence length
TIME_CONV_FRAME = 9       # time_conv_frame (made odd, as in __init__)
C0 = 32                   # conv2d out_channels
R = 128                   # n_resch
S = 128                   # n_skipch
KS = 2                    # kernel_size of causal convs
DILATION_DEPTH = 3
DILATION_REPEAT = 2
DILATIONS = tuple([2 ** i for i in range(DILATION_DEPTH)] * DILATION_REPEAT)
L = len(DILATIONS)
FK = N_FEATURE * TIME_CONV_FRAME
MB = B * T


# ----------------------------- Pallas kernel ---------------------------------
def wavenet_kernel(xcol_ref, w2d_ref, b2d_ref,
                   wc0_ref, wc1_ref, bc_ref,
                   w_gate_ref, b_gate_ref,
                   w_sr_ref, b_sr_ref,
                   wp1_ref, bp1_ref,
                   wpost_ref, bpost_ref,
                   out_ref,
                   res_ref, skip_ref, cat_ref,
                   *, gate_dtype):
    f32 = jnp.float32
    bf16 = jnp.bfloat16
    dot = lambda a, b: jnp.dot(a, b, preferred_element_type=f32)

    l = pl.program_id(1)
    # Each block is exactly one batch element -> plain row index, no % T.
    row = lax.broadcasted_iota(jnp.int32, (T, 1), 0)

    # ---- prologue (l == 0): conv2d + first causal conv, carry-state init ----
    @pl.when(l == 0)
    def _prologue():
        h = dot(xcol_ref[...], w2d_ref[...]) + b2d_ref[...]          # (T, C0) f32
        h_d = jnp.where(row < 1, 0.0, pltpu.roll(h, shift=1, axis=0))
        res0 = (dot(h_d.astype(bf16), wc0_ref[...])
                + dot(h.astype(bf16), wc1_ref[...]) + bc_ref[...])   # (T, R) f32
        res_ref[...] = res0
        cat_ref[:, R:] = res0.astype(bf16)        # current-tap half of the gate input
        skip_ref[...] = jnp.zeros_like(skip_ref)

    # ---- dilated residual layer l (weights streamed per layer) ----
    res = res_ref[...]                                               # (T, R) f32
    dil_idx = l % DILATION_DEPTH            # dilation = 2 ** dil_idx (static shifts)
    for i in range(DILATION_DEPTH):
        d = 2 ** i
        @pl.when(dil_idx == i)
        def _delayed_tap(d=d):
            rolled = pltpu.roll(res, shift=d, axis=0)                # XLU sublane rotate
            cat_ref[:, :R] = jnp.where(row < d, 0.0, rolled).astype(bf16)

    # gate fusion: [x(t-d) | x(t)] @ [sig | tanh] in one K=2R matmul
    pre = dot(cat_ref[...], w_gate_ref[0]) + b_gate_ref[0]           # (T, 2R) f32
    ps = pre[:, :R].astype(gate_dtype)
    pt = pre[:, R:].astype(gate_dtype)
    gated = (jax.nn.sigmoid(ps) * jnp.tanh(pt)).astype(bf16)         # (T, R) bf16
    # skip/res fusion: one matmul produces [skip | res]
    sr = dot(gated, w_sr_ref[0]) + b_sr_ref[0]                       # (T, S+R) f32
    skip_ref[...] = skip_ref[...] + sr[:, :S]
    new_res = sr[:, S:] + res                                        # residual add (f32)
    res_ref[...] = new_res
    cat_ref[:, R:] = new_res.astype(bf16)        # current tap for the next layer

    # ---- epilogue (l == L-1): postprocess + folded Linear, lane-dense output ----
    @pl.when(l == L - 1)
    def _epilogue():
        post = jnp.maximum(skip_ref[...], 0.0)
        post = jnp.maximum(dot(post.astype(bf16), wp1_ref[...]) + bp1_ref[...], 0.0)
        # (8, S) @ (T, S)^T -> (8, T); row 0 carries the real weights, rows 1..7 are 0.
        y8 = lax.dot_general(wpost_ref[...], post.astype(bf16),
                             (((1,), (1,)), ((), ())),
                             preferred_element_type=f32)             # (8, T)
        out_ref[0] = y8[0:1, :] + bpost_ref[...]                     # (1, T) lane-dense


# ------------------------------ JAX glue --------------------------------------
def im2col_conv2d_input(x):
    """(B, 1, N_FEATURE, T) -> (B, T, N_FEATURE*TIME_CONV_FRAME)."""
    pad = (TIME_CONV_FRAME - 1) // 2
    xp = jnp.pad(x[:, 0], ((0, 0), (0, 0), (pad, pad)))       # (B, F, T+TCF-1)
    cols = jnp.stack([xp[:, :, k:k + T] for k in range(TIME_CONV_FRAME)], axis=-1)
    return cols.transpose(0, 2, 1, 3).reshape(B, T, FK)       # [b,t,f*TCF+k]


def pack_params(p):
    """Fuse / repack the f32 module params into the kernel's bf16 layout."""
    bf = lambda a: a.astype(jnp.bfloat16)
    f32 = jnp.float32
    kp = {}
    kp['w2d'] = bf(p['w2d'])
    kp['b2d'] = p['b2d']
    kp['wc0'] = bf(p['wc0'])
    kp['wc1'] = bf(p['wc1'])
    kp['bc'] = p['bc']
    # gate fusion: K axis = [delayed tap ; current tap], N axis = [sigmoid ; tanh]
    w_gate = jnp.concatenate(
        [jnp.concatenate([p['wsig0'], p['wtanh0']], axis=2),
         jnp.concatenate([p['wsig1'], p['wtanh1']], axis=2)], axis=1)   # (L,2R,2R)
    kp['w_gate'] = bf(w_gate)
    kp['b_gate'] = jnp.concatenate([p['bsig'], p['btanh']], axis=2)     # (L,1,2R)
    # skip/res fusion along N: [skip ; res]
    kp['w_sr'] = bf(jnp.concatenate([p['wskip'], p['wres']], axis=2))   # (L,R,S+R)
    kp['b_sr'] = jnp.concatenate([p['bskip'], p['bres']], axis=2)       # (L,1,S+R)
    kp['wp1'] = bf(p['wp1'])
    kp['bp1'] = p['bp1']
    # fold the final Linear into conv_post_2 (exact: no nonlinearity between);
    # store as an 8-sublane row block (row 0 real, rows 1..7 zero) for an
    # aligned A@B^T matmul that yields a lane-dense (1, T) output row.
    wp2 = bf(p['wp2']).astype(f32)
    wlin = bf(p['wlin']).astype(f32)
    wpost_row = (wp2 @ wlin).T                                          # (1, S)
    kp['wpost'] = bf(jnp.concatenate([wpost_row, jnp.zeros((7, S), f32)], axis=0))
    kp['bpost'] = p['bp2'] @ wlin + p['blin']                           # (1, 1)
    return kp


def _gate_dtype():
    """bf16 gating only where the VPU/EUP support bf16 (v6e / v7x)."""
    try:
        kind = jax.devices()[0].device_kind.lower()
    except Exception:
        kind = ""
    return jnp.bfloat16 if ("v6" in kind or "v7" in kind) else jnp.float32


def wavenet_forward(x, kp):
    x_col = im2col_conv2d_input(x).reshape(MB, FK).astype(jnp.bfloat16)

    def const(shape):
        return pl.BlockSpec(shape, lambda b, l: (0,) * len(shape))

    def per_layer(shape):
        # Streamed per layer; default double-buffering hides the ~0.2 MiB/step DMA.
        # (On v5e one could raise this to pl.Buffered(3) if the DMA is exposed.)
        return pl.BlockSpec(shape, lambda b, l: (l,) + (0,) * (len(shape) - 1))

    in_specs = [
        pl.BlockSpec((T, FK), lambda b, l: (b, 0)),           # im2col'ed input, per batch
        const((FK, C0)), const((1, C0)),                      # conv2d
        const((C0, R)), const((C0, R)), const((1, R)),        # first causal conv
        per_layer((1, 2 * R, 2 * R)), per_layer((1, 1, 2 * R)),   # fused dilated gates
        per_layer((1, R, S + R)), per_layer((1, 1, S + R)),       # fused skip/res 1x1
        const((S, S)), const((1, S)),                          # conv_post_1
        const((8, S)), const((1, 1)),                          # conv_post_2 ∘ linear
    ]

    y = pl.pallas_call(
        functools.partial(wavenet_kernel, gate_dtype=_gate_dtype()),
        out_shape=jax.ShapeDtypeStruct((B, 1, T), jnp.float32),
        grid=(B, L),
        in_specs=in_specs,
        out_specs=pl.BlockSpec((1, 1, T), lambda b, l: (b, 0, 0)),
        scratch_shapes=[pltpu.VMEM((T, R), jnp.float32),        # residual carry
                        pltpu.VMEM((T, S), jnp.float32),        # skip-sum accumulator
                        pltpu.VMEM((T, 2 * R), jnp.bfloat16)],  # persistent gate input
        compiler_params=pltpu.CompilerParams(
            dimension_semantics=("parallel", "arbitrary")),
    )(x_col, kp['w2d'], kp['b2d'],
      kp['wc0'], kp['wc1'], kp['bc'],
      kp['w_gate'], kp['b_gate'],
      kp['w_sr'], kp['b_sr'],
      kp['wp1'], kp['bp1'],
      kp['wpost'], kp['bpost'])
    return y.reshape(B, T)                                      # final .squeeze() -> (B, T)


def init_params(key):
    ks = jax.random.split(key, 21)
    n = lambda k, shape, scale: scale * jax.random.normal(k, shape, dtype=jnp.float32)
    p = {}
    p['w2d'] = n(ks[0], (FK, C0), 1.0 / np.sqrt(FK))
    p['b2d'] = n(ks[1], (1, C0), 0.01)
    p['wc0'] = n(ks[2], (C0, R), 1.0 / np.sqrt(2 * C0))
    p['wc1'] = n(ks[3], (C0, R), 1.0 / np.sqrt(2 * C0))
    p['bc'] = n(ks[4], (1, R), 0.01)
    p['wsig0'] = n(ks[5], (L, R, R), 1.0 / np.sqrt(2 * R))
    p['wsig1'] = n(ks[6], (L, R, R), 1.0 / np.sqrt(2 * R))
    p['bsig'] = n(ks[7], (L, 1, R), 0.01)
    p['wtanh0'] = n(ks[8], (L, R, R), 1.0 / np.sqrt(2 * R))
    p['wtanh1'] = n(ks[9], (L, R, R), 1.0 / np.sqrt(2 * R))
    p['btanh'] = n(ks[10], (L, 1, R), 0.01)
    p['wskip'] = n(ks[11], (L, R, S), 1.0 / np.sqrt(R))
    p['bskip'] = n(ks[12], (L, 1, S), 0.01)
    p['wres'] = n(ks[13], (L, R, R), 0.5 / np.sqrt(R))
    p['bres'] = n(ks[14], (L, 1, R), 0.01)
    p['wp1'] = n(ks[15], (S, S), 1.0 / np.sqrt(S))
    p['bp1'] = n(ks[16], (1, S), 0.01)
    p['wp2'] = n(ks[17], (S, 32), 1.0 / np.sqrt(S))
    p['bp2'] = n(ks[18], (1, 32), 0.01)
    p['wlin'] = n(ks[19], (32, 1), 1.0 / np.sqrt(32))
    p['blin'] = n(ks[20], (1, 1), 0.01)
    return p


def reference_forward(x, p):
    """Pure-JAX reference with the original (unfused) module structure.

    Uses the same bf16-rounded weights as the kernel (upcast back to f32) so
    only the kernel's bf16 activation/gating casts and MXU precision differ.
    """
    x_col = im2col_conv2d_input(x)
    r = lambda name: p[name].astype(jnp.bfloat16).astype(jnp.float32)

    def sh(a, d):
        return jnp.concatenate([jnp.zeros_like(a[:, :d, :]), a[:, :-d, :]], axis=1)

    with jax.default_matmul_precision('highest'):
        h = x_col @ r('w2d') + p['b2d']
        out = sh(h, 1) @ r('wc0') + h @ r('wc1') + p['bc']
        skip_sum = jnp.zeros((B, T, S), jnp.float32)
        for l, d in enumerate(DILATIONS):
            od = sh(out, d)
            pre_sig = od @ r('wsig0')[l] + out @ r('wsig1')[l] + p['bsig'][l]
            pre_tanh = od @ r('wtanh0')[l] + out @ r('wtanh1')[l] + p['btanh'][l]
            g = jax.nn.sigmoid(pre_sig) * jnp.tanh(pre_tanh)
            skip_sum = skip_sum + g @ r('wskip')[l] + p['bskip'][l]
            out = g @ r('wres')[l] + p['bres'][l] + out
        q = jax.nn.relu(skip_sum)
        q = jax.nn.relu(q @ r('wp1') + p['bp1'])
        q = q @ r('wp2') + p['bp2']
        y = q @ r('wlin') + p['blin']
    return y[..., 0]


if __name__ == "__main__":
    key = jax.random.PRNGKey(0)
    kx, kp_key = jax.random.split(key)
    x = jax.random.normal(kx, (B, IN_CH, N_FEATURE, T), dtype=jnp.float32)
    params = init_params(kp_key)
    kernel_params = pack_params(params)

    y = jax.jit(wavenet_forward)(x, kernel_params)
    y = jax.block_until_ready(y)
    assert y.shape == (B, T), y.shape

    y_ref = reference_forward(x, params)
    err = float(jnp.max(jnp.abs(y - y_ref)))
    # bf16 weights + bf16 activation/gating path vs f32 reference (output is O(1)):
    assert err < 2e-1, f"max abs error vs reference: {err}"
    print("KERNEL_OK")
</pallas_src>

<mosaic_0001>
module attributes {stable_mosaic.version = 11 : i64} {
  func.func @wavenet_kernel(%arg0: i32, %arg1: i32, %arg2: memref<128x72xbf16, #tpu.memory_space<vmem>>, %arg3: memref<72x32xbf16, #tpu.memory_space<vmem>>, %arg4: memref<1x32xf32, #tpu.memory_space<vmem>>, %arg5: memref<32x128xbf16, #tpu.memory_space<vmem>>, %arg6: memref<32x128xbf16, #tpu.memory_space<vmem>>, %arg7: memref<1x128xf32, #tpu.memory_space<vmem>>, %arg8: memref<1x256x256xbf16, #tpu.memory_space<vmem>>, %arg9: memref<1x1x256xf32, #tpu.memory_space<vmem>>, %arg10: memref<1x128x256xbf16, #tpu.memory_space<vmem>>, %arg11: memref<1x1x256xf32, #tpu.memory_space<vmem>>, %arg12: memref<128x128xbf16, #tpu.memory_space<vmem>>, %arg13: memref<1x128xf32, #tpu.memory_space<vmem>>, %arg14: memref<8x128xbf16, #tpu.memory_space<vmem>>, %arg15: memref<1x1xf32, #tpu.memory_space<vmem>>, %arg16: memref<1x1x128xf32, #tpu.memory_space<vmem>>, %arg17: memref<128x128xf32, #tpu.memory_space<vmem>>, %arg18: memref<128x128xf32, #tpu.memory_space<vmem>>, %arg19: memref<128x256xbf16, #tpu.memory_space<vmem>>) attributes {dimension_semantics = [#tpu.dimension_semantics<parallel>, #tpu.dimension_semantics<arbitrary>], iteration_bounds = array<i64: 2, 6>, scalar_prefetch = 0 : i64, scratch_operands = 3 : i64, tpu.core_type = #tpu.core_type<tc>, window_params = [{transform_indices = @transform_0, window_bounds = array<i64: 128, 72>}, {pipeline_mode = #tpu.pipeline_mode<synchronous>, transform_indices = @transform_1, window_bounds = array<i64: 72, 32>}, {pipeline_mode = #tpu.pipeline_mode<synchronous>, transform_indices = @transform_2, window_bounds = array<i64: 1, 32>}, {pipeline_mode = #tpu.pipeline_mode<synchronous>, transform_indices = @transform_3, window_bounds = array<i64: 32, 128>}, {pipeline_mode = #tpu.pipeline_mode<synchronous>, transform_indices = @transform_4, window_bounds = array<i64: 32, 128>}, {pipeline_mode = #tpu.pipeline_mode<synchronous>, transform_indices = @transform_5, window_bounds = array<i64: 1, 128>}, {transform_indices = @transform_6, window_bounds = array<i64: 1, 256, 256>}, {transform_indices = @transform_7, window_bounds = array<i64: 1, 1, 256>}, {transform_indices = @transform_8, window_bounds = array<i64: 1, 128, 256>}, {transform_indices = @transform_9, window_bounds = array<i64: 1, 1, 256>}, {pipeline_mode = #tpu.pipeline_mode<synchronous>, transform_indices = @transform_10, window_bounds = array<i64: 128, 128>}, {pipeline_mode = #tpu.pipeline_mode<synchronous>, transform_indices = @transform_11, window_bounds = array<i64: 1, 128>}, {pipeline_mode = #tpu.pipeline_mode<synchronous>, transform_indices = @transform_12, window_bounds = array<i64: 8, 128>}, {pipeline_mode = #tpu.pipeline_mode<synchronous>, transform_indices = @transform_13, window_bounds = array<i64: 1, 1>}, {transform_indices = @transform_14, window_bounds = array<i64: 1, 1, 128>}]} {
    %0 = tpu.iota {dimensions = array<i32: 0>} : vector<128x1xi32>
    %c0_i32 = arith.constant 0 : i32
    %1 = arith.cmpi eq, %arg1, %c0_i32 : i32
    %2 = arith.extui %1 : i1 to i32
    %c0_i32_0 = arith.constant 0 : i32
    %3 = arith.cmpi ne, %2, %c0_i32_0 : i32
    scf.if %3 {
      %c0_35 = arith.constant 0 : index
      %c0_36 = arith.constant 0 : index
      %61 = vector.load %arg2[%c0_35, %c0_36] : memref<128x72xbf16, #tpu.memory_space<vmem>>, vector<128x72xbf16>
      %c0_37 = arith.constant 0 : index
      %c0_38 = arith.constant 0 : index
      %62 = vector.load %arg3[%c0_37, %c0_38] : memref<72x32xbf16, #tpu.memory_space<vmem>>, vector<72x32xbf16>
      %cst_39 = arith.constant dense<0.000000e+00> : vector<128x32xf32>
      %63 = tpu.matmul %61, %62, %cst_39 {dimension_numbers = #tpu.dot_dimension_numbers<[1], [0], [0], [1], [0, 0, 1, 1], [], []>} : vector<128x72xbf16>, vector<72x32xbf16>, vector<128x32xf32> -> vector<128x32xf32>
      %c0_40 = arith.constant 0 : index
      %c0_41 = arith.constant 0 : index
      %64 = vector.load %arg4[%c0_40, %c0_41] : memref<1x32xf32, #tpu.memory_space<vmem>>, vector<1x32xf32>
      %65 = vector.broadcast %64 : vector<1x32xf32> to vector<128x32xf32>
      %66 = arith.addf %63, %65 : vector<128x32xf32>
      %c1_i32_42 = arith.constant 1 : i32
      %67 = vector.broadcast %c1_i32_42 : i32 to vector<128x1xi32>
      %68 = arith.cmpi slt, %0, %67 : vector<128x1xi32>
      %c1_i32_43 = arith.constant 1 : i32
      %69 = tpu.dynamic_rotate %66 by %c1_i32_43 dim 0 : vector<128x32xf32>, i32 -> vector<128x32xf32>
      %cst_44 = arith.constant 0.000000e+00 : f32
      %70 = vector.shape_cast %68 : vector<128x1xi1> to vector<128x1xi1>
      %71 = vector.broadcast %70 : vector<128x1xi1> to vector<128x32xi1>
      %72 = vector.broadcast %cst_44 : f32 to vector<128x32xf32>
      %73 = arith.select %71, %72, %69 : vector<128x32xi1>, vector<128x32xf32>
      %74 = arith.truncf %73 : vector<128x32xf32> to vector<128x32xbf16>
      %c0_45 = arith.constant 0 : index
      %c0_46 = arith.constant 0 : index
      %75 = vector.load %arg5[%c0_45, %c0_46] : memref<32x128xbf16, #tpu.memory_space<vmem>>, vector<32x128xbf16>
      %cst_47 = arith.constant dense<0.000000e+00> : vector<128x128xf32>
      %76 = tpu.matmul %74, %75, %cst_47 {dimension_numbers = #tpu.dot_dimension_numbers<[1], [0], [0], [1], [0, 0, 1, 1], [], []>} : vector<128x32xbf16>, vector<32x128xbf16>, vector<128x128xf32> -> vector<128x128xf32>
      %77 = arith.truncf %66 : vector<128x32xf32> to vector<128x32xbf16>
      %c0_48 = arith.constant 0 : index
      %c0_49 = arith.constant 0 : index
      %78 = vector.load %arg6[%c0_48, %c0_49] : memref<32x128xbf16, #tpu.memory_space<vmem>>, vector<32x128xbf16>
      %cst_50 = arith.constant dense<0.000000e+00> : vector<128x128xf32>
      %79 = tpu.matmul %77, %78, %cst_50 {dimension_numbers = #tpu.dot_dimension_numbers<[1], [0], [0], [1], [0, 0, 1, 1], [], []>} : vector<128x32xbf16>, vector<32x128xbf16>, vector<128x128xf32> -> vector<128x128xf32>
      %80 = arith.addf %76, %79 : vector<128x128xf32>
      %c0_51 = arith.constant 0 : index
      %c0_52 = arith.constant 0 : index
      %81 = vector.load %arg7[%c0_51, %c0_52] : memref<1x128xf32, #tpu.memory_space<vmem>>, vector<1x128xf32>
      %82 = vector.broadcast %81 : vector<1x128xf32> to vector<128x128xf32>
      %83 = arith.addf %80, %82 : vector<128x128xf32>
      %c0_53 = arith.constant 0 : index
      %c0_54 = arith.constant 0 : index
      %84 = vector.load %arg17[%c0_53, %c0_54] : memref<128x128xf32, #tpu.memory_space<vmem>>, vector<128x128xf32>
      tpu.vector_store %arg17[%c0_53, %c0_54], %83 {strides = array<i32>} : memref<128x128xf32, #tpu.memory_space<vmem>>, vector<128x128xf32>,
      %85 = arith.truncf %83 : vector<128x128xf32> to vector<128x128xbf16>
      %c0_55 = arith.constant 0 : index
      %c128_56 = arith.constant 128 : index
      %86 = vector.load %arg19[%c0_55, %c128_56] : memref<128x256xbf16, #tpu.memory_space<vmem>>, vector<128x128xbf16>
      tpu.vector_store %arg19[%c0_55, %c128_56], %85 {strides = array<i32>} : memref<128x256xbf16, #tpu.memory_space<vmem>>, vector<128x128xbf16>,
      %cst_57 = arith.constant 0.000000e+00 : f32
      %87 = vector.broadcast %cst_57 : f32 to vector<128x128xf32>
      %c0_58 = arith.constant 0 : index
      %c0_59 = arith.constant 0 : index
      %88 = vector.load %arg18[%c0_58, %c0_59] : memref<128x128xf32, #tpu.memory_space<vmem>>, vector<128x128xf32>
      tpu.vector_store %arg18[%c0_58, %c0_59], %87 {strides = array<i32>} : memref<128x128xf32, #tpu.memory_space<vmem>>, vector<128x128xf32>,
    } else {
    }
    %c0 = arith.constant 0 : index
    %c0_1 = arith.constant 0 : index
    %4 = vector.load %arg17[%c0, %c0_1] : memref<128x128xf32, #tpu.memory_space<vmem>>, vector<128x128xf32>
    %c3_i32 = arith.constant 3 : i32
    %c0_i32_2 = arith.constant 0 : i32
    %5 = arith.cmpi eq, %c3_i32, %c0_i32_2 : i32
    %c1_i32 = arith.constant 1 : i32
    %6 = arith.select %5, %c1_i32, %c3_i32 : i32
    %7 = arith.remsi %arg1, %6 : i32
    %c0_i32_3 = arith.constant 0 : i32
    %8 = arith.cmpi ne, %7, %c0_i32_3 : i32
    %c0_i32_4 = arith.constant 0 : i32
    %9 = arith.cmpi slt, %7, %c0_i32_4 : i32
    %c0_i32_5 = arith.constant 0 : i32
    %10 = arith.cmpi slt, %6, %c0_i32_5 : i32
    %11 = arith.xori %9, %10 : i1
    %12 = arith.andi %11, %8 : i1
    %13 = arith.addi %7, %6 : i32
    %14 = arith.select %12, %13, %7 : i32
    %c0_i32_6 = arith.constant 0 : i32
    %15 = arith.cmpi eq, %14, %c0_i32_6 : i32
    %16 = arith.extui %15 : i1 to i32
    %c0_i32_7 = arith.constant 0 : i32
    %17 = arith.cmpi ne, %16, %c0_i32_7 : i32
    scf.if %17 {
      %c1_i32_35 = arith.constant 1 : i32
      %61 = tpu.dynamic_rotate %4 by %c1_i32_35 dim 0 : vector<128x128xf32>, i32 -> vector<128x128xf32>
      %c1_i32_36 = arith.constant 1 : i32
      %62 = vector.broadcast %c1_i32_36 : i32 to vector<128x1xi32>
      %63 = arith.cmpi slt, %0, %62 : vector<128x1xi32>
      %cst_37 = arith.constant 0.000000e+00 : f32
      %64 = vector.shape_cast %63 : vector<128x1xi1> to vector<128x1xi1>
      %65 = vector.broadcast %64 : vector<128x1xi1> to vector<128x128xi1>
      %66 = vector.broadcast %cst_37 : f32 to vector<128x128xf32>
      %67 = arith.select %65, %66, %61 : vector<128x128xi1>, vector<128x128xf32>
      %68 = arith.truncf %67 : vector<128x128xf32> to vector<128x128xbf16>
      %c0_38 = arith.constant 0 : index
      %c0_39 = arith.constant 0 : index
      %69 = vector.load %arg19[%c0_38, %c0_39] : memref<128x256xbf16, #tpu.memory_space<vmem>>, vector<128x128xbf16>
      tpu.vector_store %arg19[%c0_38, %c0_39], %68 {strides = array<i32>} : memref<128x256xbf16, #tpu.memory_space<vmem>>, vector<128x128xbf16>,
    } else {
    }
    %c1_i32_8 = arith.constant 1 : i32
    %18 = arith.cmpi eq, %14, %c1_i32_8 : i32
    %19 = arith.extui %18 : i1 to i32
    %c0_i32_9 = arith.constant 0 : i32
    %20 = arith.cmpi ne, %19, %c0_i32_9 : i32
    scf.if %20 {
      %c2_i32_35 = arith.constant 2 : i32
      %61 = tpu.dynamic_rotate %4 by %c2_i32_35 dim 0 : vector<128x128xf32>, i32 -> vector<128x128xf32>
      %c2_i32_36 = arith.constant 2 : i32
      %62 = vector.broadcast %c2_i32_36 : i32 to vector<128x1xi32>
      %63 = arith.cmpi slt, %0, %62 : vector<128x1xi32>
      %cst_37 = arith.constant 0.000000e+00 : f32
      %64 = vector.shape_cast %63 : vector<128x1xi1> to vector<128x1xi1>
      %65 = vector.broadcast %64 : vector<128x1xi1> to vector<128x128xi1>
      %66 = vector.broadcast %cst_37 : f32 to vector<128x128xf32>
      %67 = arith.select %65, %66, %61 : vector<128x128xi1>, vector<128x128xf32>
      %68 = arith.truncf %67 : vector<128x128xf32> to vector<128x128xbf16>
      %c0_38 = arith.constant 0 : index
      %c0_39 = arith.constant 0 : index
      %69 = vector.load %arg19[%c0_38, %c0_39] : memref<128x256xbf16, #tpu.memory_space<vmem>>, vector<128x128xbf16>
      tpu.vector_store %arg19[%c0_38, %c0_39], %68 {strides = array<i32>} : memref<128x256xbf16, #tpu.memory_space<vmem>>, vector<128x128xbf16>,
    } else {
    }
    %c2_i32 = arith.constant 2 : i32
    %21 = arith.cmpi eq, %14, %c2_i32 : i32
    %22 = arith.extui %21 : i1 to i32
    %c0_i32_10 = arith.constant 0 : i32
    %23 = arith.cmpi ne, %22, %c0_i32_10 : i32
    scf.if %23 {
      %c4_i32 = arith.constant 4 : i32
      %61 = tpu.dynamic_rotate %4 by %c4_i32 dim 0 : vector<128x128xf32>, i32 -> vector<128x128xf32>
      %c4_i32_35 = arith.constant 4 : i32
      %62 = vector.broadcast %c4_i32_35 : i32 to vector<128x1xi32>
      %63 = arith.cmpi slt, %0, %62 : vector<128x1xi32>
      %cst_36 = arith.constant 0.000000e+00 : f32
      %64 = vector.shape_cast %63 : vector<128x1xi1> to vector<128x1xi1>
      %65 = vector.broadcast %64 : vector<128x1xi1> to vector<128x128xi1>
      %66 = vector.broadcast %cst_36 : f32 to vector<128x128xf32>
      %67 = arith.select %65, %66, %61 : vector<128x128xi1>, vector<128x128xf32>
      %68 = arith.truncf %67 : vector<128x128xf32> to vector<128x128xbf16>
      %c0_37 = arith.constant 0 : index
      %c0_38 = arith.constant 0 : index
      %69 = vector.load %arg19[%c0_37, %c0_38] : memref<128x256xbf16, #tpu.memory_space<vmem>>, vector<128x128xbf16>
      tpu.vector_store %arg19[%c0_37, %c0_38], %68 {strides = array<i32>} : memref<128x256xbf16, #tpu.memory_space<vmem>>, vector<128x128xbf16>,
    } else {
    }
    %c0_11 = arith.constant 0 : index
    %c0_12 = arith.constant 0 : index
    %24 = vector.load %arg19[%c0_11, %c0_12] : memref<128x256xbf16, #tpu.memory_space<vmem>>, vector<128x256xbf16>
    %c0_13 = arith.constant 0 : index
    %c0_14 = arith.constant 0 : index
    %c0_15 = arith.constant 0 : index
    %25 = vector.load %arg8[%c0_13, %c0_14, %c0_15] : memref<1x256x256xbf16, #tpu.memory_space<vmem>>, vector<1x256x256xbf16>
    %26 = vector.shape_cast %25 : vector<1x256x256xbf16> to vector<256x256xbf16>
    %cst = arith.constant dense<0.000000e+00> : vector<128x256xf32>
    %27 = tpu.matmul %24, %26, %cst {dimension_numbers = #tpu.dot_dimension_numbers<[1], [0], [0], [1], [0, 0, 1, 1], [], []>} : vector<128x256xbf16>, vector<256x256xbf16>, vector<128x256xf32> -> vector<128x256xf32>
    %c0_16 = arith.constant 0 : index
    %c0_17 = arith.constant 0 : index
    %c0_18 = arith.constant 0 : index
    %28 = vector.load %arg9[%c0_16, %c0_17, %c0_18] : memref<1x1x256xf32, #tpu.memory_space<vmem>>, vector<1x1x256xf32>
    %29 = vector.shape_cast %28 : vector<1x1x256xf32> to vector<1x256xf32>
    %30 = vector.broadcast %29 : vector<1x256xf32> to vector<128x256xf32>
    %31 = arith.addf %27, %30 : vector<128x256xf32>
    %32 = vector.extract_strided_slice %31 {offsets = [0, 0], sizes = [128, 128], strides = [1, 1]} : vector<128x256xf32> to vector<128x128xf32>
    %33 = vector.extract_strided_slice %31 {offsets = [0, 128], sizes = [128, 128], strides = [1, 1]} : vector<128x256xf32> to vector<128x128xf32>
    %34 = arith.negf %32 : vector<128x128xf32>
    %35 = math.exp %34 : vector<128x128xf32>
    %cst_19 = arith.constant 1.000000e+00 : f32
    %36 = vector.broadcast %cst_19 : f32 to vector<128x128xf32>
    %37 = arith.addf %36, %35 : vector<128x128xf32>
    %38 = arith.divf %36, %37 : vector<128x128xf32>
    %39 = math.tanh %33 : vector<128x128xf32>
    %40 = arith.mulf %38, %39 : vector<128x128xf32>
    %41 = arith.truncf %40 : vector<128x128xf32> to vector<128x128xbf16>
    %c0_20 = arith.constant 0 : index
    %c0_21 = arith.constant 0 : index
    %c0_22 = arith.constant 0 : index
    %42 = vector.load %arg10[%c0_20, %c0_21, %c0_22] : memref<1x128x256xbf16, #tpu.memory_space<vmem>>, vector<1x128x256xbf16>
    %43 = vector.shape_cast %42 : vector<1x128x256xbf16> to vector<128x256xbf16>
    %cst_23 = arith.constant dense<0.000000e+00> : vector<128x256xf32>
    %44 = tpu.matmul %41, %43, %cst_23 {dimension_numbers = #tpu.dot_dimension_numbers<[1], [0], [0], [1], [0, 0, 1, 1], [], []>} : vector<128x128xbf16>, vector<128x256xbf16>, vector<128x256xf32> -> vector<128x256xf32>
    %c0_24 = arith.constant 0 : index
    %c0_25 = arith.constant 0 : index
    %c0_26 = arith.constant 0 : index
    %45 = vector.load %arg11[%c0_24, %c0_25, %c0_26] : memref<1x1x256xf32, #tpu.memory_space<vmem>>, vector<1x1x256xf32>
    %46 = vector.shape_cast %45 : vector<1x1x256xf32> to vector<1x256xf32>
    %47 = vector.broadcast %46 : vector<1x256xf32> to vector<128x256xf32>
    %48 = arith.addf %44, %47 : vector<128x256xf32>
    %c0_27 = arith.constant 0 : index
    %c0_28 = arith.constant 0 : index
    %49 = vector.load %arg18[%c0_27, %c0_28] : memref<128x128xf32, #tpu.memory_space<vmem>>, vector<128x128xf32>
    %50 = vector.extract_strided_slice %48 {offsets = [0, 0], sizes = [128, 128], strides = [1, 1]} : vector<128x256xf32> to vector<128x128xf32>
    %51 = arith.addf %49, %50 : vector<128x128xf32>
    %c0_29 = arith.constant 0 : index
    %c0_30 = arith.constant 0 : index
    %52 = vector.load %arg18[%c0_29, %c0_30] : memref<128x128xf32, #tpu.memory_space<vmem>>, vector<128x128xf32>
    tpu.vector_store %arg18[%c0_29, %c0_30], %51 {strides = array<i32>} : memref<128x128xf32, #tpu.memory_space<vmem>>, vector<128x128xf32>,
    %53 = vector.extract_strided_slice %48 {offsets = [0, 128], sizes = [128, 128], strides = [1, 1]} : vector<128x256xf32> to vector<128x128xf32>
    %54 = arith.addf %53, %4 : vector<128x128xf32>
    %c0_31 = arith.constant 0 : index
    %c0_32 = arith.constant 0 : index
    %55 = vector.load %arg17[%c0_31, %c0_32] : memref<128x128xf32, #tpu.memory_space<vmem>>, vector<128x128xf32>
    tpu.vector_store %arg17[%c0_31, %c0_32], %54 {strides = array<i32>} : memref<128x128xf32, #tpu.memory_space<vmem>>, vector<128x128xf32>,
    %56 = arith.truncf %54 : vector<128x128xf32> to vector<128x128xbf16>
    %c0_33 = arith.constant 0 : index
    %c128 = arith.constant 128 : index
    %57 = vector.load %arg19[%c0_33, %c128] : memref<128x256xbf16, #tpu.memory_space<vmem>>, vector<128x128xbf16>
    tpu.vector_store %arg19[%c0_33, %c128], %56 {strides = array<i32>} : memref<128x256xbf16, #tpu.memory_space<vmem>>, vector<128x128xbf16>,
    %c5_i32 = arith.constant 5 : i32
    %58 = arith.cmpi eq, %arg1, %c5_i32 : i32
    %59 = arith.extui %58 : i1 to i32
    %c0_i32_34 = arith.constant 0 : i32
    %60 = arith.cmpi ne, %59, %c0_i32_34 : i32
    scf.if %60 {
      %c0_35 = arith.constant 0 : index
      %c0_36 = arith.constant 0 : index
      %61 = vector.load %arg18[%c0_35, %c0_36] : memref<128x128xf32, #tpu.memory_space<vmem>>, vector<128x128xf32>
      %cst_37 = arith.constant 0.000000e+00 : f32
      %62 = vector.broadcast %cst_37 : f32 to vector<128x128xf32>
      %63 = arith.maximumf %61, %62 : vector<128x128xf32>
      %64 = arith.truncf %63 : vector<128x128xf32> to vector<128x128xbf16>
      %c0_38 = arith.constant 0 : index
      %c0_39 = arith.constant 0 : index
      %65 = vector.load %arg12[%c0_38, %c0_39] : memref<128x128xbf16, #tpu.memory_space<vmem>>, vector<128x128xbf16>
      %cst_40 = arith.constant dense<0.000000e+00> : vector<128x128xf32>
      %66 = tpu.matmul %64, %65, %cst_40 {dimension_numbers = #tpu.dot_dimension_numbers<[1], [0], [0], [1], [0, 0, 1, 1], [], []>} : vector<128x128xbf16>, vector<128x128xbf16>, vector<128x128xf32> -> vector<128x128xf32>
      %c0_41 = arith.constant 0 : index
      %c0_42 = arith.constant 0 : index
      %67 = vector.load %arg13[%c0_41, %c0_42] : memref<1x128xf32, #tpu.memory_space<vmem>>, vector<1x128xf32>
      %68 = vector.broadcast %67 : vector<1x128xf32> to vector<128x128xf32>
      %69 = arith.addf %66, %68 : vector<128x128xf32>
      %cst_43 = arith.constant 0.000000e+00 : f32
      %70 = vector.broadcast %cst_43 : f32 to vector<128x128xf32>
      %71 = arith.maximumf %69, %70 : vector<128x128xf32>
      %c0_44 = arith.constant 0 : index
      %c0_45 = arith.constant 0 : index
      %72 = vector.load %arg14[%c0_44, %c0_45] : memref<8x128xbf16, #tpu.memory_space<vmem>>, vector<8x128xbf16>
      %73 = arith.truncf %71 : vector<128x128xf32> to vector<128x128xbf16>
      %cst_46 = arith.constant dense<0.000000e+00> : vector<8x128xf32>
      %74 = tpu.matmul %72, %73, %cst_46 {dimension_numbers = #tpu.dot_dimension_numbers<[1], [1], [0], [0], [0, 0, 1, 0], [], []>} : vector<8x128xbf16>, vector<128x128xbf16>, vector<8x128xf32> -> vector<8x128xf32>
      %75 = vector.extract_strided_slice %74 {offsets = [0, 0], sizes = [1, 128], strides = [1, 1]} : vector<8x128xf32> to vector<1x128xf32>
      %c0_47 = arith.constant 0 : index
      %c0_48 = arith.constant 0 : index
      %76 = vector.load %arg15[%c0_47, %c0_48] : memref<1x1xf32, #tpu.memory_space<vmem>>, vector<1x1xf32>
      %77 = vector.broadcast %76 : vector<1x1xf32> to vector<1x128xf32>
      %78 = arith.addf %75, %77 : vector<1x128xf32>
      %c0_49 = arith.constant 0 : index
      %c0_50 = arith.constant 0 : index
      %c0_51 = arith.constant 0 : index
      %79 = vector.load %arg16[%c0_49, %c0_50, %c0_51] : memref<1x1x128xf32, #tpu.memory_space<vmem>>, vector<1x1x128xf32>
      %80 = vector.shape_cast %79 : vector<1x1x128xf32> to vector<1x128xf32>
      %81 = vector.shape_cast %78 : vector<1x128xf32> to vector<1x1x128xf32>
      tpu.vector_store %arg16[%c0_49, %c0_50, %c0_51], %81 {strides = array<i32>} : memref<1x1x128xf32, #tpu.memory_space<vmem>>, vector<1x1x128xf32>,
    } else {
    }
    return
  }
  func.func @transform_0(%arg0: i32, %arg1: i32) -> (i32, i32) {
    %c0_i32 = arith.constant 0 : i32
    %c0_i32_0 = arith.constant 0 : i32
    return %arg0, %c0_i32 : i32, i32
  }
  func.func @transform_1(%arg0: i32, %arg1: i32) -> (i32, i32) {
    %c0_i32 = arith.constant 0 : i32
    %c0_i32_0 = arith.constant 0 : i32
    %c0_i32_1 = arith.constant 0 : i32
    return %c0_i32, %c0_i32_0 : i32, i32
  }
  func.func @transform_2(%arg0: i32, %arg1: i32) -> (i32, i32) {
    %c0_i32 = arith.constant 0 : i32
    %c0_i32_0 = arith.constant 0 : i32
    %c0_i32_1 = arith.constant 0 : i32
    return %c0_i32, %c0_i32_0 : i32, i32
  }
  func.func @transform_3(%arg0: i32, %arg1: i32) -> (i32, i32) {
    %c0_i32 = arith.constant 0 : i32
    %c0_i32_0 = arith.constant 0 : i32
    %c0_i32_1 = arith.constant 0 : i32
    return %c0_i32, %c0_i32_0 : i32, i32
  }
  func.func @transform_4(%arg0: i32, %arg1: i32) -> (i32, i32) {
    %c0_i32 = arith.constant 0 : i32
    %c0_i32_0 = arith.constant 0 : i32
    %c0_i32_1 = arith.constant 0 : i32
    return %c0_i32, %c0_i32_0 : i32, i32
  }
  func.func @transform_5(%arg0: i32, %arg1: i32) -> (i32, i32) {
    %c0_i32 = arith.constant 0 : i32
    %c0_i32_0 = arith.constant 0 : i32
    %c0_i32_1 = arith.constant 0 : i32
    return %c0_i32, %c0_i32_0 : i32, i32
  }
  func.func @transform_6(%arg0: i32, %arg1: i32) -> (i32, i32, i32) {
    %c0_i32 = arith.constant 0 : i32
    %c0_i32_0 = arith.constant 0 : i32
    %c0_i32_1 = arith.constant 0 : i32
    return %arg1, %c0_i32, %c0_i32_0 : i32, i32, i32
  }
  func.func @transform_7(%arg0: i32, %arg1: i32) -> (i32, i32, i32) {
    %c0_i32 = arith.constant 0 : i32
    %c0_i32_0 = arith.constant 0 : i32
    %c0_i32_1 = arith.constant 0 : i32
    return %arg1, %c0_i32, %c0_i32_0 : i32, i32, i32
  }
  func.func @transform_8(%arg0: i32, %arg1: i32) -> (i32, i32, i32) {
    %c0_i32 = arith.constant 0 : i32
    %c0_i32_0 = arith.constant 0 : i32
    %c0_i32_1 = arith.constant 0 : i32
    return %arg1, %c0_i32, %c0_i32_0 : i32, i32, i32
  }
  func.func @transform_9(%arg0: i32, %arg1: i32) -> (i32, i32, i32) {
    %c0_i32 = arith.constant 0 : i32
    %c0_i32_0 = arith.constant 0 : i32
    %c0_i32_1 = arith.constant 0 : i32
    return %arg1, %c0_i32, %c0_i32_0 : i32, i32, i32
  }
  func.func @transform_10(%arg0: i32, %arg1: i32) -> (i32, i32) {
    %c0_i32 = arith.constant 0 : i32
    %c0_i32_0 = arith.constant 0 : i32
    %c0_i32_1 = arith.constant 0 : i32
    return %c0_i32, %c0_i32_0 : i32, i32
  }
  func.func @transform_11(%arg0: i32, %arg1: i32) -> (i32, i32) {
    %c0_i32 = arith.constant 0 : i32
    %c0_i32_0 = arith.constant 0 : i32
    %c0_i32_1 = arith.constant 0 : i32
    return %c0_i32, %c0_i32_0 : i32, i32
  }
  func.func @transform_12(%arg0: i32, %arg1: i32) -> (i32, i32) {
    %c0_i32 = arith.constant 0 : i32
    %c0_i32_0 = arith.constant 0 : i32
    %c0_i32_1 = arith.constant 0 : i32
    return %c0_i32, %c0_i32_0 : i32, i32
  }
  func.func @transform_13(%arg0: i32, %arg1: i32) -> (i32, i32) {
    %c0_i32 = arith.constant 0 : i32
    %c0_i32_0 = arith.constant 0 : i32
    %c0_i32_1 = arith.constant 0 : i32
    return %c0_i32, %c0_i32_0 : i32, i32
  }
  func.func @transform_14(%arg0: i32, %arg1: i32) -> (i32, i32, i32) {
    %c0_i32 = arith.constant 0 : i32
    %c0_i32_0 = arith.constant 0 : i32
    %c0_i32_1 = arith.constant 0 : i32
    return %arg0, %c0_i32, %c0_i32_0 : i32, i32, i32
  }
}

</mosaic_0001>

<llo_original>
// kernel: wavenet_forward.1
$region0: #{wavenet_forward.1}
  #allocation0 [shape = 'u32[]', space=smem, size = 0x4, offset = 0x4, fixed_abs, tag = 'smem constant byte address 0x4 - core index']
  #allocation1 [shape = 'u32[144,128]{1,0:T(1,128)}', space=vmem, size = 0x12000, scoped, tag = 'internal scratch']
  #allocation2 [shape = 'f32[128,128]{1,0:T(8,128)}', space=vmem, size = 0x10000, scoped, tag = 'scratch operand']
  #allocation3 [shape = 'f32[128,128]{1,0:T(8,128)}', space=vmem, size = 0x10000, scoped, tag = 'scratch operand']
  #allocation4 [shape = 'bf16[128,256]{1,0:T(16,128)(2,1)}', space=vmem, size = 0x10000, scoped, tag = 'scratch operand']
  #allocation5 [shape = 'f32[1,1]{1,0:T(1,128)S(1)}', space=vmem, size = 0x200, scoped, tag = 'scoped memory for wavenet_forward.1']
  %s0 = inlined_call_operand.vmem [shape: bf16[256,72], index: 0, kind: input, shape index: {}]
  %s1 = inlined_call_operand.vmem [shape: bf16[72,32], index: 1, kind: input, shape index: {}]
  %s2 = inlined_call_operand.vmem [shape: f32[1,32], index: 2, kind: input, shape index: {}]
  %s3 = inlined_call_operand.vmem [shape: bf16[32,128], index: 3, kind: input, shape index: {}]
  %s4 = inlined_call_operand.vmem [shape: bf16[32,128], index: 4, kind: input, shape index: {}]
  %s5 = inlined_call_operand.vmem [shape: f32[1,128], index: 5, kind: input, shape index: {}]
  %s6 = inlined_call_operand.hbm [shape: bf16[6,256,256], index: 6, kind: input, shape index: {}]
  %s7 = inlined_call_operand.vmem [shape: f32[6,1,256], index: 7, kind: input, shape index: {}]
  %s8 = inlined_call_operand.hbm [shape: bf16[6,128,256], index: 8, kind: input, shape index: {}]
  %s9 = inlined_call_operand.vmem [shape: f32[6,1,256], index: 9, kind: input, shape index: {}]
  %s10 = inlined_call_operand.vmem [shape: bf16[128,128], index: 10, kind: input, shape index: {}]
  %s11 = inlined_call_operand.vmem [shape: f32[1,128], index: 11, kind: input, shape index: {}]
  %s12 = inlined_call_operand.vmem [shape: bf16[8,128], index: 12, kind: input, shape index: {}]
  %s13 = inlined_call_operand.<no memory space> [shape: f32[1,1], index: 13, kind: input, shape index: {}]
  %s14 = inlined_call_operand.hbm [shape: f32[2,1,128], index: 14, kind: output, shape index: {}]
  %s15 = sld [smem:[#allocation0]]
  $region117: #{wavenet_forward.1} parent=0
    _
  %s17 = ssub.s32 1, %s15
  %s18 = scalar_select 0, %s17, %s15
  %v19 = vstv %s13
  %20 = vst [vmem:[#allocation5] sm:$0x1] %v19
  $region1: #{wavenet_forward.1} parent=0
    #allocation6 [shape = 'u8[262144]{0}', space=vmem, size = 0x40000, scoped, tag = 'input window, operand 6']
    #allocation7 [shape = 's32[2]{0}', space=sflag, size = 0x8, scoped, tag = 'scoped memory for wavenet_forward.1']
    #allocation8 [shape = 's32[2]{0}', space=sflag, size = 0x8, scoped, tag = 'scoped memory for wavenet_forward.1']
    #allocation9 [shape = 'u8[131072]{0}', space=vmem, size = 0x20000, scoped, tag = 'input window, operand 8']
    #allocation10 [shape = 's32[2]{0}', space=sflag, size = 0x8, scoped, tag = 'scoped memory for wavenet_forward.1']
    #allocation11 [shape = 'u8[1024]{0}', space=vmem, size = 0x400, scoped, tag = 'output window, operand 0']
    %21 = vsyncpa [#allocation7], 0
    %s22 = scalar_lea.sflag [#allocation7], 1
    %23 = vsyncpa %s22, 0
    %24 = vsyncpa [#allocation10], 0
    %s25 = scalar_lea.sflag [#allocation10], 1
    %26 = vsyncpa %s25, 0
    %27 = vsyncpa [#allocation8], 0
    %s28 = scalar_lea.sflag [#allocation8], 1
    %29 = vsyncpa %s28, 0
    loop: start=0, step=1, limit=14
    $region2: #{wavenet_forward.1} parent=1 // loop_pre_header
      _
    $region3: #{wavenet_forward.1} parent=1 // loop_header
      %s31 = sphi 0, %s35
      %p32 = scmp.ge.s32.totalorder %s31, 14
      %s38 = sphi 0, %s50
      %s39 = sphi 0, %s46
      %s40 = sphi 0, %s38
      %s41 = sphi 0, %s39
      %s42 = sphi 0, %s40
      %s43 = sphi 0, %s41
      %s53 = sphi 0, %s55
      %s56 = sphi 0, %s53
      %s57 = sphi 0, %s56
      %s73 = sphi 0, %s57
      %s77 = sphi 0, %s77
      %s79 = sphi 0, %s77
      %s80 = sphi 0, %s79
      %s94 = sphi 0, %s80
      %s98 = sphi 0, %s98
      %s100 = sphi 0, %s98
      %s101 = sphi 0, %s100
      %s115 = sphi 0, %s101
      %s119 = sphi 0, %s119
      %s121 = sphi 0, %s119
      %s122 = sphi 0, %s121
      %s136 = sphi 0, %s122
      %s140 = sphi 0, %s140
      %s142 = sphi 0, %s140
      %s143 = sphi 0, %s142
      %s157 = sphi 0, %s143
      %s161 = sphi 0, %s161
      %s163 = sphi 0, %s161
      %s164 = sphi 0, %s163
      %s178 = sphi 0, %s164
      %s184 = sphi 0, %s186
      %s187 = sphi 0, %s184
      %s188 = sphi 0, %s187
      %s204 = sphi 0, %s188
      %s210 = sphi 0, %s212
      %s213 = sphi 0, %s210
      %s214 = sphi 0, %s213
      %s230 = sphi 0, %s214
      %s236 = sphi 0, %s238
      %s239 = sphi 0, %s236
      %s240 = sphi 0, %s239
      %s256 = sphi 0, %s240
      %s262 = sphi 0, %s264
      %s265 = sphi 0, %s262
      %s266 = sphi 0, %s265
      %s282 = sphi 0, %s266
      %s286 = sphi 0, %s286
      %s288 = sphi 0, %s286
      %s289 = sphi 0, %s288
      %s303 = sphi 0, %s289
      %s307 = sphi 0, %s307
      %s309 = sphi 0, %s307
      %s310 = sphi 0, %s309
      %s324 = sphi 0, %s310
      %s328 = sphi 0, %s328
      %s330 = sphi 0, %s328
      %s331 = sphi 0, %s330
      %s345 = sphi 0, %s331
      %s349 = sphi 0, %s349
      %s351 = sphi 0, %s349
      %s352 = sphi 0, %s351
      %s366 = sphi 0, %s352
      %s372 = sphi 0, %s374
      %s375 = sphi 0, %s372
      %s376 = sphi 0, %s375
      %s392 = sphi 0, %s376
    $region4: #{wavenet_forward.1} parent=1 // loop_header_branch
      %34 = sbr.rel (%p32) target = $region8
    $region5: #{wavenet_forward.1} parent=1 // loop_body
      %s36 = ssub.s32 %s31, 1
      %s37 = ssub.s32 %s31, 2
      %s44 = sadd.s32 1, %s39
      %p45 = scmp.ge.s32.totalorder %s44, 6
      %s46 = scalar_select %p45, 0, %s44
      %s47 = sadd.s32 1, %s38
      %s48 = scalar_select %p45, %s47, %s38
      %p49 = scmp.ge.s32.totalorder %s48, 2
      %s50 = scalar_select %p49, 0, %s48
      %s51 = ssub.s32 %s38, %s50
      %p52 = scmp.eq.s32.totalorder %s51, 0
      %s54 = sadd.s32 %s53, 1
      %s55 = scalar_select %p52, %s53, %s54
      %p58 = pneg %p52
      %p59 = scmp.eq.s32.totalorder %s31, 11
      %p60 = por %p58, %p59
      %p61 = scmp.ne.s32.totalorder %s53, %s56
      %p62 = scmp.eq.s32.totalorder %s31, 0
      %p63 = por %p61, %p62
      %p64 = scmp.ne.s32.totalorder %s53, %s56
      %p65 = scmp.eq.s32.totalorder %s36, 11
      %p66 = por %p64, %p65
      %p67 = scmp.ne.s32.totalorder %s56, %s57
      %p68 = scmp.eq.s32.totalorder %s36, 0
      %p69 = por %p67, %p68
      %p70 = scmp.ne.s32.totalorder %s56, %s57
      %p71 = scmp.eq.s32.totalorder %s37, 11
      %p72 = por %p70, %p71
      %p74 = scmp.ne.s32.totalorder %s57, %s73
      %p75 = scmp.eq.s32.totalorder %s37, 0
      %p76 = por %p74, %p75
      %s78 = sadd.s32 %s77, 1
      %p81 = scmp.eq.s32.totalorder %s31, 11
      %p82 = scmp.ne.s32.totalorder %s77, %s79
      %p83 = scmp.eq.s32.totalorder %s31, 0
      %p84 = por %p82, %p83
      %p85 = scmp.ne.s32.totalorder %s77, %s79
      %p86 = scmp.eq.s32.totalorder %s36, 11
      %p87 = por %p85, %p86
      %p88 = scmp.ne.s32.totalorder %s79, %s80
      %p89 = scmp.eq.s32.totalorder %s36, 0
      %p90 = por %p88, %p89
      %p91 = scmp.ne.s32.totalorder %s79, %s80
      %p92 = scmp.eq.s32.totalorder %s37, 11
      %p93 = por %p91, %p92
      %p95 = scmp.ne.s32.totalorder %s80, %s94
      %p96 = scmp.eq.s32.totalorder %s37, 0
      %p97 = por %p95, %p96
      %s99 = sadd.s32 %s98, 1
      %p102 = scmp.eq.s32.totalorder %s31, 11
      %p103 = scmp.ne.s32.totalorder %s98, %s100
      %p104 = scmp.eq.s32.totalorder %s31, 0
      %p105 = por %p103, %p104
      %p106 = scmp.ne.s32.totalorder %s98, %s100
      %p107 = scmp.eq.s32.totalorder %s36, 11
      %p108 = por %p106, %p107
      %p109 = scmp.ne.s32.totalorder %s100, %s101
      %p110 = scmp.eq.s32.totalorder %s36, 0
      %p111 = por %p109, %p110
      %p112 = scmp.ne.s32.totalorder %s100, %s101
      %p113 = scmp.eq.s32.totalorder %s37, 11
      %p114 = por %p112, %p113
      %p116 = scmp.ne.s32.totalorder %s101, %s115
      %p117 = scmp.eq.s32.totalorder %s37, 0
      %p118 = por %p116, %p117
      %s120 = sadd.s32 %s119, 1
      %p123 = scmp.eq.s32.totalorder %s31, 11
      %p124 = scmp.ne.s32.totalorder %s119, %s121
      %p125 = scmp.eq.s32.totalorder %s31, 0
      %p126 = por %p124, %p125
      %p127 = scmp.ne.s32.totalorder %s119, %s121
      %p128 = scmp.eq.s32.totalorder %s36, 11
      %p129 = por %p127, %p128
      %p130 = scmp.ne.s32.totalorder %s121, %s122
      %p131 = scmp.eq.s32.totalorder %s36, 0
      %p132 = por %p130, %p131
      %p133 = scmp.ne.s32.totalorder %s121, %s122
      %p134 = scmp.eq.s32.totalorder %s37, 11
      %p135 = por %p133, %p134
      %p137 = scmp.ne.s32.totalorder %s122, %s136
      %p138 = scmp.eq.s32.totalorder %s37, 0
      %p139 = por %p137, %p138
      %s141 = sadd.s32 %s140, 1
      %p144 = scmp.eq.s32.totalorder %s31, 11
      %p145 = scmp.ne.s32.totalorder %s140, %s142
      %p146 = scmp.eq.s32.totalorder %s31, 0
      %p147 = por %p145, %p146
      %p148 = scmp.ne.s32.totalorder %s140, %s142
      %p149 = scmp.eq.s32.totalorder %s36, 11
      %p150 = por %p148, %p149
      %p151 = scmp.ne.s32.totalorder %s142, %s143
      %p152 = scmp.eq.s32.totalorder %s36, 0
      %p153 = por %p151, %p152
      %p154 = scmp.ne.s32.totalorder %s142, %s143
      %p155 = scmp.eq.s32.totalorder %s37, 11
      %p156 = por %p154, %p155
      %p158 = scmp.ne.s32.totalorder %s143, %s157
      %p159 = scmp.eq.s32.totalorder %s37, 0
      %p160 = por %p158, %p159
      %s162 = sadd.s32 %s161, 1
      %p165 = scmp.eq.s32.totalorder %s31, 11
      %p166 = scmp.ne.s32.totalorder %s161, %s163
      %p167 = scmp.eq.s32.totalorder %s31, 0
      %p168 = por %p166, %p167
      %p169 = scmp.ne.s32.totalorder %s161, %s163
      %p170 = scmp.eq.s32.totalorder %s36, 11
      %p171 = por %p169, %p170
      %p172 = scmp.ne.s32.totalorder %s163, %s164
      %p173 = scmp.eq.s32.totalorder %s36, 0
      %p174 = por %p172, %p173
      %p175 = scmp.ne.s32.totalorder %s163, %s164
      %p176 = scmp.eq.s32.totalorder %s37, 11
      %p177 = por %p175, %p176
      %p179 = scmp.ne.s32.totalorder %s164, %s178
      %p180 = scmp.eq.s32.totalorder %s37, 0
      %p181 = por %p179, %p180
      %s182 = ssub.s32 %s39, %s46
      %p183 = scmp.eq.s32.totalorder %s182, 0
      %s185 = sadd.s32 %s184, 1
      %s186 = scalar_select %p183, %s184, %s185
      %p189 = pneg %p183
      %p190 = scmp.eq.s32.totalorder %s31, 11
      %p191 = por %p189, %p190
      %p192 = scmp.ne.s32.totalorder %s184, %s187
      %p193 = scmp.eq.s32.totalorder %s31, 0
      %p194 = por %p192, %p193
      %p195 = scmp.ne.s32.totalorder %s184, %s187
      %p196 = scmp.eq.s32.totalorder %s36, 11
      %p197 = por %p195, %p196
      %p198 = scmp.ne.s32.totalorder %s187, %s188
      %p199 = scmp.eq.s32.totalorder %s36, 0
      %p200 = por %p198, %p199
      %p201 = scmp.ne.s32.totalorder %s187, %s188
      %p202 = scmp.eq.s32.totalorder %s37, 11
      %p203 = por %p201, %p202
      %p205 = scmp.ne.s32.totalorder %s188, %s204
      %p206 = scmp.eq.s32.totalorder %s37, 0
      %p207 = por %p205, %p206
      %s208 = ssub.s32 %s39, %s46
      %p209 = scmp.eq.s32.totalorder %s208, 0
      %s211 = sadd.s32 %s210, 1
      %s212 = scalar_select %p209, %s210, %s211
      %p215 = pneg %p209
      %p216 = scmp.eq.s32.totalorder %s31, 11
      %p217 = por %p215, %p216
      %p218 = scmp.ne.s32.totalorder %s210, %s213
      %p219 = scmp.eq.s32.totalorder %s31, 0
      %p220 = por %p218, %p219
      %p221 = scmp.ne.s32.totalorder %s210, %s213
      %p222 = scmp.eq.s32.totalorder %s36, 11
      %p223 = por %p221, %p222
      %p224 = scmp.ne.s32.totalorder %s213, %s214
      %p225 = scmp.eq.s32.totalorder %s36, 0
      %p226 = por %p224, %p225
      %p227 = scmp.ne.s32.totalorder %s213, %s214
      %p228 = scmp.eq.s32.totalorder %s37, 11
      %p229 = por %p227, %p228
      %p231 = scmp.ne.s32.totalorder %s214, %s230
      %p232 = scmp.eq.s32.totalorder %s37, 0
      %p233 = por %p231, %p232
      %s234 = ssub.s32 %s39, %s46
      %p235 = scmp.eq.s32.totalorder %s234, 0
      %s237 = sadd.s32 %s236, 1
      %s238 = scalar_select %p235, %s236, %s237
      %p241 = pneg %p235
      %p242 = scmp.eq.s32.totalorder %s31, 11
      %p243 = por %p241, %p242
      %p244 = scmp.ne.s32.totalorder %s236, %s239
      %p245 = scmp.eq.s32.totalorder %s31, 0
      %p246 = por %p244, %p245
      %p247 = scmp.ne.s32.totalorder %s236, %s239
      %p248 = scmp.eq.s32.totalorder %s36, 11
      %p249 = por %p247, %p248
      %p250 = scmp.ne.s32.totalorder %s239, %s240
      %p251 = scmp.eq.s32.totalorder %s36, 0
      %p252 = por %p250, %p251
      %p253 = scmp.ne.s32.totalorder %s239, %s240
      %p254 = scmp.eq.s32.totalorder %s37, 11
      %p255 = por %p253, %p254
      %p257 = scmp.ne.s32.totalorder %s240, %s256
      %p258 = scmp.eq.s32.totalorder %s37, 0
      %p259 = por %p257, %p258
      %s260 = ssub.s32 %s39, %s46
      %p261 = scmp.eq.s32.totalorder %s260, 0
      %s263 = sadd.s32 %s262, 1
      %s264 = scalar_select %p261, %s262, %s263
      %p267 = pneg %p261
      %p268 = scmp.eq.s32.totalorder %s31, 11
      %p269 = por %p267, %p268
      %p270 = scmp.ne.s32.totalorder %s262, %s265
      %p271 = scmp.eq.s32.totalorder %s31, 0
      %p272 = por %p270, %p271
      %p273 = scmp.ne.s32.totalorder %s262, %s265
      %p274 = scmp.eq.s32.totalorder %s36, 11
      %p275 = por %p273, %p274
      %p276 = scmp.ne.s32.totalorder %s265, %s266
      %p277 = scmp.eq.s32.totalorder %s36, 0
      %p278 = por %p276, %p277
      %p279 = scmp.ne.s32.totalorder %s265, %s266
      %p280 = scmp.eq.s32.totalorder %s37, 11
      %p281 = por %p279, %p280
      %p283 = scmp.ne.s32.totalorder %s266, %s282
      %p284 = scmp.eq.s32.totalorder %s37, 0
      %p285 = por %p283, %p284
      %s287 = sadd.s32 %s286, 1
      %p290 = scmp.eq.s32.totalorder %s31, 11
      %p291 = scmp.ne.s32.totalorder %s286, %s288
      %p292 = scmp.eq.s32.totalorder %s31, 0
      %p293 = por %p291, %p292
      %p294 = scmp.ne.s32.totalorder %s286, %s288
      %p295 = scmp.eq.s32.totalorder %s36, 11
      %p296 = por %p294, %p295
      %p297 = scmp.ne.s32.totalorder %s288, %s289
      %p298 = scmp.eq.s32.totalorder %s36, 0
      %p299 = por %p297, %p298
      %p300 = scmp.ne.s32.totalorder %s288, %s289
      %p301 = scmp.eq.s32.totalorder %s37, 11
      %p302 = por %p300, %p301
      %p304 = scmp.ne.s32.totalorder %s289, %s303
      %p305 = scmp.eq.s32.totalorder %s37, 0
      %p306 = por %p304, %p305
      %s308 = sadd.s32 %s307, 1
      %p311 = scmp.eq.s32.totalorder %s31, 11
      %p312 = scmp.ne.s32.totalorder %s307, %s309
      %p313 = scmp.eq.s32.totalorder %s31, 0
      %p314 = por %p312, %p313
      %p315 = scmp.ne.s32.totalorder %s307, %s309
      %p316 = scmp.eq.s32.totalorder %s36, 11
      %p317 = por %p315, %p316
      %p318 = scmp.ne.s32.totalorder %s309, %s310
      %p319 = scmp.eq.s32.totalorder %s36, 0
      %p320 = por %p318, %p319
      %p321 = scmp.ne.s32.totalorder %s309, %s310
      %p322 = scmp.eq.s32.totalorder %s37, 11
      %p323 = por %p321, %p322
      %p325 = scmp.ne.s32.totalorder %s310, %s324
      %p326 = scmp.eq.s32.totalorder %s37, 0
      %p327 = por %p325, %p326
      %s329 = sadd.s32 %s328, 1
      %p332 = scmp.eq.s32.totalorder %s31, 11
      %p333 = scmp.ne.s32.totalorder %s328, %s330
      %p334 = scmp.eq.s32.totalorder %s31, 0
      %p335 = por %p333, %p334
      %p336 = scmp.ne.s32.totalorder %s328, %s330
      %p337 = scmp.eq.s32.totalorder %s36, 11
      %p338 = por %p336, %p337
      %p339 = scmp.ne.s32.totalorder %s330, %s331
      %p340 = scmp.eq.s32.totalorder %s36, 0
      %p341 = por %p339, %p340
      %p342 = scmp.ne.s32.totalorder %s330, %s331
      %p343 = scmp.eq.s32.totalorder %s37, 11
      %p344 = por %p342, %p343
      %p346 = scmp.ne.s32.totalorder %s331, %s345
      %p347 = scmp.eq.s32.totalorder %s37, 0
      %p348 = por %p346, %p347
      %s350 = sadd.s32 %s349, 1
      %p353 = scmp.eq.s32.totalorder %s31, 11
      %p354 = scmp.ne.s32.totalorder %s349, %s351
      %p355 = scmp.eq.s32.totalorder %s31, 0
      %p356 = por %p354, %p355
      %p357 = scmp.ne.s32.totalorder %s349, %s351
      %p358 = scmp.eq.s32.totalorder %s36, 11
      %p359 = por %p357, %p358
      %p360 = scmp.ne.s32.totalorder %s351, %s352
      %p361 = scmp.eq.s32.totalorder %s36, 0
      %p362 = por %p360, %p361
      %p363 = scmp.ne.s32.totalorder %s351, %s352
      %p364 = scmp.eq.s32.totalorder %s37, 11
      %p365 = por %p363, %p364
      %p367 = scmp.ne.s32.totalorder %s352, %s366
      %p368 = scmp.eq.s32.totalorder %s37, 0
      %p369 = por %p367, %p368
      %s370 = ssub.s32 %s38, %s50
      %p371 = scmp.eq.s32.totalorder %s370, 0
      %s373 = sadd.s32 %s372, 1
      %s374 = scalar_select %p371, %s372, %s373
      %p377 = pneg %p371
      %p378 = scmp.eq.s32.totalorder %s31, 11
      %p379 = por %p377, %p378
      %p380 = scmp.ne.s32.totalorder %s372, %s375
      %p381 = scmp.eq.s32.totalorder %s31, 0
      %p382 = por %p380, %p381
      %p383 = scmp.ne.s32.totalorder %s372, %s375
      %p384 = scmp.eq.s32.totalorder %s36, 11
      %p385 = por %p383, %p384
      %p386 = scmp.ne.s32.totalorder %s375, %s376
      %p387 = scmp.eq.s32.totalorder %s36, 0
      %p388 = por %p386, %p387
      %p389 = scmp.ne.s32.totalorder %s375, %s376
      %p390 = scmp.eq.s32.totalorder %s37, 11
      %p391 = por %p389, %p390
      %p393 = scmp.ne.s32.totalorder %s376, %s392
      %p394 = scmp.eq.s32.totalorder %s37, 0
      %p395 = por %p393, %p394
      %p396 = scmp.le.s32.totalorder 1, %s31
      %p397 = scmp.lt.s32.totalorder %s31, 13
      %p398 = pnand %p396, %p397
      %p399 = pneg %p398
      // Predicated region
      $region9: #{wavenet_forward.1} parent=5 // pred_check
        _
      $region10: #{wavenet_forward.1} parent=5 // pred_check_branch
        %401 = sbr.rel (%p398) target = $region12
      $region11: #{wavenet_forward.1} parent=5 // pred_region
        %s402 = ssub.s32 %s31, 1
        // Predicated region
        $region13: #{wavenet_forward.1} parent=11 // pred_check
          %p403 = pneg %p90
        $region14: #{wavenet_forward.1} parent=11 // pred_check_branch
          %405 = sbr.rel (%p403) target = $region16
        $region15: #{wavenet_forward.1} parent=11 // pred_region
          _
        $region16: #{wavenet_forward.1} parent=11 // pred_fallthru
          _
        // Predicated region
        $region17: #{wavenet_forward.1} parent=11 // pred_check
          %p406 = pneg %p111
        $region18: #{wavenet_forward.1} parent=11 // pred_check_branch
          %408 = sbr.rel (%p406) target = $region20
        $region19: #{wavenet_forward.1} parent=11 // pred_region
          _
        $region20: #{wavenet_forward.1} parent=11 // pred_fallthru
          _
        // Predicated region
        $region21: #{wavenet_forward.1} parent=11 // pred_check
          %p409 = pneg %p132
        $region22: #{wavenet_forward.1} parent=11 // pred_check_branch
          %411 = sbr.rel (%p409) target = $region24
        $region23: #{wavenet_forward.1} parent=11 // pred_region
          _
        $region24: #{wavenet_forward.1} parent=11 // pred_fallthru
          _
        // Predicated region
        $region25: #{wavenet_forward.1} parent=11 // pred_check
          %p412 = pneg %p153
        $region26: #{wavenet_forward.1} parent=11 // pred_check_branch
          %414 = sbr.rel (%p412) target = $region28
        $region27: #{wavenet_forward.1} parent=11 // pred_region
          _
        $region28: #{wavenet_forward.1} parent=11 // pred_fallthru
          _
        // Predicated region
        $region29: #{wavenet_forward.1} parent=11 // pred_check
          %p415 = pneg %p174
        $region30: #{wavenet_forward.1} parent=11 // pred_check_branch
          %417 = sbr.rel (%p415) target = $region32
        $region31: #{wavenet_forward.1} parent=11 // pred_region
          _
        $region32: #{wavenet_forward.1} parent=11 // pred_fallthru
          _
        // Predicated region
        $region33: #{wavenet_forward.1} parent=11 // pred_check
          %p418 = pneg %p299
        $region34: #{wavenet_forward.1} parent=11 // pred_check_branch
          %420 = sbr.rel (%p418) target = $region36
        $region35: #{wavenet_forward.1} parent=11 // pred_region
          _
        $region36: #{wavenet_forward.1} parent=11 // pred_fallthru
          _
        // Predicated region
        $region37: #{wavenet_forward.1} parent=11 // pred_check
          %p421 = pneg %p320
        $region38: #{wavenet_forward.1} parent=11 // pred_check_branch
          %423 = sbr.rel (%p421) target = $region40
        $region39: #{wavenet_forward.1} parent=11 // pred_region
          _
        $region40: #{wavenet_forward.1} parent=11 // pred_fallthru
          _
        // Predicated region
        $region41: #{wavenet_forward.1} parent=11 // pred_check
          %p424 = pneg %p341
        $region42: #{wavenet_forward.1} parent=11 // pred_check_branch
          %426 = sbr.rel (%p424) target = $region44
        $region43: #{wavenet_forward.1} parent=11 // pred_region
          _
        $region44: #{wavenet_forward.1} parent=11 // pred_fallthru
          _
        // Predicated region
        $region45: #{wavenet_forward.1} parent=11 // pred_check
          %p427 = pneg %p362
        $region46: #{wavenet_forward.1} parent=11 // pred_check_branch
          %429 = sbr.rel (%p427) target = $region48
        $region47: #{wavenet_forward.1} parent=11 // pred_region
          _
        $region48: #{wavenet_forward.1} parent=11 // pred_fallthru
          _
      $region12: #{wavenet_forward.1} parent=5 // pred_fallthru
        _
      %p430 = scmp.lt.s32.totalorder %s31, 12
      // Predicated region
      $region49: #{wavenet_forward.1} parent=5 // pred_check
        %p431 = pneg %p430
      $region50: #{wavenet_forward.1} parent=5 // pred_check_branch
        %433 = sbr.rel (%p431) target = $region52
      $region51: #{wavenet_forward.1} parent=5 // pred_region
        // Predicated region
        $region53: #{wavenet_forward.1} parent=51 // pred_check
          %p434 = pneg %p63
        $region54: #{wavenet_forward.1} parent=51 // pred_check_branch
          %436 = sbr.rel (%p434) target = $region56
        $region55: #{wavenet_forward.1} parent=51 // pred_region
          %s437 = smul.u32 16, %s38
          %p438 = scmp.lt.s32.totalorder %s437, 31
          %s439 = scalar_select %p438, %s437, 31
          %s440 = smul.addr %s439, 4
          %s441 = scalar_lea.vmem %s0, %s440
          %s442 = smul.u32 16, %s38
        $region56: #{wavenet_forward.1} parent=51 // pred_fallthru
          _
        // Predicated region
        $region57: #{wavenet_forward.1} parent=51 // pred_check
          %p443 = pneg %p194
        $region58: #{wavenet_forward.1} parent=51 // pred_check_branch
          %445 = sbr.rel (%p443) target = $region60
        $region59: #{wavenet_forward.1} parent=51 // pred_region
          %s446 = sand.u32 %s184, 1
          %s447 = scalar_lea.sflag [#allocation7], %s446
          %s448 = sand.u32 %s184, 1
          %s449 = smul.addr %s448, 256
          %s450 = scalar_lea.vmem [#allocation6], %s449
          %s452 = ssub.s32 4096, 4096
          %453 = vsyncadd %s447, %s452
          %s454 = smul.addr %s39, 64
          %s455 = smul.addr %s454, 64
          %s456 = scalar_lea.hbm %s6, %s455
          %s457 = sshll.u32 %s450, 4
          %s458 = int_to_ptr.vmem [resolvable:$true] %s457
          %463 = dma.hbm_to_vmem [thread:$0]  %s456, 4096, %s458, %s447, 128, 128, 8
        $region60: #{wavenet_forward.1} parent=51 // pred_fallthru
          _
        // Predicated region
        $region61: #{wavenet_forward.1} parent=51 // pred_check
          %p464 = pneg %p220
        $region62: #{wavenet_forward.1} parent=51 // pred_check_branch
          %466 = sbr.rel (%p464) target = $region64
        $region63: #{wavenet_forward.1} parent=51 // pred_region
          %p467 = scmp.lt.s32.totalorder %s39, 5
          %s468 = scalar_select %p467, %s39, 5
          %s469 = smul.addr %s468, 2
          %s470 = scalar_lea.vmem %s7, %s469
        $region64: #{wavenet_forward.1} parent=51 // pred_fallthru
          _
        // Predicated region
        $region65: #{wavenet_forward.1} parent=51 // pred_check
          %p471 = pneg %p246
        $region66: #{wavenet_forward.1} parent=51 // pred_check_branch
          %473 = sbr.rel (%p471) target = $region68
        $region67: #{wavenet_forward.1} parent=51 // pred_region
          %s474 = sand.u32 %s236, 1
          %s475 = scalar_lea.sflag [#allocation10], %s474
          %s476 = sand.u32 %s236, 1
          %s477 = smul.addr %s476, 128
          %s478 = scalar_lea.vmem [#allocation9], %s477
          %s480 = ssub.s32 2048, 2048
          %481 = vsyncadd %s475, %s480
          %s482 = smul.addr %s39, 32
          %s483 = smul.addr %s482, 64
          %s484 = scalar_lea.hbm %s8, %s483
          %s485 = sshll.u32 %s478, 4
          %s486 = int_to_ptr.vmem [resolvable:$true] %s485
          %491 = dma.hbm_to_vmem [thread:$0]  %s484, 2048, %s486, %s475, 128, 128, 8
        $region68: #{wavenet_forward.1} parent=51 // pred_fallthru
          _
        // Predicated region
        $region69: #{wavenet_forward.1} parent=51 // pred_check
          %p492 = pneg %p272
        $region70: #{wavenet_forward.1} parent=51 // pred_check_branch
          %494 = sbr.rel (%p492) target = $region72
        $region71: #{wavenet_forward.1} parent=51 // pred_region
          %p495 = scmp.lt.s32.totalorder %s39, 5
          %s496 = scalar_select %p495, %s39, 5
          %s497 = smul.addr %s496, 2
          %s498 = scalar_lea.vmem %s9, %s497
        $region72: #{wavenet_forward.1} parent=51 // pred_fallthru
          _
      $region52: #{wavenet_forward.1} parent=5 // pred_fallthru
        _
      %p499 = scmp.le.s32.totalorder 1, %s31
      %p500 = scmp.lt.s32.totalorder %s31, 13
      %p501 = pnand %p499, %p500
      %p502 = pneg %p501
      // Predicated region
      $region73: #{wavenet_forward.1} parent=5 // pred_check
        _
      $region74: #{wavenet_forward.1} parent=5 // pred_check_branch
        %504 = sbr.rel (%p501) target = $region76
      $region75: #{wavenet_forward.1} parent=5 // pred_region
        %s505 = ssub.s32 %s31, 1
        %s506 = sand.u32 %s187, 1
        %s507 = scalar_lea.sflag [#allocation7], %s506
        %s508 = sand.u32 %s187, 1
        %s509 = smul.addr %s508, 256
        %s510 = scalar_lea.vmem [#allocation6], %s509
        // Predicated region
        $region77: #{wavenet_forward.1} parent=75 // pred_check
          %p511 = pneg %p200
        $region78: #{wavenet_forward.1} parent=75 // pred_check_branch
          %513 = sbr.rel (%p511) target = $region80
        $region79: #{wavenet_forward.1} parent=75 // pred_region
          %514 = dma.done %s507, 4096
        $region80: #{wavenet_forward.1} parent=75 // pred_fallthru
          _
        %s515 = sand.u32 %s239, 1
        %s516 = scalar_lea.sflag [#allocation10], %s515
        %s517 = sand.u32 %s239, 1
        %s518 = smul.addr %s517, 128
        %s519 = scalar_lea.vmem [#allocation9], %s518
        // Predicated region
        $region81: #{wavenet_forward.1} parent=75 // pred_check
          %p520 = pneg %p252
        $region82: #{wavenet_forward.1} parent=75 // pred_check_branch
          %522 = sbr.rel (%p520) target = $region84
        $region83: #{wavenet_forward.1} parent=75 // pred_region
          %523 = dma.done %s516, 2048
        $region84: #{wavenet_forward.1} parent=75 // pred_fallthru
          _
        %s524 = smul.u32 16, %s40
        %p525 = scmp.lt.s32.totalorder %s524, 31
        %s526 = scalar_select %p525, %s524, 31
        %s527 = smul.addr %s526, 4
        %s528 = scalar_lea.vmem %s0, %s527
        %p529 = pneg %p69
        %p530 = pneg %p66
        %p531 = pneg %p90
        %p532 = pneg %p87
        %p533 = pneg %p111
        %p534 = pneg %p108
        %p535 = pneg %p132
        %p536 = pneg %p129
        %p537 = pneg %p153
        %p538 = pneg %p150
        %p539 = pneg %p174
        %p540 = pneg %p171
        %s541 = sand.u32 %s187, 1
        %s542 = scalar_lea.sflag [#allocation7], %s541
        %s543 = sand.u32 %s187, 1
        %s544 = smul.addr %s543, 256
        %s545 = scalar_lea.vmem [#allocation6], %s544
        %p546 = pneg %p200
        %p547 = pneg %p197
        %p548 = scmp.lt.s32.totalorder %s41, 5
        %s549 = scalar_select %p548, %s41, 5
        %s550 = smul.addr %s549, 2
        %s551 = scalar_lea.vmem %s7, %s550
        %p552 = pneg %p226
        %p553 = pneg %p223
        %s554 = sand.u32 %s239, 1
        %s555 = scalar_lea.sflag [#allocation10], %s554
        %s556 = sand.u32 %s239, 1
        %s557 = smul.addr %s556, 128
        %s558 = scalar_lea.vmem [#allocation9], %s557
        %p559 = pneg %p252
        %p560 = pneg %p249
        %p561 = scmp.lt.s32.totalorder %s41, 5
        %s562 = scalar_select %p561, %s41, 5
        %s563 = smul.addr %s562, 2
        %s564 = scalar_lea.vmem %s9, %s563
        %p565 = pneg %p278
        %p566 = pneg %p275
        %p567 = pneg %p299
        %p568 = pneg %p296
        %p569 = pneg %p320
        %p570 = pneg %p317
        %p571 = pneg %p341
        %p572 = pneg %p338
        %p573 = pneg %p362
        %p574 = pneg %p359
        %p575 = pneg %p388
        %p576 = pneg %p385
        %s577 = sand.u32 %s375, 1
        %s578 = scalar_lea.sflag [#allocation8], %s577
        %s579 = sand.u32 %s375, 1
        %s580 = scalar_lea.vmem [#allocation11], %s579
        %s581 = smul.u32 16, %s40
        %p582 = scmp.lt.s32.totalorder %s581, 31
        %s583 = scalar_select %p582, %s581, 31
        %s584 = smul.addr %s583, 4
        %s585 = scalar_lea.vmem %s0, %s584
        %s586 = smul.u32 16, %s40
        %p587 = scmp.lt.s32.totalorder %s41, 5
        %s588 = scalar_select %p587, %s41, 5
        %s589 = smul.addr %s588, 2
        %s590 = scalar_lea.vmem %s7, %s589
        %p591 = scmp.lt.s32.totalorder %s41, 5
        %s592 = scalar_select %p591, %s41, 5
        %s593 = smul.addr %s592, 2
        %s594 = scalar_lea.vmem %s9, %s593
        %v596 = vlaneseq
        %v597 = vshrl.u32 %v596, 7
        %v598 = vadd.s32 %v597, 8
        %v599 = vadd.s32 %v597, 16
        %v600 = vadd.s32 %v597, 24
        %v601 = vadd.s32 %v597, 32
        %v602 = vadd.s32 %v597, 40
        %v603 = vadd.s32 %v597, 48
        %v604 = vadd.s32 %v597, 56
        %v605 = vadd.s32 %v597, 64
        %v606 = vadd.s32 %v597, 72
        %v607 = vadd.s32 %v597, 80
        %v608 = vadd.s32 %v597, 88
        %v609 = vadd.s32 %v597, 96
        %v610 = vadd.s32 %v597, 104
        %v611 = vadd.s32 %v597, 112
        %v612 = vadd.s32 %v597, 120
        %p613 = scmp.eq.s32.totalorder %s41, 0
        // Predicated region
        $region85: #{wavenet_forward.1} parent=75 // pred_check
          %p614 = pneg %p613
        $region86: #{wavenet_forward.1} parent=75 // pred_check_branch
          %616 = sbr.rel (%p614) target = $region88
        $region87: #{wavenet_forward.1} parent=75 // pred_region
          %v617 = vld [vmem:[%s585] sm:$0xf]
          %v618 = vld [vmem:[%s585 + $0x4] sm:$0xf]
          %v619 = vld [vmem:[%s585 + $0x8] sm:$0xf]
          %v620 = vld [vmem:[%s585 + $0xc] sm:$0xf]
          %v621 = vld [vmem:[%s585 + $0x10] sm:$0xf]
          %v622 = vld [vmem:[%s585 + $0x14] sm:$0xf]
          %v623 = vld [vmem:[%s585 + $0x18] sm:$0xf]
          %v624 = vld [vmem:[%s585 + $0x1c] sm:$0xf]
          %v625 = vld [vmem:[%s585 + $0x20] sm:$0xf]
          %v626 = vld [vmem:[%s585 + $0x24] sm:$0xf]
          %v627 = vld [vmem:[%s585 + $0x28] sm:$0xf]
          %v628 = vld [vmem:[%s585 + $0x2c] sm:$0xf]
          %v629 = vld [vmem:[%s585 + $0x30] sm:$0xf]
          %v630 = vld [vmem:[%s585 + $0x34] sm:$0xf]
          %v631 = vld [vmem:[%s585 + $0x38] sm:$0xf]
          %v632 = vld [vmem:[%s585 + $0x3c] sm:$0xf]
          %v633 = vld [vmem:[%s1] sm:$0xf]
          %v634 = vld [vmem:[%s1 + $0x4] sm:$0xf]
          %v635 = vld [vmem:[%s1 + $0x8] sm:$0xf]
          %v636 = vld [vmem:[%s1 + $0xc] sm:$0xf]
          %v637 = vld [vmem:[%s1 + $0x10] sm:$0xf]
          %v638 = vld [vmem:[%s1 + $0x14] sm:$0xf]
          %v639 = vld [vmem:[%s1 + $0x18] sm:$0xf]
          %v640 = vld [vmem:[%s1 + $0x1c] sm:$0xf]
          %v641 = vld [vmem:[%s1 + $0x20] sm:$0xf]
          %v642 = vld [vmem:[%s2] sm:$0x1]
          %v644 = vlaneseq
          %v645 = vshrl.u32 %v644, 7
          %v646 = vsub.s32 0, %v645
          %v647 = vrot.slane %v642, %v646
          %v665 = vunpack.c.l.b16 %v617
          %v666 = vunpack.c.l.b16 %v618
          %v667 = vunpack.c.l.b16 %v619
          %v668 = vunpack.c.l.b16 %v620
          %v669 = vunpack.c.l.b16 %v621
          %v670 = vunpack.c.l.b16 %v622
          %v671 = vunpack.c.l.b16 %v623
          %v672 = vunpack.c.l.b16 %v624
          %v673 = vunpack.c.l.b16 %v625
          %v674 = vunpack.c.l.b16 %v626
          %v675 = vunpack.c.l.b16 %v627
          %v676 = vunpack.c.l.b16 %v628
          %v677 = vunpack.c.l.b16 %v629
          %v678 = vunpack.c.l.b16 %v630
          %v679 = vunpack.c.l.b16 %v631
          %v680 = vunpack.c.l.b16 %v632
          %v681 = vpack.c.b16 %v666, %v665
          %v682 = vpack.c.b16 %v668, %v667
          %v683 = vpack.c.b16 %v670, %v669
          %v684 = vpack.c.b16 %v672, %v671
          %v685 = vpack.c.b16 %v674, %v673
          %v686 = vpack.c.b16 %v676, %v675
          %v687 = vpack.c.b16 %v678, %v677
          %v688 = vpack.c.b16 %v680, %v679
          %v698 = vunpack.c.l.b16 %v633
          %v699 = vunpack.c.l.b16 %v634
          %v700 = vunpack.c.l.b16 %v635
          %v701 = vunpack.c.l.b16 %v636
          %v702 = vunpack.c.l.b16 %v637
          %v703 = vunpack.c.l.b16 %v638
          %v704 = vunpack.c.l.b16 %v639
          %v705 = vunpack.c.l.b16 %v640
          %v706 = vunpack.c.l.b16 %v641
          %v707 = vpack.c.b16 %v699, %v698
          %v708 = vpack.c.b16 %v701, %v700
          %v709 = vpack.c.b16 %v703, %v702
          %v710 = vpack.c.b16 %v705, %v704
          %v711 = vpack.c.b16 %v706, %v706
          %vm716 = vcmask 588800
          %v718 = vsel %vm716, %v681, 0
          %v721 = vsel %vm716, %v682, 0
          %v724 = vsel %vm716, %v683, 0
          %v727 = vsel %vm716, %v684, 0
          %v730 = vsel %vm716, %v685, 0
          %v733 = vsel %vm716, %v686, 0
          %v736 = vsel %vm716, %v687, 0
          %v739 = vsel %vm716, %v688, 0
          %vm741 = vcmask 1043456
          %v743 = vsel %vm741, %v711, 0
          %745 = vmatprep.subr.bf16.mxu0 0
          %746 = vmatpush1.bf16.msra.mxu0 %v707
          %747 = vmatprep.subr.bf16.mxu0 0
          %748 = vmatpush1.bf16.msra.mxu0 %v708
          %749 = vmatprep.subr.bf16.mxu0 0
          %750 = vmatpush1.bf16.msra.mxu0 %v709
          %751 = vmatprep.subr.bf16.mxu0 0
          %752 = vmatpush1.bf16.msra.mxu0 %v710
          %753 = vmatprep.subr.bf16.mxu0 0
          %754 = vmatpush1.bf16.msra.mxu0 %v743
          %755 = vmatprep.subr.bf16.mxu0 0
          %756 = vmatpush1.bf16.msra.mxu0 0
          %757 = vmatprep.subr.bf16.mxu0 0
          %758 = vmatpush1.bf16.msra.mxu0 0
          %759 = vmatprep.subr.bf16.mxu0 0
          %760 = vmatpush1.bf16.msra.mxu0 0
          %761 = vmatprep.subr.bf16.mxu0 0
          %762 = vmatpush1.bf16.msra.mxu0 0
          %763 = vmatprep.subr.bf16.mxu0 0
          %764 = vmatpush1.bf16.msra.mxu0 0
          %765 = vmatprep.subr.bf16.mxu0 0
          %766 = vmatpush1.bf16.msra.mxu0 0
          %767 = vmatprep.subr.bf16.mxu0 0
          %768 = vmatpush1.bf16.msra.mxu0 0
          %769 = vmatprep.subr.bf16.mxu0 0
          %770 = vmatpush1.bf16.msra.mxu0 0
          %771 = vmatprep.subr.bf16.mxu0 0
          %772 = vmatpush1.bf16.msra.mxu0 0
          %773 = vmatprep.subr.bf16.mxu0 0
          %774 = vmatpush1.bf16.msra.mxu0 0
          %775 = vmatprep.subr.bf16.mxu0 0
          %776 = vmatpush1.bf16.msra.mxu0 0
          %777 = vmatprep.mubr.bf16.mxu0 0
          %778 = vmatmul.mubr.bf16.gmra.mrb[0].mxu0 %v718
          %v779 = vpop.f32.mrb[0].mxu0
          %v780 = vadd.f32 %v647, %v779
          %v781 = vpop.f32.mrb[0].mxu0
          %v782 = vpop.f32.mrb[0].mxu0
          %v783 = vadd.f32 %v647, %v782
          %v784 = vpop.f32.mrb[0].mxu0
          %785 = vmatprep.mubr.bf16.mxu0 0
          %786 = vmatmul.mubr.bf16.gmra.mrb[0].mxu0 %v721
          %v787 = vpop.f32.mrb[0].mxu0
          %v788 = vadd.f32 %v647, %v787
          %v789 = vpop.f32.mrb[0].mxu0
          %v790 = vpop.f32.mrb[0].mxu0
          %v791 = vadd.f32 %v647, %v790
          %v792 = vpop.f32.mrb[0].mxu0
          %793 = vmatprep.mubr.bf16.mxu0 0
          %794 = vmatmul.mubr.bf16.gmra.mrb[0].mxu0 %v724
          %v795 = vpop.f32.mrb[0].mxu0
          %v796 = vadd.f32 %v647, %v795
          %v797 = vpop.f32.mrb[0].mxu0
          %v798 = vpop.f32.mrb[0].mxu0
          %v799 = vadd.f32 %v647, %v798
          %v800 = vpop.f32.mrb[0].mxu0
          %801 = vmatprep.mubr.bf16.mxu0 0
          %802 = vmatmul.mubr.bf16.gmra.mrb[0].mxu0 %v727
          %v803 = vpop.f32.mrb[0].mxu0
          %v804 = vadd.f32 %v647, %v803
          %v805 = vpop.f32.mrb[0].mxu0
          %v806 = vpop.f32.mrb[0].mxu0
          %v807 = vadd.f32 %v647, %v806
          %v808 = vpop.f32.mrb[0].mxu0
          %809 = vmatprep.mubr.bf16.mxu0 0
          %810 = vmatmul.mubr.bf16.gmra.mrb[0].mxu0 %v730
          %v811 = vpop.f32.mrb[0].mxu0
          %v812 = vadd.f32 %v647, %v811
          %v813 = vpop.f32.mrb[0].mxu0
          %v814 = vpop.f32.mrb[0].mxu0
          %v815 = vadd.f32 %v647, %v814
          %v816 = vpop.f32.mrb[0].mxu0
          %817 = vmatprep.mubr.bf16.mxu0 0
          %818 = vmatmul.mubr.bf16.gmra.mrb[0].mxu0 %v733
          %v819 = vpop.f32.mrb[0].mxu0
          %v820 = vadd.f32 %v647, %v819
          %v821 = vpop.f32.mrb[0].mxu0
          %v822 = vpop.f32.mrb[0].mxu0
          %v823 = vadd.f32 %v647, %v822
          %v824 = vpop.f32.mrb[0].mxu0
          %825 = vmatprep.mubr.bf16.mxu0 0
          %826 = vmatmul.mubr.bf16.gmra.mrb[0].mxu0 %v736
          %v827 = vpop.f32.mrb[0].mxu0
          %v828 = vadd.f32 %v647, %v827
          %v829 = vpop.f32.mrb[0].mxu0
          %v830 = vpop.f32.mrb[0].mxu0
          %v831 = vadd.f32 %v647, %v830
          %v832 = vpop.f32.mrb[0].mxu0
          %833 = vmatprep.mubr.bf16.mxu0 0
          %834 = vmatmul.mubr.bf16.gmra.mrb[0].mxu0 %v739
          %v835 = vpop.f32.mrb[0].mxu0
          %v836 = vadd.f32 %v647, %v835
          %v837 = vpop.f32.mrb[0].mxu0
          %v838 = vpop.f32.mrb[0].mxu0
          %v839 = vadd.f32 %v647, %v838
          %v840 = vpop.f32.mrb[0].mxu0
          %841 = vdwg.mxu0
          %vm842 = vcmp.lt.s32.totalorder %v597, 1
          %vm843 = vcmp.lt.s32.totalorder %v598, 1
          %vm844 = vcmp.lt.s32.totalorder %v599, 1
          %vm845 = vcmp.lt.s32.totalorder %v600, 1
          %vm846 = vcmp.lt.s32.totalorder %v601, 1
          %vm847 = vcmp.lt.s32.totalorder %v602, 1
          %vm848 = vcmp.lt.s32.totalorder %v603, 1
          %vm849 = vcmp.lt.s32.totalorder %v604, 1
          %vm850 = vcmp.lt.s32.totalorder %v605, 1
          %vm851 = vcmp.lt.s32.totalorder %v606, 1
          %vm852 = vcmp.lt.s32.totalorder %v607, 1
          %vm853 = vcmp.lt.s32.totalorder %v608, 1
          %vm854 = vcmp.lt.s32.totalorder %v609, 1
          %vm855 = vcmp.lt.s32.totalorder %v610, 1
          %vm856 = vcmp.lt.s32.totalorder %v611, 1
          %vm857 = vcmp.lt.s32.totalorder %v612, 1
          %v858 = vrot.slane %v780, 7
          %v859 = vrot.slane %v783, 7
          %v860 = vrot.slane %v788, 7
          %v861 = vrot.slane %v791, 7
          %v862 = vrot.slane %v796, 7
          %v863 = vrot.slane %v799, 7
          %v864 = vrot.slane %v804, 7
          %v865 = vrot.slane %v807, 7
          %v866 = vrot.slane %v812, 7
          %v867 = vrot.slane %v815, 7
          %v868 = vrot.slane %v820, 7
          %v869 = vrot.slane %v823, 7
          %v870 = vrot.slane %v828, 7
          %v871 = vrot.slane %v831, 7
          %v872 = vrot.slane %v836, 7
          %v873 = vrot.slane %v839, 7
          %v874 = vsel %vm842, %v872, %v873
          %v875 = vsel %vm842, %v871, %v872
          %v876 = vsel %vm842, %v870, %v871
          %v877 = vsel %vm842, %v869, %v870
          %v878 = vsel %vm842, %v868, %v869
          %v879 = vsel %vm842, %v867, %v868
          %v880 = vsel %vm842, %v866, %v867
          %v881 = vsel %vm842, %v865, %v866
          %v882 = vsel %vm842, %v864, %v865
          %v883 = vsel %vm842, %v863, %v864
          %v884 = vsel %vm842, %v862, %v863
          %v885 = vsel %vm842, %v861, %v862
          %v886 = vsel %vm842, %v860, %v861
          %v887 = vsel %vm842, %v859, %v860
          %v888 = vsel %vm842, %v858, %v859
          %v889 = vsel %vm842, %v873, %v858
          %v890 = vsel %vm842, 1, 0
          %v891 = vsel %vm843, 1, 0
          %v892 = vsel %vm844, 1, 0
          %v893 = vsel %vm845, 1, 0
          %v894 = vsel %vm846, 1, 0
          %v895 = vsel %vm847, 1, 0
          %v896 = vsel %vm848, 1, 0
          %v897 = vsel %vm849, 1, 0
          %v898 = vsel %vm850, 1, 0
          %v899 = vsel %vm851, 1, 0
          %v900 = vsel %vm852, 1, 0
          %v901 = vsel %vm853, 1, 0
          %v902 = vsel %vm854, 1, 0
          %v903 = vsel %vm855, 1, 0
          %v904 = vsel %vm856, 1, 0
          %v905 = vsel %vm857, 1, 0
          %vm906 = vcmp.eq.s32.totalorder %v890, 1
          %vm907 = vcmp.eq.s32.totalorder %v891, 1
          %vm908 = vcmp.eq.s32.totalorder %v892, 1
          %vm909 = vcmp.eq.s32.totalorder %v893, 1
          %vm910 = vcmp.eq.s32.totalorder %v894, 1
          %vm911 = vcmp.eq.s32.totalorder %v895, 1
          %vm912 = vcmp.eq.s32.totalorder %v896, 1
          %vm913 = vcmp.eq.s32.totalorder %v897, 1
          %vm914 = vcmp.eq.s32.totalorder %v898, 1
          %vm915 = vcmp.eq.s32.totalorder %v899, 1
          %vm916 = vcmp.eq.s32.totalorder %v900, 1
          %vm917 = vcmp.eq.s32.totalorder %v901, 1
          %vm918 = vcmp.eq.s32.totalorder %v902, 1
          %vm919 = vcmp.eq.s32.totalorder %v903, 1
          %vm920 = vcmp.eq.s32.totalorder %v904, 1
          %vm921 = vcmp.eq.s32.totalorder %v905, 1
          %v922 = vsel %vm906, 0.0, %v889
          %v923 = vsel %vm907, 0.0, %v888
          %v924 = vsel %vm908, 0.0, %v887
          %v925 = vsel %vm909, 0.0, %v886
          %v926 = vsel %vm910, 0.0, %v885
          %v927 = vsel %vm911, 0.0, %v884
          %v928 = vsel %vm912, 0.0, %v883
          %v929 = vsel %vm913, 0.0, %v882
          %v930 = vsel %vm914, 0.0, %v881
          %v931 = vsel %vm915, 0.0, %v880
          %v932 = vsel %vm916, 0.0, %v879
          %v933 = vsel %vm917, 0.0, %v878
          %v934 = vsel %vm918, 0.0, %v877
          %v935 = vsel %vm919, 0.0, %v876
          %v936 = vsel %vm920, 0.0, %v875
          %v937 = vsel %vm921, 0.0, %v874
          %v938 = vpack.c.bf16 %v923, %v922
          %v939 = vpack.c.bf16 %v925, %v924
          %v940 = vpack.c.bf16 %v927, %v926
          %v941 = vpack.c.bf16 %v929, %v928
          %v942 = vpack.c.bf16 %v931, %v930
          %v943 = vpack.c.bf16 %v933, %v932
          %v944 = vpack.c.bf16 %v935, %v934
          %v945 = vpack.c.bf16 %v937, %v936
          %v946 = vld [vmem:[%s3] sm:$0xf]
          %v947 = vld [vmem:[%s3 + $0x4] sm:$0xf]
          %v948 = vld [vmem:[%s3 + $0x8] sm:$0xf]
          %v949 = vld [vmem:[%s3 + $0xc] sm:$0xf]
          %v950 = vpack.c.bf16 %v783, %v780
          %v951 = vpack.c.bf16 %v791, %v788
          %v952 = vpack.c.bf16 %v799, %v796
          %v953 = vpack.c.bf16 %v807, %v804
          %v954 = vpack.c.bf16 %v815, %v812
          %v955 = vpack.c.bf16 %v823, %v820
          %v956 = vpack.c.bf16 %v831, %v828
          %v957 = vpack.c.bf16 %v839, %v836
          %v958 = vld [vmem:[%s4] sm:$0xf]
          %v959 = vld [vmem:[%s4 + $0x4] sm:$0xf]
          %v960 = vld [vmem:[%s4 + $0x8] sm:$0xf]
          %v961 = vld [vmem:[%s4 + $0xc] sm:$0xf]
          %v966 = vunpack.c.l.b16 %v958
          %v967 = vunpack.c.l.b16 %v959
          %v968 = vunpack.c.l.b16 %v960
          %v969 = vunpack.c.l.b16 %v961
          %v970 = vpack.c.b16 %v967, %v966
          %v971 = vpack.c.b16 %v969, %v968
          %vm974 = vcmask 261120
          %v976 = vsel %vm974, %v950, 0
          %v979 = vsel %vm974, %v951, 0
          %v982 = vsel %vm974, %v952, 0
          %v985 = vsel %vm974, %v953, 0
          %v988 = vsel %vm974, %v954, 0
          %v991 = vsel %vm974, %v955, 0
          %v994 = vsel %vm974, %v956, 0
          %v997 = vsel %vm974, %v957, 0
          %999 = vmatprep.subr.bf16.mxu0 0
          %1000 = vmatpush1.bf16.msra.mxu0 %v970
          %1001 = vmatprep.subr.bf16.mxu0 0
          %1002 = vmatpush1.bf16.msra.mxu0 %v971
          %1003 = vmatprep.subr.bf16.mxu0 0
          %1004 = vmatpush1.bf16.msra.mxu0 0
          %1005 = vmatprep.subr.bf16.mxu0 0
          %1006 = vmatpush1.bf16.msra.mxu0 0
          %1007 = vmatprep.subr.bf16.mxu0 0
          %1008 = vmatpush1.bf16.msra.mxu0 0
          %1009 = vmatprep.subr.bf16.mxu0 0
          %1010 = vmatpush1.bf16.msra.mxu0 0
          %1011 = vmatprep.subr.bf16.mxu0 0
          %1012 = vmatpush1.bf16.msra.mxu0 0
          %1013 = vmatprep.subr.bf16.mxu0 0
          %1014 = vmatpush1.bf16.msra.mxu0 0
          %1015 = vmatprep.subr.bf16.mxu0 0
          %1016 = vmatpush1.bf16.msra.mxu0 0
          %1017 = vmatprep.subr.bf16.mxu0 0
          %1018 = vmatpush1.bf16.msra.mxu0 0
          %1019 = vmatprep.subr.bf16.mxu0 0
          %1020 = vmatpush1.bf16.msra.mxu0 0
          %1021 = vmatprep.subr.bf16.mxu0 0
          %1022 = vmatpush1.bf16.msra.mxu0 0
          %1023 = vmatprep.subr.bf16.mxu0 0
          %1024 = vmatpush1.bf16.msra.mxu0 0
          %1025 = vmatprep.subr.bf16.mxu0 0
          %1026 = vmatpush1.bf16.msra.mxu0 0
          %1027 = vmatprep.subr.bf16.mxu0 0
          %1028 = vmatpush1.bf16.msra.mxu0 0
          %1029 = vmatprep.subr.bf16.mxu0 0
          %1030 = vmatpush1.bf16.msra.mxu0 0
          %1031 = vmatprep.mubr.bf16.mxu0 0
          %1032 = vmatmul.mubr.bf16.gmra.mrb[0].mxu0 %v976
          %v1033 = vpop.f32.mrb[0].mxu0
          %v1034 = vadd.f32 0.0, %v1033
          %v1035 = vpop.f32.mrb[0].mxu0
          %v1036 = vpop.f32.mrb[0].mxu0
          %v1037 = vadd.f32 0.0, %v1036
          %v1038 = vpop.f32.mrb[0].mxu0
          %1039 = vmatprep.mubr.bf16.mxu0 0
          %1040 = vmatmul.mubr.bf16.gmra.mrb[0].mxu0 %v979
          %v1041 = vpop.f32.mrb[0].mxu0
          %v1042 = vadd.f32 0.0, %v1041
          %v1043 = vpop.f32.mrb[0].mxu0
          %v1044 = vpop.f32.mrb[0].mxu0
          %v1045 = vadd.f32 0.0, %v1044
          %v1046 = vpop.f32.mrb[0].mxu0
          %1047 = vmatprep.mubr.bf16.mxu0 0
          %1048 = vmatmul.mubr.bf16.gmra.mrb[0].mxu0 %v982
          %v1049 = vpop.f32.mrb[0].mxu0
          %v1050 = vadd.f32 0.0, %v1049
          %v1051 = vpop.f32.mrb[0].mxu0
          %v1052 = vpop.f32.mrb[0].mxu0
          %v1053 = vadd.f32 0.0, %v1052
          %v1054 = vpop.f32.mrb[0].mxu0
          %1055 = vmatprep.mubr.bf16.mxu0 0
          %1056 = vmatmul.mubr.bf16.gmra.mrb[0].mxu0 %v985
          %v1057 = vpop.f32.mrb[0].mxu0
          %v1058 = vadd.f32 0.0, %v1057
          %v1059 = vpop.f32.mrb[0].mxu0
          %v1060 = vpop.f32.mrb[0].mxu0
          %v1061 = vadd.f32 0.0, %v1060
          %v1062 = vpop.f32.mrb[0].mxu0
          %1063 = vmatprep.mubr.bf16.mxu0 0
          %1064 = vmatmul.mubr.bf16.gmra.mrb[0].mxu0 %v988
          %v1065 = vpop.f32.mrb[0].mxu0
          %v1066 = vadd.f32 0.0, %v1065
          %v1067 = vpop.f32.mrb[0].mxu0
          %v1068 = vpop.f32.mrb[0].mxu0
          %v1069 = vadd.f32 0.0, %v1068
          %v1070 = vpop.f32.mrb[0].mxu0
          %1071 = vmatprep.mubr.bf16.mxu0 0
          %1072 = vmatmul.mubr.bf16.gmra.mrb[0].mxu0 %v991
          %v1073 = vpop.f32.mrb[0].mxu0
          %v1074 = vadd.f32 0.0, %v1073
          %v1075 = vpop.f32.mrb[0].mxu0
          %v1076 = vpop.f32.mrb[0].mxu0
          %v1077 = vadd.f32 0.0, %v1076
          %v1078 = vpop.f32.mrb[0].mxu0
          %1079 = vmatprep.mubr.bf16.mxu0 0
          %1080 = vmatmul.mubr.bf16.gmra.mrb[0].mxu0 %v994
          %v1081 = vpop.f32.mrb[0].mxu0
          %v1082 = vadd.f32 0.0, %v1081
          %v1083 = vpop.f32.mrb[0].mxu0
          %v1084 = vpop.f32.mrb[0].mxu0
          %v1085 = vadd.f32 0.0, %v1084
          %v1086 = vpop.f32.mrb[0].mxu0
          %1087 = vmatprep.mubr.bf16.mxu0 0
          %1088 = vmatmul.mubr.bf16.gmra.mrb[0].mxu0 %v997
          %v1089 = vpop.f32.mrb[0].mxu0
          %v1090 = vadd.f32 0.0, %v1089
          %v1091 = vpop.f32.mrb[0].mxu0
          %v1092 = vpop.f32.mrb[0].mxu0
          %v1093 = vadd.f32 0.0, %v1092
          %v1094 = vpop.f32.mrb[0].mxu0
          %1095 = vdwg.mxu0
          %v1100 = vunpack.c.l.b16 %v946
          %v1101 = vunpack.c.l.b16 %v947
          %v1102 = vunpack.c.l.b16 %v948
          %v1103 = vunpack.c.l.b16 %v949
          %v1104 = vpack.c.b16 %v1101, %v1100
          %v1105 = vpack.c.b16 %v1103, %v1102
          %v1109 = vsel %vm974, %v938, 0
          %v1112 = vsel %vm974, %v939, 0
          %v1115 = vsel %vm974, %v940, 0
          %v1118 = vsel %vm974, %v941, 0
          %v1121 = vsel %vm974, %v942, 0
          %v1124 = vsel %vm974, %v943, 0
          %v1127 = vsel %vm974, %v944, 0
          %v1130 = vsel %vm974, %v945, 0
          %1132 = vmatprep.subr.bf16.mxu0 0
          %1133 = vmatpush1.bf16.msra.mxu0 %v1104
          %1134 = vmatprep.subr.bf16.mxu0 0
          %1135 = vmatpush1.bf16.msra.mxu0 %v1105
          %1136 = vmatprep.subr.bf16.mxu0 0
          %1137 = vmatpush1.bf16.msra.mxu0 0
          %1138 = vmatprep.subr.bf16.mxu0 0
          %1139 = vmatpush1.bf16.msra.mxu0 0
          %1140 = vmatprep.subr.bf16.mxu0 0
          %1141 = vmatpush1.bf16.msra.mxu0 0
          %1142 = vmatprep.subr.bf16.mxu0 0
          %1143 = vmatpush1.bf16.msra.mxu0 0
          %1144 = vmatprep.subr.bf16.mxu0 0
          %1145 = vmatpush1.bf16.msra.mxu0 0
          %1146 = vmatprep.subr.bf16.mxu0 0
          %1147 = vmatpush1.bf16.msra.mxu0 0
          %1148 = vmatprep.subr.bf16.mxu0 0
          %1149 = vmatpush1.bf16.msra.mxu0 0
          %1150 = vmatprep.subr.bf16.mxu0 0
          %1151 = vmatpush1.bf16.msra.mxu0 0
          %1152 = vmatprep.subr.bf16.mxu0 0
          %1153 = vmatpush1.bf16.msra.mxu0 0
          %1154 = vmatprep.subr.bf16.mxu0 0
          %1155 = vmatpush1.bf16.msra.mxu0 0
          %1156 = vmatprep.subr.bf16.mxu0 0
          %1157 = vmatpush1.bf16.msra.mxu0 0
          %1158 = vmatprep.subr.bf16.mxu0 0
          %1159 = vmatpush1.bf16.msra.mxu0 0
          %1160 = vmatprep.subr.bf16.mxu0 0
          %1161 = vmatpush1.bf16.msra.mxu0 0
          %1162 = vmatprep.subr.bf16.mxu0 0
          %1163 = vmatpush1.bf16.msra.mxu0 0
          %1164 = vmatprep.mubr.bf16.mxu0 0
          %1165 = vmatmul.mubr.bf16.gmra.mrb[0].mxu0 %v1109
          %v1166 = vpop.f32.mrb[0].mxu0
          %v1167 = vadd.f32 %v1034, %v1166
          %v1168 = vpop.f32.mrb[0].mxu0
          %v1169 = vpop.f32.mrb[0].mxu0
          %v1170 = vadd.f32 %v1037, %v1169
          %v1171 = vpop.f32.mrb[0].mxu0
          %1172 = vmatprep.mubr.bf16.mxu0 0
          %1173 = vmatmul.mubr.bf16.gmra.mrb[0].mxu0 %v1112
          %v1174 = vpop.f32.mrb[0].mxu0
          %v1175 = vadd.f32 %v1042, %v1174
          %v1176 = vpop.f32.mrb[0].mxu0
          %v1177 = vpop.f32.mrb[0].mxu0
          %v1178 = vadd.f32 %v1045, %v1177
          %v1179 = vpop.f32.mrb[0].mxu0
          %1180 = vmatprep.mubr.bf16.mxu0 0
          %1181 = vmatmul.mubr.bf16.gmra.mrb[0].mxu0 %v1115
          %v1182 = vpop.f32.mrb[0].mxu0
          %v1183 = vadd.f32 %v1050, %v1182
          %v1184 = vpop.f32.mrb[0].mxu0
          %v1185 = vpop.f32.mrb[0].mxu0
          %v1186 = vadd.f32 %v1053, %v1185
          %v1187 = vpop.f32.mrb[0].mxu0
          %1188 = vmatprep.mubr.bf16.mxu0 0
          %1189 = vmatmul.mubr.bf16.gmra.mrb[0].mxu0 %v1118
          %v1190 = vpop.f32.mrb[0].mxu0
          %v1191 = vadd.f32 %v1058, %v1190
          %v1192 = vpop.f32.mrb[0].mxu0
          %v1193 = vpop.f32.mrb[0].mxu0
          %v1194 = vadd.f32 %v1061, %v1193
          %v1195 = vpop.f32.mrb[0].mxu0
          %1196 = vmatprep.mubr.bf16.mxu0 0
          %1197 = vmatmul.mubr.bf16.gmra.mrb[0].mxu0 %v1121
          %v1198 = vpop.f32.mrb[0].mxu0
          %v1199 = vadd.f32 %v1066, %v1198
          %v1200 = vpop.f32.mrb[0].mxu0
          %v1201 = vpop.f32.mrb[0].mxu0
          %v1202 = vadd.f32 %v1069, %v1201
          %v1203 = vpop.f32.mrb[0].mxu0
          %1204 = vmatprep.mubr.bf16.mxu0 0
          %1205 = vmatmul.mubr.bf16.gmra.mrb[0].mxu0 %v1124
          %v1206 = vpop.f32.mrb[0].mxu0
          %v1207 = vadd.f32 %v1074, %v1206
          %v1208 = vpop.f32.mrb[0].mxu0
          %v1209 = vpop.f32.mrb[0].mxu0
          %v1210 = vadd.f32 %v1077, %v1209
          %v1211 = vpop.f32.mrb[0].mxu0
          %1212 = vmatprep.mubr.bf16.mxu0 0
          %1213 = vmatmul.mubr.bf16.gmra.mrb[0].mxu0 %v1127
          %v1214 = vpop.f32.mrb[0].mxu0
          %v1215 = vadd.f32 %v1082, %v1214
          %v1216 = vpop.f32.mrb[0].mxu0
          %v1217 = vpop.f32.mrb[0].mxu0
          %v1218 = vadd.f32 %v1085, %v1217
          %v1219 = vpop.f32.mrb[0].mxu0
          %1220 = vmatprep.mubr.bf16.mxu0 0
          %1221 = vmatmul.mubr.bf16.gmra.mrb[0].mxu0 %v1130
          %v1222 = vpop.f32.mrb[0].mxu0
          %v1223 = vadd.f32 %v1090, %v1222
          %v1224 = vpop.f32.mrb[0].mxu0
          %v1225 = vpop.f32.mrb[0].mxu0
          %v1226 = vadd.f32 %v1093, %v1225
          %v1227 = vpop.f32.mrb[0].mxu0
          %1228 = vdwg.mxu0
          %v1229 = vld [vmem:[%s5] sm:$0x1]
          %v1231 = vlaneseq
          %v1232 = vshrl.u32 %v1231, 7
          %v1233 = vsub.s32 0, %v1232
          %v1234 = vrot.slane %v1229, %v1233
          %v1236 = vadd.f32 %v1167, %v1234
          %v1237 = vadd.f32 %v1170, %v1234
          %v1238 = vadd.f32 %v1175, %v1234
          %v1239 = vadd.f32 %v1178, %v1234
          %v1240 = vadd.f32 %v1183, %v1234
          %v1241 = vadd.f32 %v1186, %v1234
          %v1242 = vadd.f32 %v1191, %v1234
          %v1243 = vadd.f32 %v1194, %v1234
          %v1244 = vadd.f32 %v1199, %v1234
          %v1245 = vadd.f32 %v1202, %v1234
          %v1246 = vadd.f32 %v1207, %v1234
          %v1247 = vadd.f32 %v1210, %v1234
          %v1248 = vadd.f32 %v1215, %v1234
          %v1249 = vadd.f32 %v1218, %v1234
          %v1250 = vadd.f32 %v1223, %v1234
          %v1251 = vadd.f32 %v1226, %v1234
          %1252 = vst [vmem:[#allocation2] sm:$0xff] %v1236
          %1253 = vst [vmem:[#allocation2 + $0x8] sm:$0xff] %v1237
          %1254 = vst [vmem:[#allocation2 + $0x10] sm:$0xff] %v1238
          %1255 = vst [vmem:[#allocation2 + $0x18] sm:$0xff] %v1239
          %1256 = vst [vmem:[#allocation2 + $0x20] sm:$0xff] %v1240
          %1257 = vst [vmem:[#allocation2 + $0x28] sm:$0xff] %v1241
          %1258 = vst [vmem:[#allocation2 + $0x30] sm:$0xff] %v1242
          %1259 = vst [vmem:[#allocation2 + $0x38] sm:$0xff] %v1243
          %1260 = vst [vmem:[#allocation2 + $0x40] sm:$0xff] %v1244
          %1261 = vst [vmem:[#allocation2 + $0x48] sm:$0xff] %v1245
          %1262 = vst [vmem:[#allocation2 + $0x50] sm:$0xff] %v1246
          %1263 = vst [vmem:[#allocation2 + $0x58] sm:$0xff] %v1247
          %1264 = vst [vmem:[#allocation2 + $0x60] sm:$0xff] %v1248
          %1265 = vst [vmem:[#allocation2 + $0x68] sm:$0xff] %v1249
          %1266 = vst [vmem:[#allocation2 + $0x70] sm:$0xff] %v1250
          %1267 = vst [vmem:[#allocation2 + $0x78] sm:$0xff] %v1251
          %v1268 = vpack.c.bf16 %v1237, %v1236
          %v1269 = vpack.c.bf16 %v1239, %v1238
          %v1270 = vpack.c.bf16 %v1241, %v1240
          %v1271 = vpack.c.bf16 %v1243, %v1242
          %v1272 = vpack.c.bf16 %v1245, %v1244
          %v1273 = vpack.c.bf16 %v1247, %v1246
          %v1274 = vpack.c.bf16 %v1249, %v1248
          %v1275 = vpack.c.bf16 %v1251, %v1250
          %1276 = vst [vmem:[#allocation4 + $0x8] sm:$0xff] %v1268
          %1277 = vst [vmem:[#allocation4 + $0x18] sm:$0xff] %v1269
          %1278 = vst [vmem:[#allocation4 + $0x28] sm:$0xff] %v1270
          %1279 = vst [vmem:[#allocation4 + $0x38] sm:$0xff] %v1271
          %1280 = vst [vmem:[#allocation4 + $0x48] sm:$0xff] %v1272
          %1281 = vst [vmem:[#allocation4 + $0x58] sm:$0xff] %v1273
          %1282 = vst [vmem:[#allocation4 + $0x68] sm:$0xff] %v1274
          %1283 = vst [vmem:[#allocation4 + $0x78] sm:$0xff] %v1275
          %1284 = vst [vmem:[#allocation3] sm:$0xff] 0.0
          %1285 = vst [vmem:[#allocation3 + $0x8] sm:$0xff] 0.0
          %1286 = vst [vmem:[#allocation3 + $0x10] sm:$0xff] 0.0
          %1287 = vst [vmem:[#allocation3 + $0x18] sm:$0xff] 0.0
          %1288 = vst [vmem:[#allocation3 + $0x20] sm:$0xff] 0.0
          %1289 = vst [vmem:[#allocation3 + $0x28] sm:$0xff] 0.0
          %1290 = vst [vmem:[#allocation3 + $0x30] sm:$0xff] 0.0
          %1291 = vst [vmem:[#allocation3 + $0x38] sm:$0xff] 0.0
          %1292 = vst [vmem:[#allocation3 + $0x40] sm:$0xff] 0.0
          %1293 = vst [vmem:[#allocation3 + $0x48] sm:$0xff] 0.0
          %1294 = vst [vmem:[#allocation3 + $0x50] sm:$0xff] 0.0
          %1295 = vst [vmem:[#allocation3 + $0x58] sm:$0xff] 0.0
          %1296 = vst [vmem:[#allocation3 + $0x60] sm:$0xff] 0.0
          %1297 = vst [vmem:[#allocation3 + $0x68] sm:$0xff] 0.0
          %1298 = vst [vmem:[#allocation3 + $0x70] sm:$0xff] 0.0
          %1299 = vst [vmem:[#allocation3 + $0x78] sm:$0xff] 0.0
        $region88: #{wavenet_forward.1} parent=75 // pred_fallthru
          _
        %v1300 = vld [vmem:[#allocation2] sm:$0xff]
        %v1301 = vld [vmem:[#allocation2 + $0x8] sm:$0xff]
        %v1302 = vld [vmem:[#allocation2 + $0x10] sm:$0xff]
        %v1303 = vld [vmem:[#allocation2 + $0x18] sm:$0xff]
        %v1304 = vld [vmem:[#allocation2 + $0x20] sm:$0xff]
        %v1305 = vld [vmem:[#allocation2 + $0x28] sm:$0xff]
        %v1306 = vld [vmem:[#allocation2 + $0x30] sm:$0xff]
        %v1307 = vld [vmem:[#allocation2 + $0x38] sm:$0xff]
        %v1308 = vld [vmem:[#allocation2 + $0x40] sm:$0xff]
        %v1309 = vld [vmem:[#allocation2 + $0x48] sm:$0xff]
        %v1310 = vld [vmem:[#allocation2 + $0x50] sm:$0xff]
        %v1311 = vld [vmem:[#allocation2 + $0x58] sm:$0xff]
        %v1312 = vld [vmem:[#allocation2 + $0x60] sm:$0xff]
        %v1313 = vld [vmem:[#allocation2 + $0x68] sm:$0xff]
        %v1314 = vld [vmem:[#allocation2 + $0x70] sm:$0xff]
        %v1315 = vld [vmem:[#allocation2 + $0x78] sm:$0xff]
        %p1316 = scmp.lt.s32.totalorder %s41, 0
        %s1317 = ssub.s32 0, %s41
        %s1318 = scalar_select %p1316, %s1317, %s41
        %s1319 = sdiv.u32.pop %s1318, 3
        %s1320 = srem.u32.pop %s1318, 3
        %s1321 = ssub.s32 0, %s1320
        %s1322 = scalar_select %p1316, %s1321, %s1320
        %p1323 = scmp.ne.s32.totalorder %s1322, 0
        %p1324 = scmp.lt.s32.totalorder %s1322, 0
        %p1325 = pnand %p1324, %p1323
        %p1326 = pneg %p1325
        %s1327 = sadd.s32 %s1322, 3
        %s1328 = scalar_select %p1326, %s1327, %s1322
        %p1329 = scmp.eq.s32.totalorder %s1328, 0
        // Predicated region
        $region89: #{wavenet_forward.1} parent=75 // pred_check
          %p1330 = pneg %p1329
        $region90: #{wavenet_forward.1} parent=75 // pred_check_branch
          %1332 = sbr.rel (%p1330) target = $region92
        $region91: #{wavenet_forward.1} parent=75 // pred_region
          %v1333 = vrot.slane %v1300, 7
          %v1334 = vrot.slane %v1301, 7
          %v1335 = vrot.slane %v1302, 7
          %v1336 = vrot.slane %v1303, 7
          %v1337 = vrot.slane %v1304, 7
          %v1338 = vrot.slane %v1305, 7
          %v1339 = vrot.slane %v1306, 7
          %v1340 = vrot.slane %v1307, 7
          %v1341 = vrot.slane %v1308, 7
          %v1342 = vrot.slane %v1309, 7
          %v1343 = vrot.slane %v1310, 7
          %v1344 = vrot.slane %v1311, 7
          %v1345 = vrot.slane %v1312, 7
          %v1346 = vrot.slane %v1313, 7
          %v1347 = vrot.slane %v1314, 7
          %v1348 = vrot.slane %v1315, 7
          %vm1349 = vcmp.lt.s32.totalorder %v597, 1
          %v1350 = vsel %vm1349, %v1347, %v1348
          %v1351 = vsel %vm1349, %v1346, %v1347
          %v1352 = vsel %vm1349, %v1345, %v1346
          %v1353 = vsel %vm1349, %v1344, %v1345
          %v1354 = vsel %vm1349, %v1343, %v1344
          %v1355 = vsel %vm1349, %v1342, %v1343
          %v1356 = vsel %vm1349, %v1341, %v1342
          %v1357 = vsel %vm1349, %v1340, %v1341
          %v1358 = vsel %vm1349, %v1339, %v1340
          %v1359 = vsel %vm1349, %v1338, %v1339
          %v1360 = vsel %vm1349, %v1337, %v1338
          %v1361 = vsel %vm1349, %v1336, %v1337
          %v1362 = vsel %vm1349, %v1335, %v1336
          %v1363 = vsel %vm1349, %v1334, %v1335
          %v1364 = vsel %vm1349, %v1333, %v1334
          %v1365 = vsel %vm1349, %v1348, %v1333
          %vm1366 = vcmp.lt.s32.totalorder %v598, 1
          %vm1367 = vcmp.lt.s32.totalorder %v599, 1
          %vm1368 = vcmp.lt.s32.totalorder %v600, 1
          %vm1369 = vcmp.lt.s32.totalorder %v601, 1
          %vm1370 = vcmp.lt.s32.totalorder %v602, 1
          %vm1371 = vcmp.lt.s32.totalorder %v603, 1
          %vm1372 = vcmp.lt.s32.totalorder %v604, 1
          %vm1373 = vcmp.lt.s32.totalorder %v605, 1
          %vm1374 = vcmp.lt.s32.totalorder %v606, 1
          %vm1375 = vcmp.lt.s32.totalorder %v607, 1
          %vm1376 = vcmp.lt.s32.totalorder %v608, 1
          %vm1377 = vcmp.lt.s32.totalorder %v609, 1
          %vm1378 = vcmp.lt.s32.totalorder %v610, 1
          %vm1379 = vcmp.lt.s32.totalorder %v611, 1
          %vm1380 = vcmp.lt.s32.totalorder %v612, 1
          %v1381 = vsel %vm1349, 1, 0
          %v1382 = vsel %vm1366, 1, 0
          %v1383 = vsel %vm1367, 1, 0
          %v1384 = vsel %vm1368, 1, 0
          %v1385 = vsel %vm1369, 1, 0
          %v1386 = vsel %vm1370, 1, 0
          %v1387 = vsel %vm1371, 1, 0
          %v1388 = vsel %vm1372, 1, 0
          %v1389 = vsel %vm1373, 1, 0
          %v1390 = vsel %vm1374, 1, 0
          %v1391 = vsel %vm1375, 1, 0
          %v1392 = vsel %vm1376, 1, 0
          %v1393 = vsel %vm1377, 1, 0
          %v1394 = vsel %vm1378, 1, 0
          %v1395 = vsel %vm1379, 1, 0
          %v1396 = vsel %vm1380, 1, 0
          %vm1397 = vcmp.eq.s32.totalorder %v1381, 1
          %vm1398 = vcmp.eq.s32.totalorder %v1382, 1
          %vm1399 = vcmp.eq.s32.totalorder %v1383, 1
          %vm1400 = vcmp.eq.s32.totalorder %v1384, 1
          %vm1401 = vcmp.eq.s32.totalorder %v1385, 1
          %vm1402 = vcmp.eq.s32.totalorder %v1386, 1
          %vm1403 = vcmp.eq.s32.totalorder %v1387, 1
          %vm1404 = vcmp.eq.s32.totalorder %v1388, 1
          %vm1405 = vcmp.eq.s32.totalorder %v1389, 1
          %vm1406 = vcmp.eq.s32.totalorder %v1390, 1
          %vm1407 = vcmp.eq.s32.totalorder %v1391, 1
          %vm1408 = vcmp.eq.s32.totalorder %v1392, 1
          %vm1409 = vcmp.eq.s32.totalorder %v1393, 1
          %vm1410 = vcmp.eq.s32.totalorder %v1394, 1
          %vm1411 = vcmp.eq.s32.totalorder %v1395, 1
          %vm1412 = vcmp.eq.s32.totalorder %v1396, 1
          %v1413 = vsel %vm1397, 0.0, %v1365
          %v1414 = vsel %vm1398, 0.0, %v1364
          %v1415 = vsel %vm1399, 0.0, %v1363
          %v1416 = vsel %vm1400, 0.0, %v1362
          %v1417 = vsel %vm1401, 0.0, %v1361
          %v1418 = vsel %vm1402, 0.0, %v1360
          %v1419 = vsel %vm1403, 0.0, %v1359
          %v1420 = vsel %vm1404, 0.0, %v1358
          %v1421 = vsel %vm1405, 0.0, %v1357
          %v1422 = vsel %vm1406, 0.0, %v1356
          %v1423 = vsel %vm1407, 0.0, %v1355
          %v1424 = vsel %vm1408, 0.0, %v1354
          %v1425 = vsel %vm1409, 0.0, %v1353
          %v1426 = vsel %vm1410, 0.0, %v1352
          %v1427 = vsel %vm1411, 0.0, %v1351
          %v1428 = vsel %vm1412, 0.0, %v1350
          %v1429 = vpack.c.bf16 %v1414, %v1413
          %v1430 = vpack.c.bf16 %v1416, %v1415
          %v1431 = vpack.c.bf16 %v1418, %v1417
          %v1432 = vpack.c.bf16 %v1420, %v1419
          %v1433 = vpack.c.bf16 %v1422, %v1421
          %v1434 = vpack.c.bf16 %v1424, %v1423
          %v1435 = vpack.c.bf16 %v1426, %v1425
          %v1436 = vpack.c.bf16 %v1428, %v1427
          %1437 = vst [vmem:[#allocation4] sm:$0xff] %v1429
          %1438 = vst [vmem:[#allocation4 + $0x10] sm:$0xff] %v1430
          %1439 = vst [vmem:[#allocation4 + $0x20] sm:$0xff] %v1431
          %1440 = vst [vmem:[#allocation4 + $0x30] sm:$0xff] %v1432
          %1441 = vst [vmem:[#allocation4 + $0x40] sm:$0xff] %v1433
          %1442 = vst [vmem:[#allocation4 + $0x50] sm:$0xff] %v1434
          %1443 = vst [vmem:[#allocation4 + $0x60] sm:$0xff] %v1435
          %1444 = vst [vmem:[#allocation4 + $0x70] sm:$0xff] %v1436
        $region92: #{wavenet_forward.1} parent=75 // pred_fallthru
          _
        %p1445 = scmp.eq.s32.totalorder %s1328, 1
        // Predicated region
        $region93: #{wavenet_forward.1} parent=75 // pred_check
          %p1446 = pneg %p1445
        $region94: #{wavenet_forward.1} parent=75 // pred_check_branch
          %1448 = sbr.rel (%p1446) target = $region96
        $region95: #{wavenet_forward.1} parent=75 // pred_region
          %v1449 = vrot.slane %v1300, 6
          %v1450 = vrot.slane %v1301, 6
          %v1451 = vrot.slane %v1302, 6
          %v1452 = vrot.slane %v1303, 6
          %v1453 = vrot.slane %v1304, 6
          %v1454 = vrot.slane %v1305, 6
          %v1455 = vrot.slane %v1306, 6
          %v1456 = vrot.slane %v1307, 6
          %v1457 = vrot.slane %v1308, 6
          %v1458 = vrot.slane %v1309, 6
          %v1459 = vrot.slane %v1310, 6
          %v1460 = vrot.slane %v1311, 6
          %v1461 = vrot.slane %v1312, 6
          %v1462 = vrot.slane %v1313, 6
          %v1463 = vrot.slane %v1314, 6
          %v1464 = vrot.slane %v1315, 6
          %vm1465 = vcmp.lt.s32.totalorder %v597, 2
          %v1466 = vsel %vm1465, %v1463, %v1464
          %v1467 = vsel %vm1465, %v1462, %v1463
          %v1468 = vsel %vm1465, %v1461, %v1462
          %v1469 = vsel %vm1465, %v1460, %v1461
          %v1470 = vsel %vm1465, %v1459, %v1460
          %v1471 = vsel %vm1465, %v1458, %v1459
          %v1472 = vsel %vm1465, %v1457, %v1458
          %v1473 = vsel %vm1465, %v1456, %v1457
          %v1474 = vsel %vm1465, %v1455, %v1456
          %v1475 = vsel %vm1465, %v1454, %v1455
          %v1476 = vsel %vm1465, %v1453, %v1454
          %v1477 = vsel %vm1465, %v1452, %v1453
          %v1478 = vsel %vm1465, %v1451, %v1452
          %v1479 = vsel %vm1465, %v1450, %v1451
          %v1480 = vsel %vm1465, %v1449, %v1450
          %v1481 = vsel %vm1465, %v1464, %v1449
          %vm1482 = vcmp.lt.s32.totalorder %v598, 2
          %vm1483 = vcmp.lt.s32.totalorder %v599, 2
          %vm1484 = vcmp.lt.s32.totalorder %v600, 2
          %vm1485 = vcmp.lt.s32.totalorder %v601, 2
          %vm1486 = vcmp.lt.s32.totalorder %v602, 2
          %vm1487 = vcmp.lt.s32.totalorder %v603, 2
          %vm1488 = vcmp.lt.s32.totalorder %v604, 2
          %vm1489 = vcmp.lt.s32.totalorder %v605, 2
          %vm1490 = vcmp.lt.s32.totalorder %v606, 2
          %vm1491 = vcmp.lt.s32.totalorder %v607, 2
          %vm1492 = vcmp.lt.s32.totalorder %v608, 2
          %vm1493 = vcmp.lt.s32.totalorder %v609, 2
          %vm1494 = vcmp.lt.s32.totalorder %v610, 2
          %vm1495 = vcmp.lt.s32.totalorder %v611, 2
          %vm1496 = vcmp.lt.s32.totalorder %v612, 2
          %v1497 = vsel %vm1465, 1, 0
          %v1498 = vsel %vm1482, 1, 0
          %v1499 = vsel %vm1483, 1, 0
          %v1500 = vsel %vm1484, 1, 0
          %v1501 = vsel %vm1485, 1, 0
          %v1502 = vsel %vm1486, 1, 0
          %v1503 = vsel %vm1487, 1, 0
          %v1504 = vsel %vm1488, 1, 0
          %v1505 = vsel %vm1489, 1, 0
          %v1506 = vsel %vm1490, 1, 0
          %v1507 = vsel %vm1491, 1, 0
          %v1508 = vsel %vm1492, 1, 0
          %v1509 = vsel %vm1493, 1, 0
          %v1510 = vsel %vm1494, 1, 0
          %v1511 = vsel %vm1495, 1, 0
          %v1512 = vsel %vm1496, 1, 0
          %vm1513 = vcmp.eq.s32.totalorder %v1497, 1
          %vm1514 = vcmp.eq.s32.totalorder %v1498, 1
          %vm1515 = vcmp.eq.s32.totalorder %v1499, 1
          %vm1516 = vcmp.eq.s32.totalorder %v1500, 1
          %vm1517 = vcmp.eq.s32.totalorder %v1501, 1
          %vm1518 = vcmp.eq.s32.totalorder %v1502, 1
          %vm1519 = vcmp.eq.s32.totalorder %v1503, 1
          %vm1520 = vcmp.eq.s32.totalorder %v1504, 1
          %vm1521 = vcmp.eq.s32.totalorder %v1505, 1
          %vm1522 = vcmp.eq.s32.totalorder %v1506, 1
          %vm1523 = vcmp.eq.s32.totalorder %v1507, 1
          %vm1524 = vcmp.eq.s32.totalorder %v1508, 1
          %vm1525 = vcmp.eq.s32.totalorder %v1509, 1
          %vm1526 = vcmp.eq.s32.totalorder %v1510, 1
          %vm1527 = vcmp.eq.s32.totalorder %v1511, 1
          %vm1528 = vcmp.eq.s32.totalorder %v1512, 1
          %v1529 = vsel %vm1513, 0.0, %v1481
          %v1530 = vsel %vm1514, 0.0, %v1480
          %v1531 = vsel %vm1515, 0.0, %v1479
          %v1532 = vsel %vm1516, 0.0, %v1478
          %v1533 = vsel %vm1517, 0.0, %v1477
          %v1534 = vsel %vm1518, 0.0, %v1476
          %v1535 = vsel %vm1519, 0.0, %v1475
          %v1536 = vsel %vm1520, 0.0, %v1474
          %v1537 = vsel %vm1521, 0.0, %v1473
          %v1538 = vsel %vm1522, 0.0, %v1472
          %v1539 = vsel %vm1523, 0.0, %v1471
          %v1540 = vsel %vm1524, 0.0, %v1470
          %v1541 = vsel %vm1525, 0.0, %v1469
          %v1542 = vsel %vm1526, 0.0, %v1468
          %v1543 = vsel %vm1527, 0.0, %v1467
          %v1544 = vsel %vm1528, 0.0, %v1466
          %v1545 = vpack.c.bf16 %v1530, %v1529
          %v1546 = vpack.c.bf16 %v1532, %v1531
          %v1547 = vpack.c.bf16 %v1534, %v1533
          %v1548 = vpack.c.bf16 %v1536, %v1535
          %v1549 = vpack.c.bf16 %v1538, %v1537
          %v1550 = vpack.c.bf16 %v1540, %v1539
          %v1551 = vpack.c.bf16 %v1542, %v1541
          %v1552 = vpack.c.bf16 %v1544, %v1543
          %1553 = vst [vmem:[#allocation4] sm:$0xff] %v1545
          %1554 = vst [vmem:[#allocation4 + $0x10] sm:$0xff] %v1546
          %1555 = vst [vmem:[#allocation4 + $0x20] sm:$0xff] %v1547
          %1556 = vst [vmem:[#allocation4 + $0x30] sm:$0xff] %v1548
          %1557 = vst [vmem:[#allocation4 + $0x40] sm:$0xff] %v1549
          %1558 = vst [vmem:[#allocation4 + $0x50] sm:$0xff] %v1550
          %1559 = vst [vmem:[#allocation4 + $0x60] sm:$0xff] %v1551
          %1560 = vst [vmem:[#allocation4 + $0x70] sm:$0xff] %v1552
        $region96: #{wavenet_forward.1} parent=75 // pred_fallthru
          _
        %p1561 = scmp.eq.s32.totalorder %s1328, 2
        // Predicated region
        $region97: #{wavenet_forward.1} parent=75 // pred_check
          %p1562 = pneg %p1561
        $region98: #{wavenet_forward.1} parent=75 // pred_check_branch
          %1564 = sbr.rel (%p1562) target = $region100
        $region99: #{wavenet_forward.1} parent=75 // pred_region
          %v1565 = vrot.slane %v1300, 4
          %v1566 = vrot.slane %v1301, 4
          %v1567 = vrot.slane %v1302, 4
          %v1568 = vrot.slane %v1303, 4
          %v1569 = vrot.slane %v1304, 4
          %v1570 = vrot.slane %v1305, 4
          %v1571 = vrot.slane %v1306, 4
          %v1572 = vrot.slane %v1307, 4
          %v1573 = vrot.slane %v1308, 4
          %v1574 = vrot.slane %v1309, 4
          %v1575 = vrot.slane %v1310, 4
          %v1576 = vrot.slane %v1311, 4
          %v1577 = vrot.slane %v1312, 4
          %v1578 = vrot.slane %v1313, 4
          %v1579 = vrot.slane %v1314, 4
          %v1580 = vrot.slane %v1315, 4
          %vm1581 = vcmp.lt.s32.totalorder %v597, 4
          %v1582 = vsel %vm1581, %v1579, %v1580
          %v1583 = vsel %vm1581, %v1578, %v1579
          %v1584 = vsel %vm1581, %v1577, %v1578
          %v1585 = vsel %vm1581, %v1576, %v1577
          %v1586 = vsel %vm1581, %v1575, %v1576
          %v1587 = vsel %vm1581, %v1574, %v1575
          %v1588 = vsel %vm1581, %v1573, %v1574
          %v1589 = vsel %vm1581, %v1572, %v1573
          %v1590 = vsel %vm1581, %v1571, %v1572
          %v1591 = vsel %vm1581, %v1570, %v1571
          %v1592 = vsel %vm1581, %v1569, %v1570
          %v1593 = vsel %vm1581, %v1568, %v1569
          %v1594 = vsel %vm1581, %v1567, %v1568
          %v1595 = vsel %vm1581, %v1566, %v1567
          %v1596 = vsel %vm1581, %v1565, %v1566
          %v1597 = vsel %vm1581, %v1580, %v1565
          %vm1598 = vcmp.lt.s32.totalorder %v598, 4
          %vm1599 = vcmp.lt.s32.totalorder %v599, 4
          %vm1600 = vcmp.lt.s32.totalorder %v600, 4
          %vm1601 = vcmp.lt.s32.totalorder %v601, 4
          %vm1602 = vcmp.lt.s32.totalorder %v602, 4
          %vm1603 = vcmp.lt.s32.totalorder %v603, 4
          %vm1604 = vcmp.lt.s32.totalorder %v604, 4
          %vm1605 = vcmp.lt.s32.totalorder %v605, 4
          %vm1606 = vcmp.lt.s32.totalorder %v606, 4
          %vm1607 = vcmp.lt.s32.totalorder %v607, 4
          %vm1608 = vcmp.lt.s32.totalorder %v608, 4
          %vm1609 = vcmp.lt.s32.totalorder %v609, 4
          %vm1610 = vcmp.lt.s32.totalorder %v610, 4
          %vm1611 = vcmp.lt.s32.totalorder %v611, 4
          %vm1612 = vcmp.lt.s32.totalorder %v612, 4
          %v1613 = vsel %vm1581, 1, 0
          %v1614 = vsel %vm1598, 1, 0
          %v1615 = vsel %vm1599, 1, 0
          %v1616 = vsel %vm1600, 1, 0
          %v1617 = vsel %vm1601, 1, 0
          %v1618 = vsel %vm1602, 1, 0
          %v1619 = vsel %vm1603, 1, 0
          %v1620 = vsel %vm1604, 1, 0
          %v1621 = vsel %vm1605, 1, 0
          %v1622 = vsel %vm1606, 1, 0
          %v1623 = vsel %vm1607, 1, 0
          %v1624 = vsel %vm1608, 1, 0
          %v1625 = vsel %vm1609, 1, 0
          %v1626 = vsel %vm1610, 1, 0
          %v1627 = vsel %vm1611, 1, 0
          %v1628 = vsel %vm1612, 1, 0
          %vm1629 = vcmp.eq.s32.totalorder %v1613, 1
          %vm1630 = vcmp.eq.s32.totalorder %v1614, 1
          %vm1631 = vcmp.eq.s32.totalorder %v1615, 1
          %vm1632 = vcmp.eq.s32.totalorder %v1616, 1
          %vm1633 = vcmp.eq.s32.totalorder %v1617, 1
          %vm1634 = vcmp.eq.s32.totalorder %v1618, 1
          %vm1635 = vcmp.eq.s32.totalorder %v1619, 1
          %vm1636 = vcmp.eq.s32.totalorder %v1620, 1
          %vm1637 = vcmp.eq.s32.totalorder %v1621, 1
          %vm1638 = vcmp.eq.s32.totalorder %v1622, 1
          %vm1639 = vcmp.eq.s32.totalorder %v1623, 1
          %vm1640 = vcmp.eq.s32.totalorder %v1624, 1
          %vm1641 = vcmp.eq.s32.totalorder %v1625, 1
          %vm1642 = vcmp.eq.s32.totalorder %v1626, 1
          %vm1643 = vcmp.eq.s32.totalorder %v1627, 1
          %vm1644 = vcmp.eq.s32.totalorder %v1628, 1
          %v1645 = vsel %vm1629, 0.0, %v1597
          %v1646 = vsel %vm1630, 0.0, %v1596
          %v1647 = vsel %vm1631, 0.0, %v1595
          %v1648 = vsel %vm1632, 0.0, %v1594
          %v1649 = vsel %vm1633, 0.0, %v1593
          %v1650 = vsel %vm1634, 0.0, %v1592
          %v1651 = vsel %vm1635, 0.0, %v1591
          %v1652 = vsel %vm1636, 0.0, %v1590
          %v1653 = vsel %vm1637, 0.0, %v1589
          %v1654 = vsel %vm1638, 0.0, %v1588
          %v1655 = vsel %vm1639, 0.0, %v1587
          %v1656 = vsel %vm1640, 0.0, %v1586
          %v1657 = vsel %vm1641, 0.0, %v1585
          %v1658 = vsel %vm1642, 0.0, %v1584
          %v1659 = vsel %vm1643, 0.0, %v1583
          %v1660 = vsel %vm1644, 0.0, %v1582
          %v1661 = vpack.c.bf16 %v1646, %v1645
          %v1662 = vpack.c.bf16 %v1648, %v1647
          %v1663 = vpack.c.bf16 %v1650, %v1649
          %v1664 = vpack.c.bf16 %v1652, %v1651
          %v1665 = vpack.c.bf16 %v1654, %v1653
          %v1666 = vpack.c.bf16 %v1656, %v1655
          %v1667 = vpack.c.bf16 %v1658, %v1657
          %v1668 = vpack.c.bf16 %v1660, %v1659
          %1669 = vst [vmem:[#allocation4] sm:$0xff] %v1661
          %1670 = vst [vmem:[#allocation4 + $0x10] sm:$0xff] %v1662
          %1671 = vst [vmem:[#allocation4 + $0x20] sm:$0xff] %v1663
          %1672 = vst [vmem:[#allocation4 + $0x30] sm:$0xff] %v1664
          %1673 = vst [vmem:[#allocation4 + $0x40] sm:$0xff] %v1665
          %1674 = vst [vmem:[#allocation4 + $0x50] sm:$0xff] %v1666
          %1675 = vst [vmem:[#allocation4 + $0x60] sm:$0xff] %v1667
          %1676 = vst [vmem:[#allocation4 + $0x70] sm:$0xff] %v1668
        $region100: #{wavenet_forward.1} parent=75 // pred_fallthru
          _
        %v1677 = vld [vmem:[#allocation4] sm:$0xff]
        %v1678 = vld [vmem:[#allocation4 + $0x8] sm:$0xff]
        %v1679 = vld [vmem:[#allocation4 + $0x10] sm:$0xff]
        %v1680 = vld [vmem:[#allocation4 + $0x18] sm:$0xff]
        %v1681 = vld [vmem:[#allocation4 + $0x20] sm:$0xff]
        %v1682 = vld [vmem:[#allocation4 + $0x28] sm:$0xff]
        %v1683 = vld [vmem:[#allocation4 + $0x30] sm:$0xff]
        %v1684 = vld [vmem:[#allocation4 + $0x38] sm:$0xff]
        %v1685 = vld [vmem:[#allocation4 + $0x40] sm:$0xff]
        %v1686 = vld [vmem:[#allocation4 + $0x48] sm:$0xff]
        %v1687 = vld [vmem:[#allocation4 + $0x50] sm:$0xff]
        %v1688 = vld [vmem:[#allocation4 + $0x58] sm:$0xff]
        %v1689 = vld [vmem:[#allocation4 + $0x60] sm:$0xff]
        %v1690 = vld [vmem:[#allocation4 + $0x68] sm:$0xff]
        %v1691 = vld [vmem:[#allocation4 + $0x70] sm:$0xff]
        %v1692 = vld [vmem:[#allocation4 + $0x78] sm:$0xff]
        %v1693 = vld [vmem:[%s510] sm:$0xff]
        %v1694 = vld [vmem:[%s510 + $0x8] sm:$0xff]
        %v1695 = vld [vmem:[%s510 + $0x10] sm:$0xff]
        %v1696 = vld [vmem:[%s510 + $0x18] sm:$0xff]
        %v1697 = vld [vmem:[%s510 + $0x20] sm:$0xff]
        %v1698 = vld [vmem:[%s510 + $0x28] sm:$0xff]
        %v1699 = vld [vmem:[%s510 + $0x30] sm:$0xff]
        %v1700 = vld [vmem:[%s510 + $0x38] sm:$0xff]
        %v1701 = vld [vmem:[%s510 + $0x40] sm:$0xff]
        %v1702 = vld [vmem:[%s510 + $0x48] sm:$0xff]
        %v1703 = vld [vmem:[%s510 + $0x50] sm:$0xff]
        %v1704 = vld [vmem:[%s510 + $0x58] sm:$0xff]
        %v1705 = vld [vmem:[%s510 + $0x60] sm:$0xff]
        %v1706 = vld [vmem:[%s510 + $0x68] sm:$0xff]
        %v1707 = vld [vmem:[%s510 + $0x70] sm:$0xff]
        %v1708 = vld [vmem:[%s510 + $0x78] sm:$0xff]
        %v1709 = vld [vmem:[%s510 + $0x80] sm:$0xff]
        %v1710 = vld [vmem:[%s510 + $0x88] sm:$0xff]
        %v1711 = vld [vmem:[%s510 + $0x90] sm:$0xff]
        %v1712 = vld [vmem:[%s510 + $0x98] sm:$0xff]
        %v1713 = vld [vmem:[%s510 + $0xa0] sm:$0xff]
        %v1714 = vld [vmem:[%s510 + $0xa8] sm:$0xff]
        %v1715 = vld [vmem:[%s510 + $0xb0] sm:$0xff]
        %v1716 = vld [vmem:[%s510 + $0xb8] sm:$0xff]
        %v1717 = vld [vmem:[%s510 + $0xc0] sm:$0xff]
        %v1718 = vld [vmem:[%s510 + $0xc8] sm:$0xff]
        %v1719 = vld [vmem:[%s510 + $0xd0] sm:$0xff]
        %v1720 = vld [vmem:[%s510 + $0xd8] sm:$0xff]
        %v1721 = vld [vmem:[%s510 + $0xe0] sm:$0xff]
        %v1722 = vld [vmem:[%s510 + $0xe8] sm:$0xff]
        %v1723 = vld [vmem:[%s510 + $0xf0] sm:$0xff]
        %v1724 = vld [vmem:[%s510 + $0xf8] sm:$0xff]
        %v1725 = vld [vmem:[%s590] sm:$0x3]
        %v1727 = vlaneseq
        %v1728 = vshrl.u32 %v1727, 7
        %v1729 = vsub.s32 0, %v1728
        %v1730 = vrot.slane %v1725, %v1729
        %v1731 = vlaneseq
        %v1732 = vshrl.u32 %v1731, 7
        %v1733 = vsub.s32 1, %v1732
        %v1734 = vrot.slane %v1725, %v1733
        %v1769 = vunpack.c.l.b16 %v1693
        %v1770 = vunpack.c.h.b16 %v1693
        %v1771 = vunpack.c.l.b16 %v1694
        %v1772 = vunpack.c.h.b16 %v1694
        %v1773 = vunpack.c.l.b16 %v1695
        %v1774 = vunpack.c.h.b16 %v1695
        %v1775 = vunpack.c.l.b16 %v1696
        %v1776 = vunpack.c.h.b16 %v1696
        %v1777 = vunpack.c.l.b16 %v1697
        %v1778 = vunpack.c.h.b16 %v1697
        %v1779 = vunpack.c.l.b16 %v1698
        %v1780 = vunpack.c.h.b16 %v1698
        %v1781 = vunpack.c.l.b16 %v1699
        %v1782 = vunpack.c.h.b16 %v1699
        %v1783 = vunpack.c.l.b16 %v1700
        %v1784 = vunpack.c.h.b16 %v1700
        %v1785 = vunpack.c.l.b16 %v1701
        %v1786 = vunpack.c.h.b16 %v1701
        %v1787 = vunpack.c.l.b16 %v1702
        %v1788 = vunpack.c.h.b16 %v1702
        %v1789 = vunpack.c.l.b16 %v1703
        %v1790 = vunpack.c.h.b16 %v1703
        %v1791 = vunpack.c.l.b16 %v1704
        %v1792 = vunpack.c.h.b16 %v1704
        %v1793 = vunpack.c.l.b16 %v1705
        %v1794 = vunpack.c.h.b16 %v1705
        %v1795 = vunpack.c.l.b16 %v1706
        %v1796 = vunpack.c.h.b16 %v1706
        %v1797 = vunpack.c.l.b16 %v1707
        %v1798 = vunpack.c.h.b16 %v1707
        %v1799 = vunpack.c.l.b16 %v1708
        %v1800 = vunpack.c.h.b16 %v1708
        %v1801 = vunpack.c.l.b16 %v1709
        %v1802 = vunpack.c.h.b16 %v1709
        %v1803 = vunpack.c.l.b16 %v1710
        %v1804 = vunpack.c.h.b16 %v1710
        %v1805 = vunpack.c.l.b16 %v1711
        %v1806 = vunpack.c.h.b16 %v1711
        %v1807 = vunpack.c.l.b16 %v1712
        %v1808 = vunpack.c.h.b16 %v1712
        %v1809 = vunpack.c.l.b16 %v1713
        %v1810 = vunpack.c.h.b16 %v1713
        %v1811 = vunpack.c.l.b16 %v1714
        %v1812 = vunpack.c.h.b16 %v1714
        %v1813 = vunpack.c.l.b16 %v1715
        %v1814 = vunpack.c.h.b16 %v1715
        %v1815 = vunpack.c.l.b16 %v1716
        %v1816 = vunpack.c.h.b16 %v1716
        %v1817 = vunpack.c.l.b16 %v1717
        %v1818 = vunpack.c.h.b16 %v1717
        %v1819 = vunpack.c.l.b16 %v1718
        %v1820 = vunpack.c.h.b16 %v1718
        %v1821 = vunpack.c.l.b16 %v1719
        %v1822 = vunpack.c.h.b16 %v1719
        %v1823 = vunpack.c.l.b16 %v1720
        %v1824 = vunpack.c.h.b16 %v1720
        %v1825 = vunpack.c.l.b16 %v1721
        %v1826 = vunpack.c.h.b16 %v1721
        %v1827 = vunpack.c.l.b16 %v1722
        %v1828 = vunpack.c.h.b16 %v1722
        %v1829 = vunpack.c.l.b16 %v1723
        %v1830 = vunpack.c.h.b16 %v1723
        %v1831 = vunpack.c.l.b16 %v1724
        %v1832 = vunpack.c.h.b16 %v1724
        %v1833 = vpack.c.b16 %v1771, %v1769
        %v1834 = vpack.c.b16 %v1772, %v1770
        %v1835 = vpack.c.b16 %v1775, %v1773
        %v1836 = vpack.c.b16 %v1776, %v1774
        %v1837 = vpack.c.b16 %v1779, %v1777
        %v1838 = vpack.c.b16 %v1780, %v1778
        %v1839 = vpack.c.b16 %v1783, %v1781
        %v1840 = vpack.c.b16 %v1784, %v1782
        %v1841 = vpack.c.b16 %v1787, %v1785
        %v1842 = vpack.c.b16 %v1788, %v1786
        %v1843 = vpack.c.b16 %v1791, %v1789
        %v1844 = vpack.c.b16 %v1792, %v1790
        %v1845 = vpack.c.b16 %v1795, %v1793
        %v1846 = vpack.c.b16 %v1796, %v1794
        %v1847 = vpack.c.b16 %v1799, %v1797
        %v1848 = vpack.c.b16 %v1800, %v1798
        %v1849 = vpack.c.b16 %v1803, %v1801
        %v1850 = vpack.c.b16 %v1804, %v1802
        %v1851 = vpack.c.b16 %v1807, %v1805
        %v1852 = vpack.c.b16 %v1808, %v1806
        %v1853 = vpack.c.b16 %v1811, %v1809
        %v1854 = vpack.c.b16 %v1812, %v1810
        %v1855 = vpack.c.b16 %v1815, %v1813
        %v1856 = vpack.c.b16 %v1816, %v1814
        %v1857 = vpack.c.b16 %v1819, %v1817
        %v1858 = vpack.c.b16 %v1820, %v1818
        %v1859 = vpack.c.b16 %v1823, %v1821
        %v1860 = vpack.c.b16 %v1824, %v1822
        %v1861 = vpack.c.b16 %v1827, %v1825
        %v1862 = vpack.c.b16 %v1828, %v1826
        %v1863 = vpack.c.b16 %v1831, %v1829
        %v1864 = vpack.c.b16 %v1832, %v1830
        %1897 = vmatprep.subr.bf16.mxu0 %v1834
        %1898 = vmatpush1.bf16.msra.mxu0 %v1833
        %1899 = vmatprep.subr.bf16.mxu0 %v1836
        %1900 = vmatpush1.bf16.msra.mxu0 %v1835
        %1901 = vmatprep.subr.bf16.mxu0 %v1838
        %1902 = vmatpush1.bf16.msra.mxu0 %v1837
        %1903 = vmatprep.subr.bf16.mxu0 %v1840
        %1904 = vmatpush1.bf16.msra.mxu0 %v1839
        %1905 = vmatprep.subr.bf16.mxu0 %v1842
        %1906 = vmatpush1.bf16.msra.mxu0 %v1841
        %1907 = vmatprep.subr.bf16.mxu0 %v1844
        %1908 = vmatpush1.bf16.msra.mxu0 %v1843
        %1909 = vmatprep.subr.bf16.mxu0 %v1846
        %1910 = vmatpush1.bf16.msra.mxu0 %v1845
        %1911 = vmatprep.subr.bf16.mxu0 %v1848
        %1912 = vmatpush1.bf16.msra.mxu0 %v1847
        %1913 = vmatprep.subr.bf16.mxu0 %v1850
        %1914 = vmatpush1.bf16.msra.mxu0 %v1849
        %1915 = vmatprep.subr.bf16.mxu0 %v1852
        %1916 = vmatpush1.bf16.msra.mxu0 %v1851
        %1917 = vmatprep.subr.bf16.mxu0 %v1854
        %1918 = vmatpush1.bf16.msra.mxu0 %v1853
        %1919 = vmatprep.subr.bf16.mxu0 %v1856
        %1920 = vmatpush1.bf16.msra.mxu0 %v1855
        %1921 = vmatprep.subr.bf16.mxu0 %v1858
        %1922 = vmatpush1.bf16.msra.mxu0 %v1857
        %1923 = vmatprep.subr.bf16.mxu0 %v1860
        %1924 = vmatpush1.bf16.msra.mxu0 %v1859
        %1925 = vmatprep.subr.bf16.mxu0 %v1862
        %1926 = vmatpush1.bf16.msra.mxu0 %v1861
        %1927 = vmatprep.subr.bf16.mxu0 %v1864
        %1928 = vmatpush1.bf16.msra.mxu0 %v1863
        %1929 = vmatprep.mubr.bf16.mxu0 %v1678
        %1930 = vmatmul.mubr.bf16.gmra.mrb[0].mxu0 %v1677
        %v1931 = vpop.f32.mrb[0].mxu0
        %v1932 = vadd.f32 %v1730, %v1931
        %v1933 = vpop.f32.mrb[0].mxu0
        %v1934 = vadd.f32 %v1734, %v1933
        %v1935 = vpop.f32.mrb[0].mxu0
        %v1936 = vadd.f32 %v1730, %v1935
        %v1937 = vpop.f32.mrb[0].mxu0
        %v1938 = vadd.f32 %v1734, %v1937
        %1939 = vmatprep.mubr.bf16.mxu0 %v1680
        %1940 = vmatmul.mubr.bf16.gmra.mrb[0].mxu0 %v1679
        %v1941 = vpop.f32.mrb[0].mxu0
        %v1942 = vadd.f32 %v1730, %v1941
        %v1943 = vpop.f32.mrb[0].mxu0
        %v1944 = vadd.f32 %v1734, %v1943
        %v1945 = vpop.f32.mrb[0].mxu0
        %v1946 = vadd.f32 %v1730, %v1945
        %v1947 = vpop.f32.mrb[0].mxu0
        %v1948 = vadd.f32 %v1734, %v1947
        %1949 = vmatprep.mubr.bf16.mxu0 %v1682
        %1950 = vmatmul.mubr.bf16.gmra.mrb[0].mxu0 %v1681
        %v1951 = vpop.f32.mrb[0].mxu0
        %v1952 = vadd.f32 %v1730, %v1951
        %v1953 = vpop.f32.mrb[0].mxu0
        %v1954 = vadd.f32 %v1734, %v1953
        %v1955 = vpop.f32.mrb[0].mxu0
        %v1956 = vadd.f32 %v1730, %v1955
        %v1957 = vpop.f32.mrb[0].mxu0
        %v1958 = vadd.f32 %v1734, %v1957
        %1959 = vmatprep.mubr.bf16.mxu0 %v1684
        %1960 = vmatmul.mubr.bf16.gmra.mrb[0].mxu0 %v1683
        %v1961 = vpop.f32.mrb[0].mxu0
        %v1962 = vadd.f32 %v1730, %v1961
        %v1963 = vpop.f32.mrb[0].mxu0
        %v1964 = vadd.f32 %v1734, %v1963
        %v1965 = vpop.f32.mrb[0].mxu0
        %v1966 = vadd.f32 %v1730, %v1965
        %v1967 = vpop.f32.mrb[0].mxu0
        %v1968 = vadd.f32 %v1734, %v1967
        %1969 = vmatprep.mubr.bf16.mxu0 %v1686
        %1970 = vmatmul.mubr.bf16.gmra.mrb[0].mxu0 %v1685
        %v1971 = vpop.f32.mrb[0].mxu0
        %v1972 = vadd.f32 %v1730, %v1971
        %v1973 = vpop.f32.mrb[0].mxu0
        %v1974 = vadd.f32 %v1734, %v1973
        %v1975 = vpop.f32.mrb[0].mxu0
        %v1976 = vadd.f32 %v1730, %v1975
        %v1977 = vpop.f32.mrb[0].mxu0
        %v1978 = vadd.f32 %v1734, %v1977
        %1979 = vmatprep.mubr.bf16.mxu0 %v1688
        %1980 = vmatmul.mubr.bf16.gmra.mrb[0].mxu0 %v1687
        %v1981 = vpop.f32.mrb[0].mxu0
        %v1982 = vadd.f32 %v1730, %v1981
        %v1983 = vpop.f32.mrb[0].mxu0
        %v1984 = vadd.f32 %v1734, %v1983
        %v1985 = vpop.f32.mrb[0].mxu0
        %v1986 = vadd.f32 %v1730, %v1985
        %v1987 = vpop.f32.mrb[0].mxu0
        %v1988 = vadd.f32 %v1734, %v1987
        %1989 = vmatprep.mubr.bf16.mxu0 %v1690
        %1990 = vmatmul.mubr.bf16.gmra.mrb[0].mxu0 %v1689
        %v1991 = vpop.f32.mrb[0].mxu0
        %v1992 = vadd.f32 %v1730, %v1991
        %v1993 = vpop.f32.mrb[0].mxu0
        %v1994 = vadd.f32 %v1734, %v1993
        %v1995 = vpop.f32.mrb[0].mxu0
        %v1996 = vadd.f32 %v1730, %v1995
        %v1997 = vpop.f32.mrb[0].mxu0
        %v1998 = vadd.f32 %v1734, %v1997
        %1999 = vmatprep.mubr.bf16.mxu0 %v1692
        %2000 = vmatmul.mubr.bf16.gmra.mrb[0].mxu0 %v1691
        %v2001 = vpop.f32.mrb[0].mxu0
        %v2002 = vadd.f32 %v1730, %v2001
        %v2003 = vpop.f32.mrb[0].mxu0
        %v2004 = vadd.f32 %v1734, %v2003
        %v2005 = vpop.f32.mrb[0].mxu0
        %v2006 = vadd.f32 %v1730, %v2005
        %v2007 = vpop.f32.mrb[0].mxu0
        %v2008 = vadd.f32 %v1734, %v2007
        %2009 = vdwg.mxu0
        %v2010 = vxor.u32 %v1932, 2147483648
        %v2011 = vxor.u32 %v1936, 2147483648
        %v2012 = vxor.u32 %v1942, 2147483648
        %v2013 = vxor.u32 %v1946, 2147483648
        %v2014 = vxor.u32 %v1952, 2147483648
        %v2015 = vxor.u32 %v1956, 2147483648
        %v2016 = vxor.u32 %v1962, 2147483648
        %v2017 = vxor.u32 %v1966, 2147483648
        %v2018 = vxor.u32 %v1972, 2147483648
        %v2019 = vxor.u32 %v1976, 2147483648
        %v2020 = vxor.u32 %v1982, 2147483648
        %v2021 = vxor.u32 %v1986, 2147483648
        %v2022 = vxor.u32 %v1992, 2147483648
        %v2023 = vxor.u32 %v1996, 2147483648
        %v2024 = vxor.u32 %v2002, 2147483648
        %v2025 = vxor.u32 %v2006, 2147483648
        %v2026 = vmul.f32 %v2010, 1.442695
        %v2027 = vpow.pop %v2026
        %v2028 = vmul.f32 %v2011, 1.442695
        %v2029 = vpow.pop %v2028
        %v2030 = vmul.f32 %v2012, 1.442695
        %v2031 = vpow.pop %v2030
        %v2032 = vmul.f32 %v2013, 1.442695
        %v2033 = vpow.pop %v2032
        %v2034 = vmul.f32 %v2014, 1.442695
        %v2035 = vpow.pop %v2034
        %v2036 = vmul.f32 %v2015, 1.442695
        %v2037 = vpow.pop %v2036
        %v2038 = vmul.f32 %v2016, 1.442695
        %v2039 = vpow.pop %v2038
        %v2040 = vmul.f32 %v2017, 1.442695
        %v2041 = vpow.pop %v2040
        %v2042 = vmul.f32 %v2018, 1.442695
        %v2043 = vpow.pop %v2042
        %v2044 = vmul.f32 %v2019, 1.442695
        %v2045 = vpow.pop %v2044
        %v2046 = vmul.f32 %v2020, 1.442695
        %v2047 = vpow.pop %v2046
        %v2048 = vmul.f32 %v2021, 1.442695
        %v2049 = vpow.pop %v2048
        %v2050 = vmul.f32 %v2022, 1.442695
        %v2051 = vpow.pop %v2050
        %v2052 = vmul.f32 %v2023, 1.442695
        %v2053 = vpow.pop %v2052
        %v2054 = vmul.f32 %v2024, 1.442695
        %v2055 = vpow.pop %v2054
        %v2056 = vmul.f32 %v2025, 1.442695
        %v2057 = vpow.pop %v2056
        %v2058 = vadd.f32 %v2027, 1.0
        %v2059 = vadd.f32 %v2029, 1.0
        %v2060 = vadd.f32 %v2031, 1.0
        %v2061 = vadd.f32 %v2033, 1.0
        %v2062 = vadd.f32 %v2035, 1.0
        %v2063 = vadd.f32 %v2037, 1.0
        %v2064 = vadd.f32 %v2039, 1.0
        %v2065 = vadd.f32 %v2041, 1.0
        %v2066 = vadd.f32 %v2043, 1.0
        %v2067 = vadd.f32 %v2045, 1.0
        %v2068 = vadd.f32 %v2047, 1.0
        %v2069 = vadd.f32 %v2049, 1.0
        %v2070 = vadd.f32 %v2051, 1.0
        %v2071 = vadd.f32 %v2053, 1.0
        %v2072 = vadd.f32 %v2055, 1.0
        %v2073 = vadd.f32 %v2057, 1.0
        %v2074 = vrcp.pop %v2058
        %v2075 = vmul.f32 1.0, %v2074
        %v2076 = vrcp.pop %v2059
        %v2077 = vmul.f32 1.0, %v2076
        %v2078 = vrcp.pop %v2060
        %v2079 = vmul.f32 1.0, %v2078
        %v2080 = vrcp.pop %v2061
        %v2081 = vmul.f32 1.0, %v2080
        %v2082 = vrcp.pop %v2062
        %v2083 = vmul.f32 1.0, %v2082
        %v2084 = vrcp.pop %v2063
        %v2085 = vmul.f32 1.0, %v2084
        %v2086 = vrcp.pop %v2064
        %v2087 = vmul.f32 1.0, %v2086
        %v2088 = vrcp.pop %v2065
        %v2089 = vmul.f32 1.0, %v2088
        %v2090 = vrcp.pop %v2066
        %v2091 = vmul.f32 1.0, %v2090
        %v2092 = vrcp.pop %v2067
        %v2093 = vmul.f32 1.0, %v2092
        %v2094 = vrcp.pop %v2068
        %v2095 = vmul.f32 1.0, %v2094
        %v2096 = vrcp.pop %v2069
        %v2097 = vmul.f32 1.0, %v2096
        %v2098 = vrcp.pop %v2070
        %v2099 = vmul.f32 1.0, %v2098
        %v2100 = vrcp.pop %v2071
        %v2101 = vmul.f32 1.0, %v2100
        %v2102 = vrcp.pop %v2072
        %v2103 = vmul.f32 1.0, %v2102
        %v2104 = vrcp.pop %v2073
        %v2105 = vmul.f32 1.0, %v2104
        %v2106 = vtanh.pop %v1934
        %v2107 = vtanh.pop %v1938
        %v2108 = vtanh.pop %v1944
        %v2109 = vtanh.pop %v1948
        %v2110 = vtanh.pop %v1954
        %v2111 = vtanh.pop %v1958
        %v2112 = vtanh.pop %v1964
        %v2113 = vtanh.pop %v1968
        %v2114 = vtanh.pop %v1974
        %v2115 = vtanh.pop %v1978
        %v2116 = vtanh.pop %v1984
        %v2117 = vtanh.pop %v1988
        %v2118 = vtanh.pop %v1994
        %v2119 = vtanh.pop %v1998
        %v2120 = vtanh.pop %v2004
        %v2121 = vtanh.pop %v2008
        %v2122 = vmul.f32 %v2075, %v2106
        %v2123 = vmul.f32 %v2077, %v2107
        %v2124 = vmul.f32 %v2079, %v2108
        %v2125 = vmul.f32 %v2081, %v2109
        %v2126 = vmul.f32 %v2083, %v2110
        %v2127 = vmul.f32 %v2085, %v2111
        %v2128 = vmul.f32 %v2087, %v2112
        %v2129 = vmul.f32 %v2089, %v2113
        %v2130 = vmul.f32 %v2091, %v2114
        %v2131 = vmul.f32 %v2093, %v2115
        %v2132 = vmul.f32 %v2095, %v2116
        %v2133 = vmul.f32 %v2097, %v2117
        %v2134 = vmul.f32 %v2099, %v2118
        %v2135 = vmul.f32 %v2101, %v2119
        %v2136 = vmul.f32 %v2103, %v2120
        %v2137 = vmul.f32 %v2105, %v2121
        %v2138 = vpack.c.bf16 %v2123, %v2122
        %v2139 = vpack.c.bf16 %v2125, %v2124
        %v2140 = vpack.c.bf16 %v2127, %v2126
        %v2141 = vpack.c.bf16 %v2129, %v2128
        %v2142 = vpack.c.bf16 %v2131, %v2130
        %v2143 = vpack.c.bf16 %v2133, %v2132
        %v2144 = vpack.c.bf16 %v2135, %v2134
        %v2145 = vpack.c.bf16 %v2137, %v2136
        %v2146 = vld [vmem:[%s519] sm:$0xff]
        %v2147 = vld [vmem:[%s519 + $0x8] sm:$0xff]
        %v2148 = vld [vmem:[%s519 + $0x10] sm:$0xff]
        %v2149 = vld [vmem:[%s519 + $0x18] sm:$0xff]
        %v2150 = vld [vmem:[%s519 + $0x20] sm:$0xff]
        %v2151 = vld [vmem:[%s519 + $0x28] sm:$0xff]
        %v2152 = vld [vmem:[%s519 + $0x30] sm:$0xff]
        %v2153 = vld [vmem:[%s519 + $0x38] sm:$0xff]
        %v2154 = vld [vmem:[%s519 + $0x40] sm:$0xff]
        %v2155 = vld [vmem:[%s519 + $0x48] sm:$0xff]
        %v2156 = vld [vmem:[%s519 + $0x50] sm:$0xff]
        %v2157 = vld [vmem:[%s519 + $0x58] sm:$0xff]
        %v2158 = vld [vmem:[%s519 + $0x60] sm:$0xff]
        %v2159 = vld [vmem:[%s519 + $0x68] sm:$0xff]
        %v2160 = vld [vmem:[%s519 + $0x70] sm:$0xff]
        %v2161 = vld [vmem:[%s519 + $0x78] sm:$0xff]
        %v2162 = vld [vmem:[%s594] sm:$0x3]
        %v2164 = vlaneseq
        %v2165 = vshrl.u32 %v2164, 7
        %v2166 = vsub.s32 0, %v2165
        %v2167 = vrot.slane %v2162, %v2166
        %v2168 = vlaneseq
        %v2169 = vshrl.u32 %v2168, 7
        %v2170 = vsub.s32 1, %v2169
        %v2171 = vrot.slane %v2162, %v2170
        %v2190 = vunpack.c.l.b16 %v2146
        %v2191 = vunpack.c.h.b16 %v2146
        %v2192 = vunpack.c.l.b16 %v2147
        %v2193 = vunpack.c.h.b16 %v2147
        %v2194 = vunpack.c.l.b16 %v2148
        %v2195 = vunpack.c.h.b16 %v2148
        %v2196 = vunpack.c.l.b16 %v2149
        %v2197 = vunpack.c.h.b16 %v2149
        %v2198 = vunpack.c.l.b16 %v2150
        %v2199 = vunpack.c.h.b16 %v2150
        %v2200 = vunpack.c.l.b16 %v2151
        %v2201 = vunpack.c.h.b16 %v2151
        %v2202 = vunpack.c.l.b16 %v2152
        %v2203 = vunpack.c.h.b16 %v2152
        %v2204 = vunpack.c.l.b16 %v2153
        %v2205 = vunpack.c.h.b16 %v2153
        %v2206 = vunpack.c.l.b16 %v2154
        %v2207 = vunpack.c.h.b16 %v2154
        %v2208 = vunpack.c.l.b16 %v2155
        %v2209 = vunpack.c.h.b16 %v2155
        %v2210 = vunpack.c.l.b16 %v2156
        %v2211 = vunpack.c.h.b16 %v2156
        %v2212 = vunpack.c.l.b16 %v2157
        %v2213 = vunpack.c.h.b16 %v2157
        %v2214 = vunpack.c.l.b16 %v2158
        %v2215 = vunpack.c.h.b16 %v2158
        %v2216 = vunpack.c.l.b16 %v2159
        %v2217 = vunpack.c.h.b16 %v2159
        %v2218 = vunpack.c.l.b16 %v2160
        %v2219 = vunpack.c.h.b16 %v2160
        %v2220 = vunpack.c.l.b16 %v2161
        %v2221 = vunpack.c.h.b16 %v2161
        %v2222 = vpack.c.b16 %v2192, %v2190
        %v2223 = vpack.c.b16 %v2193, %v2191
        %v2224 = vpack.c.b16 %v2196, %v2194
        %v2225 = vpack.c.b16 %v2197, %v2195
        %v2226 = vpack.c.b16 %v2200, %v2198
        %v2227 = vpack.c.b16 %v2201, %v2199
        %v2228 = vpack.c.b16 %v2204, %v2202
        %v2229 = vpack.c.b16 %v2205, %v2203
        %v2230 = vpack.c.b16 %v2208, %v2206
        %v2231 = vpack.c.b16 %v2209, %v2207
        %v2232 = vpack.c.b16 %v2212, %v2210
        %v2233 = vpack.c.b16 %v2213, %v2211
        %v2234 = vpack.c.b16 %v2216, %v2214
        %v2235 = vpack.c.b16 %v2217, %v2215
        %v2236 = vpack.c.b16 %v2220, %v2218
        %v2237 = vpack.c.b16 %v2221, %v2219
        %2254 = vmatprep.subr.bf16.mxu0 %v2223
        %2255 = vmatpush1.bf16.msra.mxu0 %v2222
        %2256 = vmatprep.subr.bf16.mxu0 %v2225
        %2257 = vmatpush1.bf16.msra.mxu0 %v2224
        %2258 = vmatprep.subr.bf16.mxu0 %v2227
        %2259 = vmatpush1.bf16.msra.mxu0 %v2226
        %2260 = vmatprep.subr.bf16.mxu0 %v2229
        %2261 = vmatpush1.bf16.msra.mxu0 %v2228
        %2262 = vmatprep.subr.bf16.mxu0 %v2231
        %2263 = vmatpush1.bf16.msra.mxu0 %v2230
        %2264 = vmatprep.subr.bf16.mxu0 %v2233
        %2265 = vmatpush1.bf16.msra.mxu0 %v2232
        %2266 = vmatprep.subr.bf16.mxu0 %v2235
        %2267 = vmatpush1.bf16.msra.mxu0 %v2234
        %2268 = vmatprep.subr.bf16.mxu0 %v2237
        %2269 = vmatpush1.bf16.msra.mxu0 %v2236
        %2270 = vmatprep.subr.bf16.mxu0 0
        %2271 = vmatpush1.bf16.msra.mxu0 0
        %2272 = vmatprep.subr.bf16.mxu0 0
        %2273 = vmatpush1.bf16.msra.mxu0 0
        %2274 = vmatprep.subr.bf16.mxu0 0
        %2275 = vmatpush1.bf16.msra.mxu0 0
        %2276 = vmatprep.subr.bf16.mxu0 0
        %2277 = vmatpush1.bf16.msra.mxu0 0
        %2278 = vmatprep.subr.bf16.mxu0 0
        %2279 = vmatpush1.bf16.msra.mxu0 0
        %2280 = vmatprep.subr.bf16.mxu0 0
        %2281 = vmatpush1.bf16.msra.mxu0 0
        %2282 = vmatprep.subr.bf16.mxu0 0
        %2283 = vmatpush1.bf16.msra.mxu0 0
        %2284 = vmatprep.subr.bf16.mxu0 0
        %2285 = vmatpush1.bf16.msra.mxu0 0
        %2286 = vmatprep.mubr.bf16.mxu0 0
        %2287 = vmatmul.mubr.bf16.gmra.mrb[0].mxu0 %v2138
        %v2288 = vpop.f32.mrb[0].mxu0
        %v2289 = vadd.f32 %v2167, %v2288
        %v2290 = vpop.f32.mrb[0].mxu0
        %v2291 = vadd.f32 %v2171, %v2290
        %v2292 = vpop.f32.mrb[0].mxu0
        %v2293 = vadd.f32 %v2167, %v2292
        %v2294 = vpop.f32.mrb[0].mxu0
        %v2295 = vadd.f32 %v2171, %v2294
        %2296 = vmatprep.mubr.bf16.mxu0 0
        %2297 = vmatmul.mubr.bf16.gmra.mrb[0].mxu0 %v2139
        %v2298 = vpop.f32.mrb[0].mxu0
        %v2299 = vadd.f32 %v2167, %v2298
        %v2300 = vpop.f32.mrb[0].mxu0
        %v2301 = vadd.f32 %v2171, %v2300
        %v2302 = vpop.f32.mrb[0].mxu0
        %v2303 = vadd.f32 %v2167, %v2302
        %v2304 = vpop.f32.mrb[0].mxu0
        %v2305 = vadd.f32 %v2171, %v2304
        %2306 = vmatprep.mubr.bf16.mxu0 0
        %2307 = vmatmul.mubr.bf16.gmra.mrb[0].mxu0 %v2140
        %v2308 = vpop.f32.mrb[0].mxu0
        %v2309 = vadd.f32 %v2167, %v2308
        %v2310 = vpop.f32.mrb[0].mxu0
        %v2311 = vadd.f32 %v2171, %v2310
        %v2312 = vpop.f32.mrb[0].mxu0
        %v2313 = vadd.f32 %v2167, %v2312
        %v2314 = vpop.f32.mrb[0].mxu0
        %v2315 = vadd.f32 %v2171, %v2314
        %2316 = vmatprep.mubr.bf16.mxu0 0
        %2317 = vmatmul.mubr.bf16.gmra.mrb[0].mxu0 %v2141
        %v2318 = vpop.f32.mrb[0].mxu0
        %v2319 = vadd.f32 %v2167, %v2318
        %v2320 = vpop.f32.mrb[0].mxu0
        %v2321 = vadd.f32 %v2171, %v2320
        %v2322 = vpop.f32.mrb[0].mxu0
        %v2323 = vadd.f32 %v2167, %v2322
        %v2324 = vpop.f32.mrb[0].mxu0
        %v2325 = vadd.f32 %v2171, %v2324
        %2326 = vmatprep.mubr.bf16.mxu0 0
        %2327 = vmatmul.mubr.bf16.gmra.mrb[0].mxu0 %v2142
        %v2328 = vpop.f32.mrb[0].mxu0
        %v2329 = vadd.f32 %v2167, %v2328
        %v2330 = vpop.f32.mrb[0].mxu0
        %v2331 = vadd.f32 %v2171, %v2330
        %v2332 = vpop.f32.mrb[0].mxu0
        %v2333 = vadd.f32 %v2167, %v2332
        %v2334 = vpop.f32.mrb[0].mxu0
        %v2335 = vadd.f32 %v2171, %v2334
        %2336 = vmatprep.mubr.bf16.mxu0 0
        %2337 = vmatmul.mubr.bf16.gmra.mrb[0].mxu0 %v2143
        %v2338 = vpop.f32.mrb[0].mxu0
        %v2339 = vadd.f32 %v2167, %v2338
        %v2340 = vpop.f32.mrb[0].mxu0
        %v2341 = vadd.f32 %v2171, %v2340
        %v2342 = vpop.f32.mrb[0].mxu0
        %v2343 = vadd.f32 %v2167, %v2342
        %v2344 = vpop.f32.mrb[0].mxu0
        %v2345 = vadd.f32 %v2171, %v2344
        %2346 = vmatprep.mubr.bf16.mxu0 0
        %2347 = vmatmul.mubr.bf16.gmra.mrb[0].mxu0 %v2144
        %v2348 = vpop.f32.mrb[0].mxu0
        %v2349 = vadd.f32 %v2167, %v2348
        %v2350 = vpop.f32.mrb[0].mxu0
        %v2351 = vadd.f32 %v2171, %v2350
        %v2352 = vpop.f32.mrb[0].mxu0
        %v2353 = vadd.f32 %v2167, %v2352
        %v2354 = vpop.f32.mrb[0].mxu0
        %v2355 = vadd.f32 %v2171, %v2354
        %2356 = vmatprep.mubr.bf16.mxu0 0
        %2357 = vmatmul.mubr.bf16.gmra.mrb[0].mxu0 %v2145
        %v2358 = vpop.f32.mrb[0].mxu0
        %v2359 = vadd.f32 %v2167, %v2358
        %v2360 = vpop.f32.mrb[0].mxu0
        %v2361 = vadd.f32 %v2171, %v2360
        %v2362 = vpop.f32.mrb[0].mxu0
        %v2363 = vadd.f32 %v2167, %v2362
        %v2364 = vpop.f32.mrb[0].mxu0
        %v2365 = vadd.f32 %v2171, %v2364
        %2366 = vdwg.mxu0
        %v2367 = vld [vmem:[#allocation3] sm:$0xff]
        %v2368 = vld [vmem:[#allocation3 + $0x8] sm:$0xff]
        %v2369 = vld [vmem:[#allocation3 + $0x10] sm:$0xff]
        %v2370 = vld [vmem:[#allocation3 + $0x18] sm:$0xff]
        %v2371 = vld [vmem:[#allocation3 + $0x20] sm:$0xff]
        %v2372 = vld [vmem:[#allocation3 + $0x28] sm:$0xff]
        %v2373 = vld [vmem:[#allocation3 + $0x30] sm:$0xff]
        %v2374 = vld [vmem:[#allocation3 + $0x38] sm:$0xff]
        %v2375 = vld [vmem:[#allocation3 + $0x40] sm:$0xff]
        %v2376 = vld [vmem:[#allocation3 + $0x48] sm:$0xff]
        %v2377 = vld [vmem:[#allocation3 + $0x50] sm:$0xff]
        %v2378 = vld [vmem:[#allocation3 + $0x58] sm:$0xff]
        %v2379 = vld [vmem:[#allocation3 + $0x60] sm:$0xff]
        %v2380 = vld [vmem:[#allocation3 + $0x68] sm:$0xff]
        %v2381 = vld [vmem:[#allocation3 + $0x70] sm:$0xff]
        %v2382 = vld [vmem:[#allocation3 + $0x78] sm:$0xff]
        %v2383 = vadd.f32 %v2367, %v2289
        %v2384 = vadd.f32 %v2368, %v2293
        %v2385 = vadd.f32 %v2369, %v2299
        %v2386 = vadd.f32 %v2370, %v2303
        %v2387 = vadd.f32 %v2371, %v2309
        %v2388 = vadd.f32 %v2372, %v2313
        %v2389 = vadd.f32 %v2373, %v2319
        %v2390 = vadd.f32 %v2374, %v2323
        %v2391 = vadd.f32 %v2375, %v2329
        %v2392 = vadd.f32 %v2376, %v2333
        %v2393 = vadd.f32 %v2377, %v2339
        %v2394 = vadd.f32 %v2378, %v2343
        %v2395 = vadd.f32 %v2379, %v2349
        %v2396 = vadd.f32 %v2380, %v2353
        %v2397 = vadd.f32 %v2381, %v2359
        %v2398 = vadd.f32 %v2382, %v2363
        %2399 = vst [vmem:[#allocation3] sm:$0xff] %v2383
        %2400 = vst [vmem:[#allocation3 + $0x8] sm:$0xff] %v2384
        %2401 = vst [vmem:[#allocation3 + $0x10] sm:$0xff] %v2385
        %2402 = vst [vmem:[#allocation3 + $0x18] sm:$0xff] %v2386
        %2403 = vst [vmem:[#allocation3 + $0x20] sm:$0xff] %v2387
        %2404 = vst [vmem:[#allocation3 + $0x28] sm:$0xff] %v2388
        %2405 = vst [vmem:[#allocation3 + $0x30] sm:$0xff] %v2389
        %2406 = vst [vmem:[#allocation3 + $0x38] sm:$0xff] %v2390
        %2407 = vst [vmem:[#allocation3 + $0x40] sm:$0xff] %v2391
        %2408 = vst [vmem:[#allocation3 + $0x48] sm:$0xff] %v2392
        %2409 = vst [vmem:[#allocation3 + $0x50] sm:$0xff] %v2393
        %2410 = vst [vmem:[#allocation3 + $0x58] sm:$0xff] %v2394
        %2411 = vst [vmem:[#allocation3 + $0x60] sm:$0xff] %v2395
        %2412 = vst [vmem:[#allocation3 + $0x68] sm:$0xff] %v2396
        %2413 = vst [vmem:[#allocation3 + $0x70] sm:$0xff] %v2397
        %2414 = vst [vmem:[#allocation3 + $0x78] sm:$0xff] %v2398
        %v2415 = vadd.f32 %v2291, %v1300
        %v2416 = vadd.f32 %v2295, %v1301
        %v2417 = vadd.f32 %v2301, %v1302
        %v2418 = vadd.f32 %v2305, %v1303
        %v2419 = vadd.f32 %v2311, %v1304
        %v2420 = vadd.f32 %v2315, %v1305
        %v2421 = vadd.f32 %v2321, %v1306
        %v2422 = vadd.f32 %v2325, %v1307
        %v2423 = vadd.f32 %v2331, %v1308
        %v2424 = vadd.f32 %v2335, %v1309
        %v2425 = vadd.f32 %v2341, %v1310
        %v2426 = vadd.f32 %v2345, %v1311
        %v2427 = vadd.f32 %v2351, %v1312
        %v2428 = vadd.f32 %v2355, %v1313
        %v2429 = vadd.f32 %v2361, %v1314
        %v2430 = vadd.f32 %v2365, %v1315
        %2431 = vst [vmem:[#allocation2] sm:$0xff] %v2415
        %2432 = vst [vmem:[#allocation2 + $0x8] sm:$0xff] %v2416
        %2433 = vst [vmem:[#allocation2 + $0x10] sm:$0xff] %v2417
        %2434 = vst [vmem:[#allocation2 + $0x18] sm:$0xff] %v2418
        %2435 = vst [vmem:[#allocation2 + $0x20] sm:$0xff] %v2419
        %2436 = vst [vmem:[#allocation2 + $0x28] sm:$0xff] %v2420
        %2437 = vst [vmem:[#allocation2 + $0x30] sm:$0xff] %v2421
        %2438 = vst [vmem:[#allocation2 + $0x38] sm:$0xff] %v2422
        %2439 = vst [vmem:[#allocation2 + $0x40] sm:$0xff] %v2423
        %2440 = vst [vmem:[#allocation2 + $0x48] sm:$0xff] %v2424
        %2441 = vst [vmem:[#allocation2 + $0x50] sm:$0xff] %v2425
        %2442 = vst [vmem:[#allocation2 + $0x58] sm:$0xff] %v2426
        %2443 = vst [vmem:[#allocation2 + $0x60] sm:$0xff] %v2427
        %2444 = vst [vmem:[#allocation2 + $0x68] sm:$0xff] %v2428
        %2445 = vst [vmem:[#allocation2 + $0x70] sm:$0xff] %v2429
        %2446 = vst [vmem:[#allocation2 + $0x78] sm:$0xff] %v2430
        %v2447 = vpack.c.bf16 %v2416, %v2415
        %v2448 = vpack.c.bf16 %v2418, %v2417
        %v2449 = vpack.c.bf16 %v2420, %v2419
        %v2450 = vpack.c.bf16 %v2422, %v2421
        %v2451 = vpack.c.bf16 %v2424, %v2423
        %v2452 = vpack.c.bf16 %v2426, %v2425
        %v2453 = vpack.c.bf16 %v2428, %v2427
        %v2454 = vpack.c.bf16 %v2430, %v2429
        %2455 = vst [vmem:[#allocation4 + $0x8] sm:$0xff] %v2447
        %2456 = vst [vmem:[#allocation4 + $0x18] sm:$0xff] %v2448
        %2457 = vst [vmem:[#allocation4 + $0x28] sm:$0xff] %v2449
        %2458 = vst [vmem:[#allocation4 + $0x38] sm:$0xff] %v2450
        %2459 = vst [vmem:[#allocation4 + $0x48] sm:$0xff] %v2451
        %2460 = vst [vmem:[#allocation4 + $0x58] sm:$0xff] %v2452
        %2461 = vst [vmem:[#allocation4 + $0x68] sm:$0xff] %v2453
        %2462 = vst [vmem:[#allocation4 + $0x78] sm:$0xff] %v2454
        %p2463 = scmp.eq.s32.totalorder %s41, 5
        // Predicated region
        $region101: #{wavenet_forward.1} parent=75 // pred_check
          %p2464 = pneg %p2463
        $region102: #{wavenet_forward.1} parent=75 // pred_check_branch
          %2466 = sbr.rel (%p2464) target = $region104
        $region103: #{wavenet_forward.1} parent=75 // pred_region
          %v2467 = vld [vmem:[#allocation3] sm:$0xff]
          %v2468 = vld [vmem:[#allocation3 + $0x8] sm:$0xff]
          %v2469 = vld [vmem:[#allocation3 + $0x10] sm:$0xff]
          %v2470 = vld [vmem:[#allocation3 + $0x18] sm:$0xff]
          %v2471 = vld [vmem:[#allocation3 + $0x20] sm:$0xff]
          %v2472 = vld [vmem:[#allocation3 + $0x28] sm:$0xff]
          %v2473 = vld [vmem:[#allocation3 + $0x30] sm:$0xff]
          %v2474 = vld [vmem:[#allocation3 + $0x38] sm:$0xff]
          %v2475 = vld [vmem:[#allocation3 + $0x40] sm:$0xff]
          %v2476 = vld [vmem:[#allocation3 + $0x48] sm:$0xff]
          %v2477 = vld [vmem:[#allocation3 + $0x50] sm:$0xff]
          %v2478 = vld [vmem:[#allocation3 + $0x58] sm:$0xff]
          %v2479 = vld [vmem:[#allocation3 + $0x60] sm:$0xff]
          %v2480 = vld [vmem:[#allocation3 + $0x68] sm:$0xff]
          %v2481 = vld [vmem:[#allocation3 + $0x70] sm:$0xff]
          %v2482 = vld [vmem:[#allocation3 + $0x78] sm:$0xff]
          %v2483 = vmax.f32 %v2467, 0.0
          %v2484 = vmax.f32 %v2468, 0.0
          %v2485 = vmax.f32 %v2469, 0.0
          %v2486 = vmax.f32 %v2470, 0.0
          %v2487 = vmax.f32 %v2471, 0.0
          %v2488 = vmax.f32 %v2472, 0.0
          %v2489 = vmax.f32 %v2473, 0.0
          %v2490 = vmax.f32 %v2474, 0.0
          %v2491 = vmax.f32 %v2475, 0.0
          %v2492 = vmax.f32 %v2476, 0.0
          %v2493 = vmax.f32 %v2477, 0.0
          %v2494 = vmax.f32 %v2478, 0.0
          %v2495 = vmax.f32 %v2479, 0.0
          %v2496 = vmax.f32 %v2480, 0.0
          %v2497 = vmax.f32 %v2481, 0.0
          %v2498 = vmax.f32 %v2482, 0.0
          %v2499 = vpack.c.bf16 %v2484, %v2483
          %v2500 = vpack.c.bf16 %v2486, %v2485
          %v2501 = vpack.c.bf16 %v2488, %v2487
          %v2502 = vpack.c.bf16 %v2490, %v2489
          %v2503 = vpack.c.bf16 %v2492, %v2491
          %v2504 = vpack.c.bf16 %v2494, %v2493
          %v2505 = vpack.c.bf16 %v2496, %v2495
          %v2506 = vpack.c.bf16 %v2498, %v2497
          %v2507 = vld [vmem:[%s10] sm:$0xf]
          %v2508 = vld [vmem:[%s10 + $0x4] sm:$0xf]
          %v2509 = vld [vmem:[%s10 + $0x8] sm:$0xf]
          %v2510 = vld [vmem:[%s10 + $0xc] sm:$0xf]
          %v2511 = vld [vmem:[%s10 + $0x10] sm:$0xf]
          %v2512 = vld [vmem:[%s10 + $0x14] sm:$0xf]
          %v2513 = vld [vmem:[%s10 + $0x18] sm:$0xf]
          %v2514 = vld [vmem:[%s10 + $0x1c] sm:$0xf]
          %v2515 = vld [vmem:[%s10 + $0x20] sm:$0xf]
          %v2516 = vld [vmem:[%s10 + $0x24] sm:$0xf]
          %v2517 = vld [vmem:[%s10 + $0x28] sm:$0xf]
          %v2518 = vld [vmem:[%s10 + $0x2c] sm:$0xf]
          %v2519 = vld [vmem:[%s10 + $0x30] sm:$0xf]
          %v2520 = vld [vmem:[%s10 + $0x34] sm:$0xf]
          %v2521 = vld [vmem:[%s10 + $0x38] sm:$0xf]
          %v2522 = vld [vmem:[%s10 + $0x3c] sm:$0xf]
          %v2523 = vld [vmem:[%s11] sm:$0x1]
          %v2525 = vlaneseq
          %v2526 = vshrl.u32 %v2525, 7
          %v2527 = vsub.s32 0, %v2526
          %v2528 = vrot.slane %v2523, %v2527
          %v2546 = vunpack.c.l.b16 %v2507
          %v2547 = vunpack.c.l.b16 %v2508
          %v2548 = vunpack.c.l.b16 %v2509
          %v2549 = vunpack.c.l.b16 %v2510
          %v2550 = vunpack.c.l.b16 %v2511
          %v2551 = vunpack.c.l.b16 %v2512
          %v2552 = vunpack.c.l.b16 %v2513
          %v2553 = vunpack.c.l.b16 %v2514
          %v2554 = vunpack.c.l.b16 %v2515
          %v2555 = vunpack.c.l.b16 %v2516
          %v2556 = vunpack.c.l.b16 %v2517
          %v2557 = vunpack.c.l.b16 %v2518
          %v2558 = vunpack.c.l.b16 %v2519
          %v2559 = vunpack.c.l.b16 %v2520
          %v2560 = vunpack.c.l.b16 %v2521
          %v2561 = vunpack.c.l.b16 %v2522
          %v2562 = vpack.c.b16 %v2547, %v2546
          %v2563 = vpack.c.b16 %v2549, %v2548
          %v2564 = vpack.c.b16 %v2551, %v2550
          %v2565 = vpack.c.b16 %v2553, %v2552
          %v2566 = vpack.c.b16 %v2555, %v2554
          %v2567 = vpack.c.b16 %v2557, %v2556
          %v2568 = vpack.c.b16 %v2559, %v2558
          %v2569 = vpack.c.b16 %v2561, %v2560
          %2578 = vmatprep.subr.bf16.mxu0 0
          %2579 = vmatpush1.bf16.msra.mxu0 %v2562
          %2580 = vmatprep.subr.bf16.mxu0 0
          %2581 = vmatpush1.bf16.msra.mxu0 %v2563
          %2582 = vmatprep.subr.bf16.mxu0 0
          %2583 = vmatpush1.bf16.msra.mxu0 %v2564
          %2584 = vmatprep.subr.bf16.mxu0 0
          %2585 = vmatpush1.bf16.msra.mxu0 %v2565
          %2586 = vmatprep.subr.bf16.mxu0 0
          %2587 = vmatpush1.bf16.msra.mxu0 %v2566
          %2588 = vmatprep.subr.bf16.mxu0 0
          %2589 = vmatpush1.bf16.msra.mxu0 %v2567
          %2590 = vmatprep.subr.bf16.mxu0 0
          %2591 = vmatpush1.bf16.msra.mxu0 %v2568
          %2592 = vmatprep.subr.bf16.mxu0 0
          %2593 = vmatpush1.bf16.msra.mxu0 %v2569
          %2594 = vmatprep.subr.bf16.mxu0 0
          %2595 = vmatpush1.bf16.msra.mxu0 0
          %2596 = vmatprep.subr.bf16.mxu0 0
          %2597 = vmatpush1.bf16.msra.mxu0 0
          %2598 = vmatprep.subr.bf16.mxu0 0
          %2599 = vmatpush1.bf16.msra.mxu0 0
          %2600 = vmatprep.subr.bf16.mxu0 0
          %2601 = vmatpush1.bf16.msra.mxu0 0
          %2602 = vmatprep.subr.bf16.mxu0 0
          %2603 = vmatpush1.bf16.msra.mxu0 0
          %2604 = vmatprep.subr.bf16.mxu0 0
          %2605 = vmatpush1.bf16.msra.mxu0 0
          %2606 = vmatprep.subr.bf16.mxu0 0
          %2607 = vmatpush1.bf16.msra.mxu0 0
          %2608 = vmatprep.subr.bf16.mxu0 0
          %2609 = vmatpush1.bf16.msra.mxu0 0
          %2610 = vmatprep.mubr.bf16.mxu0 0
          %2611 = vmatmul.mubr.bf16.gmra.mrb[0].mxu0 %v2499
          %v2612 = vpop.f32.mrb[0].mxu0
          %v2613 = vadd.f32 %v2528, %v2612
          %v2614 = vpop.f32.mrb[0].mxu0
          %v2615 = vpop.f32.mrb[0].mxu0
          %v2616 = vadd.f32 %v2528, %v2615
          %v2617 = vpop.f32.mrb[0].mxu0
          %2618 = vmatprep.mubr.bf16.mxu0 0
          %2619 = vmatmul.mubr.bf16.gmra.mrb[0].mxu0 %v2500
          %v2620 = vpop.f32.mrb[0].mxu0
          %v2621 = vadd.f32 %v2528, %v2620
          %v2622 = vpop.f32.mrb[0].mxu0
          %v2623 = vpop.f32.mrb[0].mxu0
          %v2624 = vadd.f32 %v2528, %v2623
          %v2625 = vpop.f32.mrb[0].mxu0
          %2626 = vmatprep.mubr.bf16.mxu0 0
          %2627 = vmatmul.mubr.bf16.gmra.mrb[0].mxu0 %v2501
          %v2628 = vpop.f32.mrb[0].mxu0
          %v2629 = vadd.f32 %v2528, %v2628
          %v2630 = vpop.f32.mrb[0].mxu0
          %v2631 = vpop.f32.mrb[0].mxu0
          %v2632 = vadd.f32 %v2528, %v2631
          %v2633 = vpop.f32.mrb[0].mxu0
          %2634 = vmatprep.mubr.bf16.mxu0 0
          %2635 = vmatmul.mubr.bf16.gmra.mrb[0].mxu0 %v2502
          %v2636 = vpop.f32.mrb[0].mxu0
          %v2637 = vadd.f32 %v2528, %v2636
          %v2638 = vpop.f32.mrb[0].mxu0
          %v2639 = vpop.f32.mrb[0].mxu0
          %v2640 = vadd.f32 %v2528, %v2639
          %v2641 = vpop.f32.mrb[0].mxu0
          %2642 = vmatprep.mubr.bf16.mxu0 0
          %2643 = vmatmul.mubr.bf16.gmra.mrb[0].mxu0 %v2503
          %v2644 = vpop.f32.mrb[0].mxu0
          %v2645 = vadd.f32 %v2528, %v2644
          %v2646 = vpop.f32.mrb[0].mxu0
          %v2647 = vpop.f32.mrb[0].mxu0
          %v2648 = vadd.f32 %v2528, %v2647
          %v2649 = vpop.f32.mrb[0].mxu0
          %2650 = vmatprep.mubr.bf16.mxu0 0
          %2651 = vmatmul.mubr.bf16.gmra.mrb[0].mxu0 %v2504
          %v2652 = vpop.f32.mrb[0].mxu0
          %v2653 = vadd.f32 %v2528, %v2652
          %v2654 = vpop.f32.mrb[0].mxu0
          %v2655 = vpop.f32.mrb[0].mxu0
          %v2656 = vadd.f32 %v2528, %v2655
          %v2657 = vpop.f32.mrb[0].mxu0
          %2658 = vmatprep.mubr.bf16.mxu0 0
          %2659 = vmatmul.mubr.bf16.gmra.mrb[0].mxu0 %v2505
          %v2660 = vpop.f32.mrb[0].mxu0
          %v2661 = vadd.f32 %v2528, %v2660
          %v2662 = vpop.f32.mrb[0].mxu0
          %v2663 = vpop.f32.mrb[0].mxu0
          %v2664 = vadd.f32 %v2528, %v2663
          %v2665 = vpop.f32.mrb[0].mxu0
          %2666 = vmatprep.mubr.bf16.mxu0 0
          %2667 = vmatmul.mubr.bf16.gmra.mrb[0].mxu0 %v2506
          %v2668 = vpop.f32.mrb[0].mxu0
          %v2669 = vadd.f32 %v2528, %v2668
          %v2670 = vpop.f32.mrb[0].mxu0
          %v2671 = vpop.f32.mrb[0].mxu0
          %v2672 = vadd.f32 %v2528, %v2671
          %v2673 = vpop.f32.mrb[0].mxu0
          %2674 = vdwg.mxu0
          %v2675 = vmax.f32 %v2613, 0.0
          %v2676 = vmax.f32 %v2616, 0.0
          %v2677 = vmax.f32 %v2621, 0.0
          %v2678 = vmax.f32 %v2624, 0.0
          %v2679 = vmax.f32 %v2629, 0.0
          %v2680 = vmax.f32 %v2632, 0.0
          %v2681 = vmax.f32 %v2637, 0.0
          %v2682 = vmax.f32 %v2640, 0.0
          %v2683 = vmax.f32 %v2645, 0.0
          %v2684 = vmax.f32 %v2648, 0.0
          %v2685 = vmax.f32 %v2653, 0.0
          %v2686 = vmax.f32 %v2656, 0.0
          %v2687 = vmax.f32 %v2661, 0.0
          %v2688 = vmax.f32 %v2664, 0.0
          %v2689 = vmax.f32 %v2669, 0.0
          %v2690 = vmax.f32 %v2672, 0.0
          %v2691 = vld [vmem:[%s12] sm:$0xf]
          %v2692 = vpack.c.bf16 %v2676, %v2675
          %v2693 = vpack.c.bf16 %v2678, %v2677
          %v2694 = vpack.c.bf16 %v2680, %v2679
          %v2695 = vpack.c.bf16 %v2682, %v2681
          %v2696 = vpack.c.bf16 %v2684, %v2683
          %v2697 = vpack.c.bf16 %v2686, %v2685
          %v2698 = vpack.c.bf16 %v2688, %v2687
          %v2699 = vpack.c.bf16 %v2690, %v2689
          %2700 = vmatprep.subr.bf16.mxu0 0
          %2701 = vmatpush1.bf16.xpose.msra.mxu0 %v2692
          %2702 = vmatprep.subr.bf16.mxu0 0
          %2703 = vmatpush1.bf16.xpose.msra.mxu0 %v2693
          %2704 = vmatprep.subr.bf16.mxu0 0
          %2705 = vmatpush1.bf16.xpose.msra.mxu0 %v2694
          %2706 = vmatprep.subr.bf16.mxu0 0
          %2707 = vmatpush1.bf16.xpose.msra.mxu0 %v2695
          %2708 = vmatprep.subr.bf16.mxu0 0
          %2709 = vmatpush1.bf16.xpose.msra.mxu0 %v2696
          %2710 = vmatprep.subr.bf16.mxu0 0
          %2711 = vmatpush1.bf16.xpose.msra.mxu0 %v2697
          %2712 = vmatprep.subr.bf16.mxu0 0
          %2713 = vmatpush1.bf16.xpose.msra.mxu0 %v2698
          %2714 = vmatprep.subr.bf16.mxu0 0
          %2715 = vmatpush1.bf16.xpose.msra.mxu0 %v2699
          %2716 = vmatprep.subr.bf16.mxu0 0
          %2717 = vmatpush1.bf16.xpose.msra.mxu0 0
          %2718 = vmatprep.subr.bf16.mxu0 0
          %2719 = vmatpush1.bf16.xpose.msra.mxu0 0
          %2720 = vmatprep.subr.bf16.mxu0 0
          %2721 = vmatpush1.bf16.xpose.msra.mxu0 0
          %2722 = vmatprep.subr.bf16.mxu0 0
          %2723 = vmatpush1.bf16.xpose.msra.mxu0 0
          %2724 = vmatprep.subr.bf16.mxu0 0
          %2725 = vmatpush1.bf16.xpose.msra.mxu0 0
          %2726 = vmatprep.subr.bf16.mxu0 0
          %2727 = vmatpush1.bf16.xpose.msra.mxu0 0
          %2728 = vmatprep.subr.bf16.mxu0 0
          %2729 = vmatpush1.bf16.xpose.msra.mxu0 0
          %2730 = vmatprep.subr.bf16.mxu0 0
          %2731 = vmatpush1.bf16.xpose.msra.mxu0 0
          %2732 = vmatprep.mubr.bf16.mxu0 0
          %2733 = vmatmul.mubr.bf16.gmra.mrb[0].mxu0 %v2691
          %v2734 = vpop.f32.mrb[0].mxu0
          %v2735 = vadd.f32 0.0, %v2734
          %v2736 = vpop.f32.mrb[0].mxu0
          %v2737 = vpop.f32.mrb[0].mxu0
          %v2738 = vpop.f32.mrb[0].mxu0
          %2739 = vdwg.mxu0
          %v2740 = vld [vmem:[#allocation5] sm:$0x1]
          %2742 = vset.pattern.permute.xlu0 0
          %2743 = vperm.xlu0 %2742, %v2740
          %v2744 = vpop.permute.xlu0 %2743
          %v2746 = vlaneseq
          %v2747 = vshrl.u32 %v2746, 7
          %v2748 = vsub.s32 0, %v2747
          %v2749 = vrot.slane %v2744, %v2748
          %v2750 = vadd.f32 %v2735, %v2749
          %2751 = vst [vmem:[%s580] sm:$0x1] %v2750
        $region104: #{wavenet_forward.1} parent=75 // pred_fallthru
          _
        %s2752 = sand.u32 %s375, 1
        %s2753 = scalar_lea.sflag [#allocation8], %s2752
        %s2754 = sand.u32 %s375, 1
        %s2755 = scalar_lea.vmem [#allocation11], %s2754
        // Predicated region
        $region105: #{wavenet_forward.1} parent=75 // pred_check
          %p2756 = pneg %p385
        $region106: #{wavenet_forward.1} parent=75 // pred_check_branch
          %2758 = sbr.rel (%p2756) target = $region108
        $region107: #{wavenet_forward.1} parent=75 // pred_region
          %s2760 = ssub.s32 16, 16
          %2761 = vsyncadd %s2753, %s2760
          %s2762 = smul.addr %s40, 16
          %s2763 = scalar_lea.hbm %s14, %s2762
          %s2765 = sshll.u32 %s2755, 4
          %s2766 = int_to_ptr.vmem [resolvable:$true] %s2765
          %2768 = dma.vmem_to_hbm [thread:$0]  %s2766, 16, %s2763, %s2753
        $region108: #{wavenet_forward.1} parent=75 // pred_fallthru
          _
      $region76: #{wavenet_forward.1} parent=5 // pred_fallthru
        _
      %p2769 = scmp.le.s32.totalorder 2, %s31
      // Predicated region
      $region109: #{wavenet_forward.1} parent=5 // pred_check
        %p2770 = pneg %p2769
      $region110: #{wavenet_forward.1} parent=5 // pred_check_branch
        %2772 = sbr.rel (%p2770) target = $region112
      $region111: #{wavenet_forward.1} parent=5 // pred_region
        %s2773 = ssub.s32 %s31, 2
        // Predicated region
        $region113: #{wavenet_forward.1} parent=111 // pred_check
          %p2774 = pneg %p391
        $region114: #{wavenet_forward.1} parent=111 // pred_check_branch
          %2776 = sbr.rel (%p2774) target = $region116
        $region115: #{wavenet_forward.1} parent=111 // pred_region
          %s2777 = sand.u32 %s376, 1
          %s2778 = scalar_lea.sflag [#allocation8], %s2777
          %s2779 = sand.u32 %s376, 1
          %s2780 = scalar_lea.vmem [#allocation11], %s2779
          %2781 = dma.done %s2778, 16
        $region116: #{wavenet_forward.1} parent=111 // pred_fallthru
          _
      $region112: #{wavenet_forward.1} parent=5 // pred_fallthru
        _
    $region6: #{wavenet_forward.1} parent=1 // loop_footer
      %s35 = sadd.s32 1, %s31
    $region7: #{wavenet_forward.1} parent=1 // loop_footer_branch
      %30 = sbr.rel target = $region3
    $region8: #{wavenet_forward.1} parent=1 // loop_exit
      _
    %2782 = vsyncpa [#allocation7], 1
    %s2783 = scalar_lea.sflag [#allocation7], 1
    %2784 = vsyncpa %s2783, 1
    %2785 = vsyncpa [#allocation10], 1
    %s2786 = scalar_lea.sflag [#allocation10], 1
    %2787 = vsyncpa %s2786, 1
    %2788 = vsyncpa [#allocation8], 1
    %s2789 = scalar_lea.sflag [#allocation8], 1
    %2790 = vsyncpa %s2789, 1

</llo_original>
